<compile_context>
chip_gen: v7x
topology: tpu7x:2x2x1
jax: 0.10.0
libtpu: 0.0.40
codegen_flags: <defaults>
</compile_context>

<pallas_src>
import functools
import jax
import jax.numpy as jnp
import numpy as np
from jax.experimental import pallas as pl
from jax.experimental.pallas import tpu as pltpu


def _make_divisible(v, divisor, min_value=None):
    if min_value is None:
        min_value = divisor
    new_v = max(min_value, int(v + divisor / 2) // divisor * divisor)
    if new_v < 0.9 * v:
        new_v += divisor
    return new_v


# ---------------------------------------------------------------------------
# Fused kernel: expand 1x1 + BN + h_swish -> 3x3 depthwise + BN -> SE -> h_swish
#               -> project 1x1 + BN (+ residual).  One grid step per batch image.
# BN scales are pre-folded into the conv weights; only shifts are added here.
# ---------------------------------------------------------------------------
def fused_block_kernel(x_ref, wexp_ref, b1_ref, wdw_ref, b2_ref,
                       sew1_ref, seb1_ref, sew2_ref, seb2_ref,
                       wpw_ref, b3_ref,
                       o_ref, pad_ref, *, H, W, K, add_residual):
    Chid = wexp_ref.shape[-1]
    Cout = wpw_ref.shape[-1]
    pad = (K - 1) // 2

    # ---- 1x1 expand (BN scale folded into weights) + shift + h_swish ----
    x2d = x_ref[0]                                            # [H*W, Cin]
    t = jnp.dot(x2d, wexp_ref[...], preferred_element_type=jnp.float32)
    t = t + b1_ref[...]
    t = t * jnp.clip(t + 3.0, 0.0, 6.0) * (1.0 / 6.0)         # h_swish

    # ---- 3x3 depthwise conv (stride 1, pad 1) + BN shift ----
    # Pad into a VMEM scratch (edges stay zero; interior overwritten every step).
    pad_ref[...] = jnp.zeros_like(pad_ref)
    pad_ref[pad:pad + H, pad:pad + W, :] = t.reshape(H, W, Chid)
    acc = jnp.zeros((H, W, Chid), jnp.float32)
    for kh in range(K):
        for kw in range(K):
            acc = acc + pad_ref[kh:kh + H, kw:kw + W, :] * wdw_ref[kh, kw, :]
    y2d = (acc + b2_ref[0, :]).reshape(H * W, Chid)

    # ---- SE: global avg pool -> fc1 -> ReLU -> fc2 -> h_sigmoid -> scale ----
    pooled = jnp.mean(y2d, axis=0, keepdims=True)             # [1, Chid]
    h1 = jnp.dot(pooled, sew1_ref[...], preferred_element_type=jnp.float32) + seb1_ref[...]
    h1 = jnp.maximum(h1, 0.0)
    h2 = jnp.dot(h1, sew2_ref[...], preferred_element_type=jnp.float32) + seb2_ref[...]
    gate = jnp.clip(h2 + 3.0, 0.0, 6.0) * (1.0 / 6.0)         # [1, Chid]
    z = y2d * gate
    z = z * jnp.clip(z + 3.0, 0.0, 6.0) * (1.0 / 6.0)         # h_swish

    # ---- 1x1 project (BN scale folded) + shift (+ residual) ----
    out = jnp.dot(z, wpw_ref[...], preferred_element_type=jnp.float32) + b3_ref[...]
    if add_residual:
        out = out + x2d
    o_ref[0] = out.astype(o_ref.dtype)


def inverted_residual_forward(x, p, *, identity):
    """x: [B, H, W, Cin] (NHWC), p: folded params. Returns [B, H, W, Cout]."""
    B, H, W, Cin = x.shape
    Chid = p["w_exp_f"].shape[1]
    Cout = p["w_pw_f"].shape[1]
    Cr = p["se_w1"].shape[1]
    K = p["w_dw_f"].shape[0]
    pad = (K - 1) // 2
    if identity:
        assert Cin == Cout

    x_flat = x.reshape(B, H * W, Cin)   # free metadata reshape

    def full_spec(shape):
        zeros = (0,) * len(shape)
        return pl.BlockSpec(shape, lambda b, _z=zeros: _z)

    kern = functools.partial(fused_block_kernel, H=H, W=W, K=K, add_residual=identity)

    out_flat = pl.pallas_call(
        kern,
        out_shape=jax.ShapeDtypeStruct((B, H * W, Cout), jnp.float32),
        grid=(B,),
        in_specs=[
            pl.BlockSpec((1, H * W, Cin), lambda b: (b, 0, 0)),
            full_spec((Cin, Chid)),      # w_exp (BN1 scale folded)
            full_spec((1, Chid)),        # bn1 shift
            full_spec((K, K, Chid)),     # w_dw (BN2 scale folded)
            full_spec((1, Chid)),        # bn2 shift
            full_spec((Chid, Cr)),       # se fc1 w
            full_spec((1, Cr)),          # se fc1 b
            full_spec((Cr, Chid)),       # se fc2 w
            full_spec((1, Chid)),        # se fc2 b
            full_spec((Chid, Cout)),     # w_pw (BN3 scale folded)
            full_spec((1, Cout)),        # bn3 shift
        ],
        out_specs=pl.BlockSpec((1, H * W, Cout), lambda b: (b, 0, 0)),
        scratch_shapes=[pltpu.VMEM((H + 2 * pad, W + 2 * pad, Chid), jnp.float32)],
        compiler_params=pltpu.CompilerParams(dimension_semantics=("parallel",)),
    )(x_flat, p["w_exp_f"], p["bn1_b"], p["w_dw_f"], p["bn2_b"],
      p["se_w1"], p["se_b1"], p["se_w2"], p["se_b2"],
      p["w_pw_f"], p["bn3_b"])

    return out_flat.reshape(B, H, W, Cout)


# ---------------------------------------------------------------------------
# Parameter prep: raw params (+ BN scale/shift) and BN->weight folding
# ---------------------------------------------------------------------------
def make_params(key, inp, hidden_dim, oup):
    cr = _make_divisible(hidden_dim // 4, 8)
    ks = jax.random.split(key, 16)
    eps = 1e-5

    def bn(kg, kb, km, kv, c):
        gamma = jax.random.uniform(kg, (c,), minval=0.5, maxval=1.5)
        beta = jax.random.normal(kb, (c,)) * 0.1
        mean = jax.random.normal(km, (c,)) * 0.1
        var = jax.random.uniform(kv, (c,), minval=0.5, maxval=1.5)
        s = gamma / jnp.sqrt(var + eps)
        b = beta - mean * s
        return s.reshape(1, c).astype(jnp.float32), b.reshape(1, c).astype(jnp.float32)

    p = {}
    p["w_exp"] = (jax.random.normal(ks[0], (inp, hidden_dim)) * 0.1).astype(jnp.float32)
    p["bn1_s"], p["bn1_b"] = bn(ks[1], ks[2], ks[3], ks[4], hidden_dim)
    p["w_dw"] = (jax.random.normal(ks[5], (3, 3, hidden_dim)) * 0.1).astype(jnp.float32)
    p["bn2_s"], p["bn2_b"] = bn(ks[6], ks[7], ks[8], ks[9], hidden_dim)
    p["se_w1"] = (jax.random.normal(ks[10], (hidden_dim, cr)) * 0.1).astype(jnp.float32)
    p["se_b1"] = (jax.random.normal(ks[11], (1, cr)) * 0.1).astype(jnp.float32)
    p["se_w2"] = (jax.random.normal(ks[12], (cr, hidden_dim)) * 0.1).astype(jnp.float32)
    p["se_b2"] = (jax.random.normal(ks[13], (1, hidden_dim)) * 0.1).astype(jnp.float32)
    p["w_pw"] = (jax.random.normal(ks[14], (hidden_dim, oup)) * 0.1).astype(jnp.float32)
    p["bn3_s"], p["bn3_b"] = bn(ks[15], ks[0], ks[5], ks[10], oup)
    return p


def fold_bn(p):
    """Fold BN scales into conv weights (done once at parameter-prep time)."""
    q = dict(p)
    q["w_exp_f"] = (p["w_exp"] * p["bn1_s"]).astype(jnp.float32)        # (Cin,Chid)*(1,Chid)
    q["w_dw_f"] = (p["w_dw"] * p["bn2_s"][0]).astype(jnp.float32)       # (K,K,Chid)*(Chid,)
    q["w_pw_f"] = (p["w_pw"] * p["bn3_s"]).astype(jnp.float32)          # (Chid,Cout)*(1,Cout)
    return q


# ---------------------------------------------------------------------------
# Pure-JAX reference (mirrors the PyTorch forward exactly, NHWC layout)
# ---------------------------------------------------------------------------
def ref_forward(x, p, *, identity):
    B, H, W, Cin = x.shape
    Chid = p["w_exp"].shape[1]
    hsig = lambda v: jnp.clip(v + 3.0, 0.0, 6.0) / 6.0
    hswish = lambda v: v * hsig(v)

    t = x.reshape(-1, Cin) @ p["w_exp"]
    t = t * p["bn1_s"] + p["bn1_b"]
    t = hswish(t).reshape(B, H, W, Chid)

    xp = jnp.pad(t, ((0, 0), (1, 1), (1, 1), (0, 0)))
    acc = jnp.zeros_like(t)
    for kh in range(3):
        for kw in range(3):
            acc = acc + xp[:, kh:kh + H, kw:kw + W, :] * p["w_dw"][kh, kw, :]
    acc = acc * p["bn2_s"] + p["bn2_b"]

    pooled = acc.mean(axis=(1, 2))                             # [B, Chid]
    h1 = jnp.maximum(pooled @ p["se_w1"] + p["se_b1"], 0.0)
    gate = hsig(h1 @ p["se_w2"] + p["se_b2"])                  # [B, Chid]
    z = acc * gate[:, None, None, :]
    z = hswish(z)

    out = z.reshape(-1, Chid) @ p["w_pw"]
    out = out * p["bn3_s"] + p["bn3_b"]
    out = out.reshape(B, H, W, -1)
    return x + out if identity else out


if __name__ == "__main__":
    # InvertedResidual(inp=16, hidden_dim=32, oup=16, kernel_size=3, stride=1,
    #                  use_se=True, use_hs=True)  -> identity (residual) branch active
    inp, hidden_dim, oup = 16, 32, 16
    B, H, W = 2, 16, 16
    identity = True  # stride == 1 and inp == oup

    key = jax.random.PRNGKey(0)
    kx, kp = jax.random.split(key)
    x = jax.random.normal(kx, (B, H, W, inp), dtype=jnp.float32)  # NHWC
    raw_params = make_params(kp, inp, hidden_dim, oup)
    params = fold_bn(raw_params)

    out = inverted_residual_forward(x, params, identity=identity)
    out = jax.block_until_ready(out)

    ref = ref_forward(x, raw_params, identity=identity)
    np.testing.assert_allclose(np.asarray(out), np.asarray(ref), rtol=1e-3, atol=1e-3)

    print("KERNEL_OK")
</pallas_src>

<mosaic_0001>
module attributes {stable_mosaic.version = 11 : i64} {
  func.func @fused_block_kernel(%arg0: i32, %arg1: memref<1x256x16xf32, #tpu.memory_space<vmem>>, %arg2: memref<16x32xf32, #tpu.memory_space<vmem>>, %arg3: memref<1x32xf32, #tpu.memory_space<vmem>>, %arg4: memref<3x3x32xf32, #tpu.memory_space<vmem>>, %arg5: memref<1x32xf32, #tpu.memory_space<vmem>>, %arg6: memref<32x8xf32, #tpu.memory_space<vmem>>, %arg7: memref<1x8xf32, #tpu.memory_space<vmem>>, %arg8: memref<8x32xf32, #tpu.memory_space<vmem>>, %arg9: memref<1x32xf32, #tpu.memory_space<vmem>>, %arg10: memref<32x16xf32, #tpu.memory_space<vmem>>, %arg11: memref<1x16xf32, #tpu.memory_space<vmem>>, %arg12: memref<1x256x16xf32, #tpu.memory_space<vmem>>, %arg13: memref<18x18x32xf32, #tpu.memory_space<vmem>>) attributes {dimension_semantics = [#tpu.dimension_semantics<parallel>], iteration_bounds = array<i64: 2>, scalar_prefetch = 0 : i64, scratch_operands = 1 : i64, tpu.core_type = #tpu.core_type<tc>, window_params = [{transform_indices = @transform_0, window_bounds = array<i64: 1, 256, 16>}, {pipeline_mode = #tpu.pipeline_mode<synchronous>, transform_indices = @transform_1, window_bounds = array<i64: 16, 32>}, {pipeline_mode = #tpu.pipeline_mode<synchronous>, transform_indices = @transform_2, window_bounds = array<i64: 1, 32>}, {pipeline_mode = #tpu.pipeline_mode<synchronous>, transform_indices = @transform_3, window_bounds = array<i64: 3, 3, 32>}, {pipeline_mode = #tpu.pipeline_mode<synchronous>, transform_indices = @transform_4, window_bounds = array<i64: 1, 32>}, {pipeline_mode = #tpu.pipeline_mode<synchronous>, transform_indices = @transform_5, window_bounds = array<i64: 32, 8>}, {pipeline_mode = #tpu.pipeline_mode<synchronous>, transform_indices = @transform_6, window_bounds = array<i64: 1, 8>}, {pipeline_mode = #tpu.pipeline_mode<synchronous>, transform_indices = @transform_7, window_bounds = array<i64: 8, 32>}, {pipeline_mode = #tpu.pipeline_mode<synchronous>, transform_indices = @transform_8, window_bounds = array<i64: 1, 32>}, {pipeline_mode = #tpu.pipeline_mode<synchronous>, transform_indices = @transform_9, window_bounds = array<i64: 32, 16>}, {pipeline_mode = #tpu.pipeline_mode<synchronous>, transform_indices = @transform_10, window_bounds = array<i64: 1, 16>}, {transform_indices = @transform_11, window_bounds = array<i64: 1, 256, 16>}]} {
    %c0 = arith.constant 0 : index
    %c0_0 = arith.constant 0 : index
    %c0_1 = arith.constant 0 : index
    %0 = vector.load %arg1[%c0, %c0_0, %c0_1] : memref<1x256x16xf32, #tpu.memory_space<vmem>>, vector<1x256x16xf32>
    %1 = vector.shape_cast %0 : vector<1x256x16xf32> to vector<256x16xf32>
    %c0_2 = arith.constant 0 : index
    %c0_3 = arith.constant 0 : index
    %2 = vector.load %arg2[%c0_2, %c0_3] : memref<16x32xf32, #tpu.memory_space<vmem>>, vector<16x32xf32>
    %cst = arith.constant dense<0.000000e+00> : vector<256x32xf32>
    %3 = tpu.matmul %1, %2, %cst {dimension_numbers = #tpu.dot_dimension_numbers<[1], [0], [0], [1], [0, 0, 1, 1], [], []>} : vector<256x16xf32>, vector<16x32xf32>, vector<256x32xf32> -> vector<256x32xf32>
    %c0_4 = arith.constant 0 : index
    %c0_5 = arith.constant 0 : index
    %4 = vector.load %arg3[%c0_4, %c0_5] : memref<1x32xf32, #tpu.memory_space<vmem>>, vector<1x32xf32>
    %5 = vector.broadcast %4 : vector<1x32xf32> to vector<256x32xf32>
    %6 = arith.addf %3, %5 : vector<256x32xf32>
    %cst_6 = arith.constant 3.000000e+00 : f32
    %7 = vector.broadcast %cst_6 : f32 to vector<256x32xf32>
    %8 = arith.addf %6, %7 : vector<256x32xf32>
    %cst_7 = arith.constant 0.000000e+00 : f32
    %cst_8 = arith.constant 6.000000e+00 : f32
    %9 = vector.broadcast %cst_7 : f32 to vector<256x32xf32>
    %10 = arith.maximumf %9, %8 : vector<256x32xf32>
    %11 = vector.broadcast %cst_8 : f32 to vector<256x32xf32>
    %12 = arith.minimumf %11, %10 : vector<256x32xf32>
    %13 = arith.mulf %6, %12 : vector<256x32xf32>
    %cst_9 = arith.constant 0.166666672 : f32
    %14 = vector.broadcast %cst_9 : f32 to vector<256x32xf32>
    %15 = arith.mulf %13, %14 : vector<256x32xf32>
    %cst_10 = arith.constant 0.000000e+00 : f32
    %16 = vector.broadcast %cst_10 : f32 to vector<18x18x32xf32>
    %c0_11 = arith.constant 0 : index
    %c0_12 = arith.constant 0 : index
    %c0_13 = arith.constant 0 : index
    %17 = vector.load %arg13[%c0_11, %c0_12, %c0_13] : memref<18x18x32xf32, #tpu.memory_space<vmem>>, vector<18x18x32xf32>
    tpu.vector_store %arg13[%c0_11, %c0_12, %c0_13], %16 {strides = array<i32>} : memref<18x18x32xf32, #tpu.memory_space<vmem>>, vector<18x18x32xf32>,
    %18 = vector.shape_cast %15 : vector<256x32xf32> to vector<16x16x32xf32>
    %c1 = arith.constant 1 : index
    %c1_14 = arith.constant 1 : index
    %c0_15 = arith.constant 0 : index
    %19 = vector.load %arg13[%c1, %c1_14, %c0_15] : memref<18x18x32xf32, #tpu.memory_space<vmem>>, vector<16x16x32xf32>
    tpu.vector_store %arg13[%c1, %c1_14, %c0_15], %18 {strides = array<i32>} : memref<18x18x32xf32, #tpu.memory_space<vmem>>, vector<16x16x32xf32>,
    %cst_16 = arith.constant 0.000000e+00 : f32
    %20 = vector.broadcast %cst_16 : f32 to vector<16x16x32xf32>
    %c0_17 = arith.constant 0 : index
    %c0_18 = arith.constant 0 : index
    %c0_19 = arith.constant 0 : index
    %21 = vector.load %arg13[%c0_17, %c0_18, %c0_19] : memref<18x18x32xf32, #tpu.memory_space<vmem>>, vector<16x16x32xf32>
    %c0_20 = arith.constant 0 : index
    %c0_21 = arith.constant 0 : index
    %c0_22 = arith.constant 0 : index
    %22 = vector.load %arg4[%c0_20, %c0_21, %c0_22] : memref<3x3x32xf32, #tpu.memory_space<vmem>>, vector<1x1x32xf32>
    %23 = vector.shape_cast %22 : vector<1x1x32xf32> to vector<32xf32>
    %24 = vector.shape_cast %23 : vector<32xf32> to vector<1x1x32xf32>
    %25 = vector.broadcast %24 : vector<1x1x32xf32> to vector<16x16x32xf32>
    %26 = arith.mulf %21, %25 : vector<16x16x32xf32>
    %27 = arith.addf %20, %26 : vector<16x16x32xf32>
    %c0_23 = arith.constant 0 : index
    %c1_24 = arith.constant 1 : index
    %c0_25 = arith.constant 0 : index
    %28 = vector.load %arg13[%c0_23, %c1_24, %c0_25] : memref<18x18x32xf32, #tpu.memory_space<vmem>>, vector<16x16x32xf32>
    %c0_26 = arith.constant 0 : index
    %c1_27 = arith.constant 1 : index
    %c0_28 = arith.constant 0 : index
    %29 = vector.load %arg4[%c0_26, %c1_27, %c0_28] : memref<3x3x32xf32, #tpu.memory_space<vmem>>, vector<1x1x32xf32>
    %30 = vector.shape_cast %29 : vector<1x1x32xf32> to vector<32xf32>
    %31 = vector.shape_cast %30 : vector<32xf32> to vector<1x1x32xf32>
    %32 = vector.broadcast %31 : vector<1x1x32xf32> to vector<16x16x32xf32>
    %33 = arith.mulf %28, %32 : vector<16x16x32xf32>
    %34 = arith.addf %27, %33 : vector<16x16x32xf32>
    %c0_29 = arith.constant 0 : index
    %c2 = arith.constant 2 : index
    %c0_30 = arith.constant 0 : index
    %35 = vector.load %arg13[%c0_29, %c2, %c0_30] : memref<18x18x32xf32, #tpu.memory_space<vmem>>, vector<16x16x32xf32>
    %c0_31 = arith.constant 0 : index
    %c2_32 = arith.constant 2 : index
    %c0_33 = arith.constant 0 : index
    %36 = vector.load %arg4[%c0_31, %c2_32, %c0_33] : memref<3x3x32xf32, #tpu.memory_space<vmem>>, vector<1x1x32xf32>
    %37 = vector.shape_cast %36 : vector<1x1x32xf32> to vector<32xf32>
    %38 = vector.shape_cast %37 : vector<32xf32> to vector<1x1x32xf32>
    %39 = vector.broadcast %38 : vector<1x1x32xf32> to vector<16x16x32xf32>
    %40 = arith.mulf %35, %39 : vector<16x16x32xf32>
    %41 = arith.addf %34, %40 : vector<16x16x32xf32>
    %c1_34 = arith.constant 1 : index
    %c0_35 = arith.constant 0 : index
    %c0_36 = arith.constant 0 : index
    %42 = vector.load %arg13[%c1_34, %c0_35, %c0_36] : memref<18x18x32xf32, #tpu.memory_space<vmem>>, vector<16x16x32xf32>
    %c1_37 = arith.constant 1 : index
    %c0_38 = arith.constant 0 : index
    %c0_39 = arith.constant 0 : index
    %43 = vector.load %arg4[%c1_37, %c0_38, %c0_39] : memref<3x3x32xf32, #tpu.memory_space<vmem>>, vector<1x1x32xf32>
    %44 = vector.shape_cast %43 : vector<1x1x32xf32> to vector<32xf32>
    %45 = vector.shape_cast %44 : vector<32xf32> to vector<1x1x32xf32>
    %46 = vector.broadcast %45 : vector<1x1x32xf32> to vector<16x16x32xf32>
    %47 = arith.mulf %42, %46 : vector<16x16x32xf32>
    %48 = arith.addf %41, %47 : vector<16x16x32xf32>
    %c1_40 = arith.constant 1 : index
    %c1_41 = arith.constant 1 : index
    %c0_42 = arith.constant 0 : index
    %49 = vector.load %arg13[%c1_40, %c1_41, %c0_42] : memref<18x18x32xf32, #tpu.memory_space<vmem>>, vector<16x16x32xf32>
    %c1_43 = arith.constant 1 : index
    %c1_44 = arith.constant 1 : index
    %c0_45 = arith.constant 0 : index
    %50 = vector.load %arg4[%c1_43, %c1_44, %c0_45] : memref<3x3x32xf32, #tpu.memory_space<vmem>>, vector<1x1x32xf32>
    %51 = vector.shape_cast %50 : vector<1x1x32xf32> to vector<32xf32>
    %52 = vector.shape_cast %51 : vector<32xf32> to vector<1x1x32xf32>
    %53 = vector.broadcast %52 : vector<1x1x32xf32> to vector<16x16x32xf32>
    %54 = arith.mulf %49, %53 : vector<16x16x32xf32>
    %55 = arith.addf %48, %54 : vector<16x16x32xf32>
    %c1_46 = arith.constant 1 : index
    %c2_47 = arith.constant 2 : index
    %c0_48 = arith.constant 0 : index
    %56 = vector.load %arg13[%c1_46, %c2_47, %c0_48] : memref<18x18x32xf32, #tpu.memory_space<vmem>>, vector<16x16x32xf32>
    %c1_49 = arith.constant 1 : index
    %c2_50 = arith.constant 2 : index
    %c0_51 = arith.constant 0 : index
    %57 = vector.load %arg4[%c1_49, %c2_50, %c0_51] : memref<3x3x32xf32, #tpu.memory_space<vmem>>, vector<1x1x32xf32>
    %58 = vector.shape_cast %57 : vector<1x1x32xf32> to vector<32xf32>
    %59 = vector.shape_cast %58 : vector<32xf32> to vector<1x1x32xf32>
    %60 = vector.broadcast %59 : vector<1x1x32xf32> to vector<16x16x32xf32>
    %61 = arith.mulf %56, %60 : vector<16x16x32xf32>
    %62 = arith.addf %55, %61 : vector<16x16x32xf32>
    %c2_52 = arith.constant 2 : index
    %c0_53 = arith.constant 0 : index
    %c0_54 = arith.constant 0 : index
    %63 = vector.load %arg13[%c2_52, %c0_53, %c0_54] : memref<18x18x32xf32, #tpu.memory_space<vmem>>, vector<16x16x32xf32>
    %c2_55 = arith.constant 2 : index
    %c0_56 = arith.constant 0 : index
    %c0_57 = arith.constant 0 : index
    %64 = vector.load %arg4[%c2_55, %c0_56, %c0_57] : memref<3x3x32xf32, #tpu.memory_space<vmem>>, vector<1x1x32xf32>
    %65 = vector.shape_cast %64 : vector<1x1x32xf32> to vector<32xf32>
    %66 = vector.shape_cast %65 : vector<32xf32> to vector<1x1x32xf32>
    %67 = vector.broadcast %66 : vector<1x1x32xf32> to vector<16x16x32xf32>
    %68 = arith.mulf %63, %67 : vector<16x16x32xf32>
    %69 = arith.addf %62, %68 : vector<16x16x32xf32>
    %c2_58 = arith.constant 2 : index
    %c1_59 = arith.constant 1 : index
    %c0_60 = arith.constant 0 : index
    %70 = vector.load %arg13[%c2_58, %c1_59, %c0_60] : memref<18x18x32xf32, #tpu.memory_space<vmem>>, vector<16x16x32xf32>
    %c2_61 = arith.constant 2 : index
    %c1_62 = arith.constant 1 : index
    %c0_63 = arith.constant 0 : index
    %71 = vector.load %arg4[%c2_61, %c1_62, %c0_63] : memref<3x3x32xf32, #tpu.memory_space<vmem>>, vector<1x1x32xf32>
    %72 = vector.shape_cast %71 : vector<1x1x32xf32> to vector<32xf32>
    %73 = vector.shape_cast %72 : vector<32xf32> to vector<1x1x32xf32>
    %74 = vector.broadcast %73 : vector<1x1x32xf32> to vector<16x16x32xf32>
    %75 = arith.mulf %70, %74 : vector<16x16x32xf32>
    %76 = arith.addf %69, %75 : vector<16x16x32xf32>
    %c2_64 = arith.constant 2 : index
    %c2_65 = arith.constant 2 : index
    %c0_66 = arith.constant 0 : index
    %77 = vector.load %arg13[%c2_64, %c2_65, %c0_66] : memref<18x18x32xf32, #tpu.memory_space<vmem>>, vector<16x16x32xf32>
    %c2_67 = arith.constant 2 : index
    %c2_68 = arith.constant 2 : index
    %c0_69 = arith.constant 0 : index
    %78 = vector.load %arg4[%c2_67, %c2_68, %c0_69] : memref<3x3x32xf32, #tpu.memory_space<vmem>>, vector<1x1x32xf32>
    %79 = vector.shape_cast %78 : vector<1x1x32xf32> to vector<32xf32>
    %80 = vector.shape_cast %79 : vector<32xf32> to vector<1x1x32xf32>
    %81 = vector.broadcast %80 : vector<1x1x32xf32> to vector<16x16x32xf32>
    %82 = arith.mulf %77, %81 : vector<16x16x32xf32>
    %83 = arith.addf %76, %82 : vector<16x16x32xf32>
    %c0_70 = arith.constant 0 : index
    %c0_71 = arith.constant 0 : index
    %84 = vector.load %arg5[%c0_70, %c0_71] : memref<1x32xf32, #tpu.memory_space<vmem>>, vector<1x32xf32>
    %85 = vector.shape_cast %84 : vector<1x32xf32> to vector<32xf32>
    %86 = vector.shape_cast %85 : vector<32xf32> to vector<1x1x32xf32>
    %87 = vector.broadcast %86 : vector<1x1x32xf32> to vector<16x16x32xf32>
    %88 = arith.addf %83, %87 : vector<16x16x32xf32>
    %89 = vector.shape_cast %88 : vector<16x16x32xf32> to vector<256x32xf32>
    %cst_72 = arith.constant dense<0.000000e+00> : vector<32xf32>
    %90 = vector.multi_reduction <add>, %89, %cst_72 [0] : vector<256x32xf32> to vector<32xf32>
    %91 = vector.shape_cast %90 : vector<32xf32> to vector<1x32xf32>
    %cst_73 = arith.constant 2.560000e+02 : f32
    %92 = vector.broadcast %cst_73 : f32 to vector<1x32xf32>
    %93 = arith.divf %91, %92 : vector<1x32xf32>
    %c0_74 = arith.constant 0 : index
    %c0_75 = arith.constant 0 : index
    %94 = vector.load %arg6[%c0_74, %c0_75] : memref<32x8xf32, #tpu.memory_space<vmem>>, vector<32x8xf32>
    %cst_76 = arith.constant dense<0.000000e+00> : vector<1x8xf32>
    %95 = tpu.matmul %93, %94, %cst_76 {dimension_numbers = #tpu.dot_dimension_numbers<[1], [0], [0], [1], [0, 0, 1, 1], [], []>} : vector<1x32xf32>, vector<32x8xf32>, vector<1x8xf32> -> vector<1x8xf32>
    %c0_77 = arith.constant 0 : index
    %c0_78 = arith.constant 0 : index
    %96 = vector.load %arg7[%c0_77, %c0_78] : memref<1x8xf32, #tpu.memory_space<vmem>>, vector<1x8xf32>
    %97 = arith.addf %95, %96 : vector<1x8xf32>
    %cst_79 = arith.constant 0.000000e+00 : f32
    %98 = vector.broadcast %cst_79 : f32 to vector<1x8xf32>
    %99 = arith.maximumf %97, %98 : vector<1x8xf32>
    %c0_80 = arith.constant 0 : index
    %c0_81 = arith.constant 0 : index
    %100 = vector.load %arg8[%c0_80, %c0_81] : memref<8x32xf32, #tpu.memory_space<vmem>>, vector<8x32xf32>
    %cst_82 = arith.constant dense<0.000000e+00> : vector<1x32xf32>
    %101 = tpu.matmul %99, %100, %cst_82 {dimension_numbers = #tpu.dot_dimension_numbers<[1], [0], [0], [1], [0, 0, 1, 1], [], []>} : vector<1x8xf32>, vector<8x32xf32>, vector<1x32xf32> -> vector<1x32xf32>
    %c0_83 = arith.constant 0 : index
    %c0_84 = arith.constant 0 : index
    %102 = vector.load %arg9[%c0_83, %c0_84] : memref<1x32xf32, #tpu.memory_space<vmem>>, vector<1x32xf32>
    %103 = arith.addf %101, %102 : vector<1x32xf32>
    %cst_85 = arith.constant 3.000000e+00 : f32
    %104 = vector.broadcast %cst_85 : f32 to vector<1x32xf32>
    %105 = arith.addf %103, %104 : vector<1x32xf32>
    %cst_86 = arith.constant 0.000000e+00 : f32
    %cst_87 = arith.constant 6.000000e+00 : f32
    %106 = vector.broadcast %cst_86 : f32 to vector<1x32xf32>
    %107 = arith.maximumf %106, %105 : vector<1x32xf32>
    %108 = vector.broadcast %cst_87 : f32 to vector<1x32xf32>
    %109 = arith.minimumf %108, %107 : vector<1x32xf32>
    %cst_88 = arith.constant 0.166666672 : f32
    %110 = vector.broadcast %cst_88 : f32 to vector<1x32xf32>
    %111 = arith.mulf %109, %110 : vector<1x32xf32>
    %112 = vector.broadcast %111 : vector<1x32xf32> to vector<256x32xf32>
    %113 = arith.mulf %89, %112 : vector<256x32xf32>
    %cst_89 = arith.constant 3.000000e+00 : f32
    %114 = vector.broadcast %cst_89 : f32 to vector<256x32xf32>
    %115 = arith.addf %113, %114 : vector<256x32xf32>
    %cst_90 = arith.constant 0.000000e+00 : f32
    %cst_91 = arith.constant 6.000000e+00 : f32
    %116 = vector.broadcast %cst_90 : f32 to vector<256x32xf32>
    %117 = arith.maximumf %116, %115 : vector<256x32xf32>
    %118 = vector.broadcast %cst_91 : f32 to vector<256x32xf32>
    %119 = arith.minimumf %118, %117 : vector<256x32xf32>
    %120 = arith.mulf %113, %119 : vector<256x32xf32>
    %cst_92 = arith.constant 0.166666672 : f32
    %121 = vector.broadcast %cst_92 : f32 to vector<256x32xf32>
    %122 = arith.mulf %120, %121 : vector<256x32xf32>
    %c0_93 = arith.constant 0 : index
    %c0_94 = arith.constant 0 : index
    %123 = vector.load %arg10[%c0_93, %c0_94] : memref<32x16xf32, #tpu.memory_space<vmem>>, vector<32x16xf32>
    %cst_95 = arith.constant dense<0.000000e+00> : vector<256x16xf32>
    %124 = tpu.matmul %122, %123, %cst_95 {dimension_numbers = #tpu.dot_dimension_numbers<[1], [0], [0], [1], [0, 0, 1, 1], [], []>} : vector<256x32xf32>, vector<32x16xf32>, vector<256x16xf32> -> vector<256x16xf32>
    %c0_96 = arith.constant 0 : index
    %c0_97 = arith.constant 0 : index
    %125 = vector.load %arg11[%c0_96, %c0_97] : memref<1x16xf32, #tpu.memory_space<vmem>>, vector<1x16xf32>
    %126 = vector.broadcast %125 : vector<1x16xf32> to vector<256x16xf32>
    %127 = arith.addf %124, %126 : vector<256x16xf32>
    %128 = arith.addf %127, %1 : vector<256x16xf32>
    %c0_98 = arith.constant 0 : index
    %c0_99 = arith.constant 0 : index
    %c0_100 = arith.constant 0 : index
    %129 = vector.load %arg12[%c0_98, %c0_99, %c0_100] : memref<1x256x16xf32, #tpu.memory_space<vmem>>, vector<1x256x16xf32>
    %130 = vector.shape_cast %129 : vector<1x256x16xf32> to vector<256x16xf32>
    %131 = vector.shape_cast %128 : vector<256x16xf32> to vector<1x256x16xf32>
    tpu.vector_store %arg12[%c0_98, %c0_99, %c0_100], %131 {strides = array<i32>} : memref<1x256x16xf32, #tpu.memory_space<vmem>>, vector<1x256x16xf32>,
    return
  }
  func.func @transform_0(%arg0: i32) -> (i32, i32, i32) {
    %c0_i32 = arith.constant 0 : i32
    %c0_i32_0 = arith.constant 0 : i32
    %c0_i32_1 = arith.constant 0 : i32
    return %arg0, %c0_i32, %c0_i32_0 : i32, i32, i32
  }
  func.func @transform_1(%arg0: i32) -> (i32, i32) {
    %c0_i32 = arith.constant 0 : i32
    %c0_i32_0 = arith.constant 0 : i32
    %c0_i32_1 = arith.constant 0 : i32
    return %c0_i32, %c0_i32_0 : i32, i32
  }
  func.func @transform_2(%arg0: i32) -> (i32, i32) {
    %c0_i32 = arith.constant 0 : i32
    %c0_i32_0 = arith.constant 0 : i32
    %c0_i32_1 = arith.constant 0 : i32
    return %c0_i32, %c0_i32_0 : i32, i32
  }
  func.func @transform_3(%arg0: i32) -> (i32, i32, i32) {
    %c0_i32 = arith.constant 0 : i32
    %c0_i32_0 = arith.constant 0 : i32
    %c0_i32_1 = arith.constant 0 : i32
    %c0_i32_2 = arith.constant 0 : i32
    return %c0_i32, %c0_i32_0, %c0_i32_1 : i32, i32, i32
  }
  func.func @transform_4(%arg0: i32) -> (i32, i32) {
    %c0_i32 = arith.constant 0 : i32
    %c0_i32_0 = arith.constant 0 : i32
    %c0_i32_1 = arith.constant 0 : i32
    return %c0_i32, %c0_i32_0 : i32, i32
  }
  func.func @transform_5(%arg0: i32) -> (i32, i32) {
    %c0_i32 = arith.constant 0 : i32
    %c0_i32_0 = arith.constant 0 : i32
    %c0_i32_1 = arith.constant 0 : i32
    return %c0_i32, %c0_i32_0 : i32, i32
  }
  func.func @transform_6(%arg0: i32) -> (i32, i32) {
    %c0_i32 = arith.constant 0 : i32
    %c0_i32_0 = arith.constant 0 : i32
    %c0_i32_1 = arith.constant 0 : i32
    return %c0_i32, %c0_i32_0 : i32, i32
  }
  func.func @transform_7(%arg0: i32) -> (i32, i32) {
    %c0_i32 = arith.constant 0 : i32
    %c0_i32_0 = arith.constant 0 : i32
    %c0_i32_1 = arith.constant 0 : i32
    return %c0_i32, %c0_i32_0 : i32, i32
  }
  func.func @transform_8(%arg0: i32) -> (i32, i32) {
    %c0_i32 = arith.constant 0 : i32
    %c0_i32_0 = arith.constant 0 : i32
    %c0_i32_1 = arith.constant 0 : i32
    return %c0_i32, %c0_i32_0 : i32, i32
  }
  func.func @transform_9(%arg0: i32) -> (i32, i32) {
    %c0_i32 = arith.constant 0 : i32
    %c0_i32_0 = arith.constant 0 : i32
    %c0_i32_1 = arith.constant 0 : i32
    return %c0_i32, %c0_i32_0 : i32, i32
  }
  func.func @transform_10(%arg0: i32) -> (i32, i32) {
    %c0_i32 = arith.constant 0 : i32
    %c0_i32_0 = arith.constant 0 : i32
    %c0_i32_1 = arith.constant 0 : i32
    return %c0_i32, %c0_i32_0 : i32, i32
  }
  func.func @transform_11(%arg0: i32) -> (i32, i32, i32) {
    %c0_i32 = arith.constant 0 : i32
    %c0_i32_0 = arith.constant 0 : i32
    %c0_i32_1 = arith.constant 0 : i32
    return %arg0, %c0_i32, %c0_i32_0 : i32, i32, i32
  }
}

</mosaic_0001>

<llo_original>
// kernel: tpu_custom_call.1
$region0: #{tpu_custom_call.1}
  #allocation0 [shape = 'u32[]', space=smem, size = 0x4, offset = 0x4, fixed_abs, tag = 'smem constant byte address 0x4 - core index']
  #allocation1 [shape = 'u32[144,128]{1,0:T(1,128)}', space=vmem, size = 0x12000, scoped, tag = 'internal scratch']
  #allocation2 [shape = 'f32[18,18,32]{2,1,0:T(8,128)}', space=vmem, size = 0x36000, scoped, tag = 'scratch operand']
  %s0 = inlined_call_operand.vmem [shape: f32[2,256,16], index: 0, kind: input, shape index: {}]
  %s1 = inlined_call_operand.vmem [shape: f32[16,32], index: 1, kind: input, shape index: {}]
  %s2 = inlined_call_operand.vmem [shape: f32[1,32], index: 2, kind: input, shape index: {}]
  %s3 = inlined_call_operand.vmem [shape: f32[3,3,32], index: 3, kind: input, shape index: {}]
  %s4 = inlined_call_operand.vmem [shape: f32[1,32], index: 4, kind: input, shape index: {}]
  %s5 = inlined_call_operand.vmem [shape: f32[32,8], index: 5, kind: input, shape index: {}]
  %s6 = inlined_call_operand.vmem [shape: f32[1,8], index: 6, kind: input, shape index: {}]
  %s7 = inlined_call_operand.vmem [shape: f32[8,32], index: 7, kind: input, shape index: {}]
  %s8 = inlined_call_operand.vmem [shape: f32[1,32], index: 8, kind: input, shape index: {}]
  %s9 = inlined_call_operand.vmem [shape: f32[32,16], index: 9, kind: input, shape index: {}]
  %s10 = inlined_call_operand.vmem [shape: f32[1,16], index: 10, kind: input, shape index: {}]
  %s11 = inlined_call_operand.vmem [shape: f32[2,256,16], index: 11, kind: output, shape index: {}]
  %s12 = sld [smem:[#allocation0]]
  $region77: #{tpu_custom_call.1} parent=0
    _
  %s14 = ssub.s32 1, %s12
  %s15 = scalar_select 0, %s14, %s12
  loop: start=0, step=1, limit=4
  $region2: #{tpu_custom_call.1} parent=0 // loop_pre_header
    _
  $region3: #{tpu_custom_call.1} parent=0 // loop_header
    %s17 = sphi 0, %s21
    %p18 = scmp.ge.s32.totalorder %s17, 4
    %s27 = sphi 0, %s29
    %s30 = sphi 0, %s27
    %s31 = sphi 0, %s30
    %s47 = sphi 0, %s31
    %s51 = sphi 0, %s51
    %s53 = sphi 0, %s51
    %s54 = sphi 0, %s53
    %s68 = sphi 0, %s54
    %s72 = sphi 0, %s72
    %s74 = sphi 0, %s72
    %s75 = sphi 0, %s74
    %s89 = sphi 0, %s75
    %s93 = sphi 0, %s93
    %s95 = sphi 0, %s93
    %s96 = sphi 0, %s95
    %s110 = sphi 0, %s96
    %s114 = sphi 0, %s114
    %s116 = sphi 0, %s114
    %s117 = sphi 0, %s116
    %s131 = sphi 0, %s117
    %s135 = sphi 0, %s135
    %s137 = sphi 0, %s135
    %s138 = sphi 0, %s137
    %s152 = sphi 0, %s138
    %s156 = sphi 0, %s156
    %s158 = sphi 0, %s156
    %s159 = sphi 0, %s158
    %s173 = sphi 0, %s159
    %s177 = sphi 0, %s177
    %s179 = sphi 0, %s177
    %s180 = sphi 0, %s179
    %s194 = sphi 0, %s180
    %s198 = sphi 0, %s198
    %s200 = sphi 0, %s198
    %s201 = sphi 0, %s200
    %s215 = sphi 0, %s201
    %s219 = sphi 0, %s219
    %s221 = sphi 0, %s219
    %s222 = sphi 0, %s221
    %s236 = sphi 0, %s222
    %s240 = sphi 0, %s240
    %s242 = sphi 0, %s240
    %s243 = sphi 0, %s242
    %s257 = sphi 0, %s243
    %s263 = sphi 0, %s265
    %s266 = sphi 0, %s263
    %s267 = sphi 0, %s266
    %s283 = sphi 0, %s267
  $region4: #{tpu_custom_call.1} parent=0 // loop_header_branch
    %20 = sbr.rel (%p18) target = $region8
  $region5: #{tpu_custom_call.1} parent=0 // loop_body
    %s22 = ssub.s32 %s17, 1
    %s23 = ssub.s32 %s17, 2
    %s24 = sadd.s32 %s17, 1
    %s25 = ssub.s32 %s17, %s24
    %p26 = scmp.eq.s32.totalorder %s25, 0
    %s28 = sadd.s32 %s27, 1
    %s29 = scalar_select %p26, %s27, %s28
    %p32 = pneg %p26
    %p33 = scmp.eq.s32.totalorder %s17, 1
    %p34 = por %p32, %p33
    %p35 = scmp.ne.s32.totalorder %s27, %s30
    %p36 = scmp.eq.s32.totalorder %s17, 0
    %p37 = por %p35, %p36
    %p38 = scmp.ne.s32.totalorder %s27, %s30
    %p39 = scmp.eq.s32.totalorder %s22, 1
    %p40 = por %p38, %p39
    %p41 = scmp.ne.s32.totalorder %s30, %s31
    %p42 = scmp.eq.s32.totalorder %s22, 0
    %p43 = por %p41, %p42
    %p44 = scmp.ne.s32.totalorder %s30, %s31
    %p45 = scmp.eq.s32.totalorder %s23, 1
    %p46 = por %p44, %p45
    %p48 = scmp.ne.s32.totalorder %s31, %s47
    %p49 = scmp.eq.s32.totalorder %s23, 0
    %p50 = por %p48, %p49
    %s52 = sadd.s32 %s51, 1
    %p55 = scmp.eq.s32.totalorder %s17, 1
    %p56 = scmp.ne.s32.totalorder %s51, %s53
    %p57 = scmp.eq.s32.totalorder %s17, 0
    %p58 = por %p56, %p57
    %p59 = scmp.ne.s32.totalorder %s51, %s53
    %p60 = scmp.eq.s32.totalorder %s22, 1
    %p61 = por %p59, %p60
    %p62 = scmp.ne.s32.totalorder %s53, %s54
    %p63 = scmp.eq.s32.totalorder %s22, 0
    %p64 = por %p62, %p63
    %p65 = scmp.ne.s32.totalorder %s53, %s54
    %p66 = scmp.eq.s32.totalorder %s23, 1
    %p67 = por %p65, %p66
    %p69 = scmp.ne.s32.totalorder %s54, %s68
    %p70 = scmp.eq.s32.totalorder %s23, 0
    %p71 = por %p69, %p70
    %s73 = sadd.s32 %s72, 1
    %p76 = scmp.eq.s32.totalorder %s17, 1
    %p77 = scmp.ne.s32.totalorder %s72, %s74
    %p78 = scmp.eq.s32.totalorder %s17, 0
    %p79 = por %p77, %p78
    %p80 = scmp.ne.s32.totalorder %s72, %s74
    %p81 = scmp.eq.s32.totalorder %s22, 1
    %p82 = por %p80, %p81
    %p83 = scmp.ne.s32.totalorder %s74, %s75
    %p84 = scmp.eq.s32.totalorder %s22, 0
    %p85 = por %p83, %p84
    %p86 = scmp.ne.s32.totalorder %s74, %s75
    %p87 = scmp.eq.s32.totalorder %s23, 1
    %p88 = por %p86, %p87
    %p90 = scmp.ne.s32.totalorder %s75, %s89
    %p91 = scmp.eq.s32.totalorder %s23, 0
    %p92 = por %p90, %p91
    %s94 = sadd.s32 %s93, 1
    %p97 = scmp.eq.s32.totalorder %s17, 1
    %p98 = scmp.ne.s32.totalorder %s93, %s95
    %p99 = scmp.eq.s32.totalorder %s17, 0
    %p100 = por %p98, %p99
    %p101 = scmp.ne.s32.totalorder %s93, %s95
    %p102 = scmp.eq.s32.totalorder %s22, 1
    %p103 = por %p101, %p102
    %p104 = scmp.ne.s32.totalorder %s95, %s96
    %p105 = scmp.eq.s32.totalorder %s22, 0
    %p106 = por %p104, %p105
    %p107 = scmp.ne.s32.totalorder %s95, %s96
    %p108 = scmp.eq.s32.totalorder %s23, 1
    %p109 = por %p107, %p108
    %p111 = scmp.ne.s32.totalorder %s96, %s110
    %p112 = scmp.eq.s32.totalorder %s23, 0
    %p113 = por %p111, %p112
    %s115 = sadd.s32 %s114, 1
    %p118 = scmp.eq.s32.totalorder %s17, 1
    %p119 = scmp.ne.s32.totalorder %s114, %s116
    %p120 = scmp.eq.s32.totalorder %s17, 0
    %p121 = por %p119, %p120
    %p122 = scmp.ne.s32.totalorder %s114, %s116
    %p123 = scmp.eq.s32.totalorder %s22, 1
    %p124 = por %p122, %p123
    %p125 = scmp.ne.s32.totalorder %s116, %s117
    %p126 = scmp.eq.s32.totalorder %s22, 0
    %p127 = por %p125, %p126
    %p128 = scmp.ne.s32.totalorder %s116, %s117
    %p129 = scmp.eq.s32.totalorder %s23, 1
    %p130 = por %p128, %p129
    %p132 = scmp.ne.s32.totalorder %s117, %s131
    %p133 = scmp.eq.s32.totalorder %s23, 0
    %p134 = por %p132, %p133
    %s136 = sadd.s32 %s135, 1
    %p139 = scmp.eq.s32.totalorder %s17, 1
    %p140 = scmp.ne.s32.totalorder %s135, %s137
    %p141 = scmp.eq.s32.totalorder %s17, 0
    %p142 = por %p140, %p141
    %p143 = scmp.ne.s32.totalorder %s135, %s137
    %p144 = scmp.eq.s32.totalorder %s22, 1
    %p145 = por %p143, %p144
    %p146 = scmp.ne.s32.totalorder %s137, %s138
    %p147 = scmp.eq.s32.totalorder %s22, 0
    %p148 = por %p146, %p147
    %p149 = scmp.ne.s32.totalorder %s137, %s138
    %p150 = scmp.eq.s32.totalorder %s23, 1
    %p151 = por %p149, %p150
    %p153 = scmp.ne.s32.totalorder %s138, %s152
    %p154 = scmp.eq.s32.totalorder %s23, 0
    %p155 = por %p153, %p154
    %s157 = sadd.s32 %s156, 1
    %p160 = scmp.eq.s32.totalorder %s17, 1
    %p161 = scmp.ne.s32.totalorder %s156, %s158
    %p162 = scmp.eq.s32.totalorder %s17, 0
    %p163 = por %p161, %p162
    %p164 = scmp.ne.s32.totalorder %s156, %s158
    %p165 = scmp.eq.s32.totalorder %s22, 1
    %p166 = por %p164, %p165
    %p167 = scmp.ne.s32.totalorder %s158, %s159
    %p168 = scmp.eq.s32.totalorder %s22, 0
    %p169 = por %p167, %p168
    %p170 = scmp.ne.s32.totalorder %s158, %s159
    %p171 = scmp.eq.s32.totalorder %s23, 1
    %p172 = por %p170, %p171
    %p174 = scmp.ne.s32.totalorder %s159, %s173
    %p175 = scmp.eq.s32.totalorder %s23, 0
    %p176 = por %p174, %p175
    %s178 = sadd.s32 %s177, 1
    %p181 = scmp.eq.s32.totalorder %s17, 1
    %p182 = scmp.ne.s32.totalorder %s177, %s179
    %p183 = scmp.eq.s32.totalorder %s17, 0
    %p184 = por %p182, %p183
    %p185 = scmp.ne.s32.totalorder %s177, %s179
    %p186 = scmp.eq.s32.totalorder %s22, 1
    %p187 = por %p185, %p186
    %p188 = scmp.ne.s32.totalorder %s179, %s180
    %p189 = scmp.eq.s32.totalorder %s22, 0
    %p190 = por %p188, %p189
    %p191 = scmp.ne.s32.totalorder %s179, %s180
    %p192 = scmp.eq.s32.totalorder %s23, 1
    %p193 = por %p191, %p192
    %p195 = scmp.ne.s32.totalorder %s180, %s194
    %p196 = scmp.eq.s32.totalorder %s23, 0
    %p197 = por %p195, %p196
    %s199 = sadd.s32 %s198, 1
    %p202 = scmp.eq.s32.totalorder %s17, 1
    %p203 = scmp.ne.s32.totalorder %s198, %s200
    %p204 = scmp.eq.s32.totalorder %s17, 0
    %p205 = por %p203, %p204
    %p206 = scmp.ne.s32.totalorder %s198, %s200
    %p207 = scmp.eq.s32.totalorder %s22, 1
    %p208 = por %p206, %p207
    %p209 = scmp.ne.s32.totalorder %s200, %s201
    %p210 = scmp.eq.s32.totalorder %s22, 0
    %p211 = por %p209, %p210
    %p212 = scmp.ne.s32.totalorder %s200, %s201
    %p213 = scmp.eq.s32.totalorder %s23, 1
    %p214 = por %p212, %p213
    %p216 = scmp.ne.s32.totalorder %s201, %s215
    %p217 = scmp.eq.s32.totalorder %s23, 0
    %p218 = por %p216, %p217
    %s220 = sadd.s32 %s219, 1
    %p223 = scmp.eq.s32.totalorder %s17, 1
    %p224 = scmp.ne.s32.totalorder %s219, %s221
    %p225 = scmp.eq.s32.totalorder %s17, 0
    %p226 = por %p224, %p225
    %p227 = scmp.ne.s32.totalorder %s219, %s221
    %p228 = scmp.eq.s32.totalorder %s22, 1
    %p229 = por %p227, %p228
    %p230 = scmp.ne.s32.totalorder %s221, %s222
    %p231 = scmp.eq.s32.totalorder %s22, 0
    %p232 = por %p230, %p231
    %p233 = scmp.ne.s32.totalorder %s221, %s222
    %p234 = scmp.eq.s32.totalorder %s23, 1
    %p235 = por %p233, %p234
    %p237 = scmp.ne.s32.totalorder %s222, %s236
    %p238 = scmp.eq.s32.totalorder %s23, 0
    %p239 = por %p237, %p238
    %s241 = sadd.s32 %s240, 1
    %p244 = scmp.eq.s32.totalorder %s17, 1
    %p245 = scmp.ne.s32.totalorder %s240, %s242
    %p246 = scmp.eq.s32.totalorder %s17, 0
    %p247 = por %p245, %p246
    %p248 = scmp.ne.s32.totalorder %s240, %s242
    %p249 = scmp.eq.s32.totalorder %s22, 1
    %p250 = por %p248, %p249
    %p251 = scmp.ne.s32.totalorder %s242, %s243
    %p252 = scmp.eq.s32.totalorder %s22, 0
    %p253 = por %p251, %p252
    %p254 = scmp.ne.s32.totalorder %s242, %s243
    %p255 = scmp.eq.s32.totalorder %s23, 1
    %p256 = por %p254, %p255
    %p258 = scmp.ne.s32.totalorder %s243, %s257
    %p259 = scmp.eq.s32.totalorder %s23, 0
    %p260 = por %p258, %p259
    %s261 = ssub.s32 %s17, %s24
    %p262 = scmp.eq.s32.totalorder %s261, 0
    %s264 = sadd.s32 %s263, 1
    %s265 = scalar_select %p262, %s263, %s264
    %p268 = pneg %p262
    %p269 = scmp.eq.s32.totalorder %s17, 1
    %p270 = por %p268, %p269
    %p271 = scmp.ne.s32.totalorder %s263, %s266
    %p272 = scmp.eq.s32.totalorder %s17, 0
    %p273 = por %p271, %p272
    %p274 = scmp.ne.s32.totalorder %s263, %s266
    %p275 = scmp.eq.s32.totalorder %s22, 1
    %p276 = por %p274, %p275
    %p277 = scmp.ne.s32.totalorder %s266, %s267
    %p278 = scmp.eq.s32.totalorder %s22, 0
    %p279 = por %p277, %p278
    %p280 = scmp.ne.s32.totalorder %s266, %s267
    %p281 = scmp.eq.s32.totalorder %s23, 1
    %p282 = por %p280, %p281
    %p284 = scmp.ne.s32.totalorder %s267, %s283
    %p285 = scmp.eq.s32.totalorder %s23, 0
    %p286 = por %p284, %p285
    %p287 = scmp.le.s32.totalorder 1, %s17
    %p288 = scmp.lt.s32.totalorder %s17, 3
    %p289 = pnand %p287, %p288
    %p290 = pneg %p289
    // Predicated region
    $region9: #{tpu_custom_call.1} parent=5 // pred_check
      _
    $region10: #{tpu_custom_call.1} parent=5 // pred_check_branch
      %292 = sbr.rel (%p289) target = $region12
    $region11: #{tpu_custom_call.1} parent=5 // pred_region
      %s293 = ssub.s32 %s17, 1
      // Predicated region
      $region13: #{tpu_custom_call.1} parent=11 // pred_check
        %p294 = pneg %p64
      $region14: #{tpu_custom_call.1} parent=11 // pred_check_branch
        %296 = sbr.rel (%p294) target = $region16
      $region15: #{tpu_custom_call.1} parent=11 // pred_region
        _
      $region16: #{tpu_custom_call.1} parent=11 // pred_fallthru
        _
      // Predicated region
      $region17: #{tpu_custom_call.1} parent=11 // pred_check
        %p297 = pneg %p85
      $region18: #{tpu_custom_call.1} parent=11 // pred_check_branch
        %299 = sbr.rel (%p297) target = $region20
      $region19: #{tpu_custom_call.1} parent=11 // pred_region
        _
      $region20: #{tpu_custom_call.1} parent=11 // pred_fallthru
        _
      // Predicated region
      $region21: #{tpu_custom_call.1} parent=11 // pred_check
        %p300 = pneg %p106
      $region22: #{tpu_custom_call.1} parent=11 // pred_check_branch
        %302 = sbr.rel (%p300) target = $region24
      $region23: #{tpu_custom_call.1} parent=11 // pred_region
        _
      $region24: #{tpu_custom_call.1} parent=11 // pred_fallthru
        _
      // Predicated region
      $region25: #{tpu_custom_call.1} parent=11 // pred_check
        %p303 = pneg %p127
      $region26: #{tpu_custom_call.1} parent=11 // pred_check_branch
        %305 = sbr.rel (%p303) target = $region28
      $region27: #{tpu_custom_call.1} parent=11 // pred_region
        _
      $region28: #{tpu_custom_call.1} parent=11 // pred_fallthru
        _
      // Predicated region
      $region29: #{tpu_custom_call.1} parent=11 // pred_check
        %p306 = pneg %p148
      $region30: #{tpu_custom_call.1} parent=11 // pred_check_branch
        %308 = sbr.rel (%p306) target = $region32
      $region31: #{tpu_custom_call.1} parent=11 // pred_region
        _
      $region32: #{tpu_custom_call.1} parent=11 // pred_fallthru
        _
      // Predicated region
      $region33: #{tpu_custom_call.1} parent=11 // pred_check
        %p309 = pneg %p169
      $region34: #{tpu_custom_call.1} parent=11 // pred_check_branch
        %311 = sbr.rel (%p309) target = $region36
      $region35: #{tpu_custom_call.1} parent=11 // pred_region
        _
      $region36: #{tpu_custom_call.1} parent=11 // pred_fallthru
        _
      // Predicated region
      $region37: #{tpu_custom_call.1} parent=11 // pred_check
        %p312 = pneg %p190
      $region38: #{tpu_custom_call.1} parent=11 // pred_check_branch
        %314 = sbr.rel (%p312) target = $region40
      $region39: #{tpu_custom_call.1} parent=11 // pred_region
        _
      $region40: #{tpu_custom_call.1} parent=11 // pred_fallthru
        _
      // Predicated region
      $region41: #{tpu_custom_call.1} parent=11 // pred_check
        %p315 = pneg %p211
      $region42: #{tpu_custom_call.1} parent=11 // pred_check_branch
        %317 = sbr.rel (%p315) target = $region44
      $region43: #{tpu_custom_call.1} parent=11 // pred_region
        _
      $region44: #{tpu_custom_call.1} parent=11 // pred_fallthru
        _
      // Predicated region
      $region45: #{tpu_custom_call.1} parent=11 // pred_check
        %p318 = pneg %p232
      $region46: #{tpu_custom_call.1} parent=11 // pred_check_branch
        %320 = sbr.rel (%p318) target = $region48
      $region47: #{tpu_custom_call.1} parent=11 // pred_region
        _
      $region48: #{tpu_custom_call.1} parent=11 // pred_fallthru
        _
      // Predicated region
      $region49: #{tpu_custom_call.1} parent=11 // pred_check
        %p321 = pneg %p253
      $region50: #{tpu_custom_call.1} parent=11 // pred_check_branch
        %323 = sbr.rel (%p321) target = $region52
      $region51: #{tpu_custom_call.1} parent=11 // pred_region
        _
      $region52: #{tpu_custom_call.1} parent=11 // pred_fallthru
        _
    $region12: #{tpu_custom_call.1} parent=5 // pred_fallthru
      _
    %p324 = scmp.lt.s32.totalorder %s17, 2
    // Predicated region
    $region53: #{tpu_custom_call.1} parent=5 // pred_check
      %p325 = pneg %p324
    $region54: #{tpu_custom_call.1} parent=5 // pred_check_branch
      %327 = sbr.rel (%p325) target = $region56
    $region55: #{tpu_custom_call.1} parent=5 // pred_region
      // Predicated region
      $region57: #{tpu_custom_call.1} parent=55 // pred_check
        %p328 = pneg %p37
      $region58: #{tpu_custom_call.1} parent=55 // pred_check_branch
        %330 = sbr.rel (%p328) target = $region60
      $region59: #{tpu_custom_call.1} parent=55 // pred_region
        %p331 = scmp.lt.s32.totalorder %s17, 1
        %s332 = scalar_select %p331, %s17, 1
        %s333 = smul.addr %s332, 32
        %s334 = smul.addr %s333, 8
        %s335 = scalar_lea.vmem %s0, %s334
      $region60: #{tpu_custom_call.1} parent=55 // pred_fallthru
        _
    $region56: #{tpu_custom_call.1} parent=5 // pred_fallthru
      _
    %p336 = scmp.le.s32.totalorder 1, %s17
    %p337 = scmp.lt.s32.totalorder %s17, 3
    %p338 = pnand %p336, %p337
    %p339 = pneg %p338
    // Predicated region
    $region61: #{tpu_custom_call.1} parent=5 // pred_check
      _
    $region62: #{tpu_custom_call.1} parent=5 // pred_check_branch
      %341 = sbr.rel (%p338) target = $region64
    $region63: #{tpu_custom_call.1} parent=5 // pred_region
      %s342 = ssub.s32 %s17, 1
      %p343 = scmp.lt.s32.totalorder %s22, 1
      %s344 = scalar_select %p343, %s22, 1
      %s345 = smul.addr %s344, 32
      %s346 = smul.addr %s345, 8
      %s347 = scalar_lea.vmem %s0, %s346
      %p348 = pneg %p43
      %p349 = pneg %p40
      %p350 = pneg %p64
      %p351 = pneg %p61
      %p352 = pneg %p85
      %p353 = pneg %p82
      %p354 = pneg %p106
      %p355 = pneg %p103
      %p356 = pneg %p127
      %p357 = pneg %p124
      %p358 = pneg %p148
      %p359 = pneg %p145
      %p360 = pneg %p169
      %p361 = pneg %p166
      %p362 = pneg %p190
      %p363 = pneg %p187
      %p364 = pneg %p211
      %p365 = pneg %p208
      %p366 = pneg %p232
      %p367 = pneg %p229
      %p368 = pneg %p253
      %p369 = pneg %p250
      %p370 = pneg %p279
      %p371 = pneg %p276
      %p372 = scmp.lt.s32.totalorder %s22, 1
      %s373 = scalar_select %p372, %s22, 1
      %s374 = smul.addr %s373, 32
      %s375 = smul.addr %s374, 8
      %s376 = scalar_lea.vmem %s11, %s375
      %p377 = scmp.lt.s32.totalorder %s22, 1
      %s378 = scalar_select %p377, %s22, 1
      %s379 = smul.addr %s378, 32
      %s380 = smul.addr %s379, 8
      %s381 = scalar_lea.vmem %s0, %s380
      %p382 = scmp.lt.s32.totalorder %s22, 1
      %s383 = scalar_select %p382, %s22, 1
      %s384 = smul.addr %s383, 32
      %s385 = smul.addr %s384, 8
      %s386 = scalar_lea.vmem %s11, %s385
      %v387 = vld [vmem:[%s381] sm:$0xff]
      %v388 = vld [vmem:[%s381 + $0x8] sm:$0xff]
      %v389 = vld [vmem:[%s381 + $0x10] sm:$0xff]
      %v390 = vld [vmem:[%s381 + $0x18] sm:$0xff]
      %v391 = vld [vmem:[%s381 + $0x20] sm:$0xff]
      %v392 = vld [vmem:[%s381 + $0x28] sm:$0xff]
      %v393 = vld [vmem:[%s381 + $0x30] sm:$0xff]
      %v394 = vld [vmem:[%s381 + $0x38] sm:$0xff]
      %v395 = vld [vmem:[%s381 + $0x40] sm:$0xff]
      %v396 = vld [vmem:[%s381 + $0x48] sm:$0xff]
      %v397 = vld [vmem:[%s381 + $0x50] sm:$0xff]
      %v398 = vld [vmem:[%s381 + $0x58] sm:$0xff]
      %v399 = vld [vmem:[%s381 + $0x60] sm:$0xff]
      %v400 = vld [vmem:[%s381 + $0x68] sm:$0xff]
      %v401 = vld [vmem:[%s381 + $0x70] sm:$0xff]
      %v402 = vld [vmem:[%s381 + $0x78] sm:$0xff]
      %v403 = vld [vmem:[%s381 + $0x80] sm:$0xff]
      %v404 = vld [vmem:[%s381 + $0x88] sm:$0xff]
      %v405 = vld [vmem:[%s381 + $0x90] sm:$0xff]
      %v406 = vld [vmem:[%s381 + $0x98] sm:$0xff]
      %v407 = vld [vmem:[%s381 + $0xa0] sm:$0xff]
      %v408 = vld [vmem:[%s381 + $0xa8] sm:$0xff]
      %v409 = vld [vmem:[%s381 + $0xb0] sm:$0xff]
      %v410 = vld [vmem:[%s381 + $0xb8] sm:$0xff]
      %v411 = vld [vmem:[%s381 + $0xc0] sm:$0xff]
      %v412 = vld [vmem:[%s381 + $0xc8] sm:$0xff]
      %v413 = vld [vmem:[%s381 + $0xd0] sm:$0xff]
      %v414 = vld [vmem:[%s381 + $0xd8] sm:$0xff]
      %v415 = vld [vmem:[%s381 + $0xe0] sm:$0xff]
      %v416 = vld [vmem:[%s381 + $0xe8] sm:$0xff]
      %v417 = vld [vmem:[%s381 + $0xf0] sm:$0xff]
      %v418 = vld [vmem:[%s381 + $0xf8] sm:$0xff]
      %v419 = vld [vmem:[%s1] sm:$0xff]
      %v420 = vld [vmem:[%s1 + $0x8] sm:$0xff]
      %v421 = vld [vmem:[%s2] sm:$0x1]
      %v423 = vlaneseq
      %v424 = vshrl.u32 %v423, 7
      %v425 = vsub.s32 0, %v424
      %v426 = vrot.slane %v421, %v425
      %vm428 = vcmask 130048
      %v430 = vsel %vm428, %v387, 0
      %v433 = vsel %vm428, %v388, 0
      %v436 = vsel %vm428, %v389, 0
      %v439 = vsel %vm428, %v390, 0
      %v442 = vsel %vm428, %v391, 0
      %v445 = vsel %vm428, %v392, 0
      %v448 = vsel %vm428, %v393, 0
      %v451 = vsel %vm428, %v394, 0
      %v454 = vsel %vm428, %v395, 0
      %v457 = vsel %vm428, %v396, 0
      %v460 = vsel %vm428, %v397, 0
      %v463 = vsel %vm428, %v398, 0
      %v466 = vsel %vm428, %v399, 0
      %v469 = vsel %vm428, %v400, 0
      %v472 = vsel %vm428, %v401, 0
      %v475 = vsel %vm428, %v402, 0
      %v478 = vsel %vm428, %v403, 0
      %v481 = vsel %vm428, %v404, 0
      %v484 = vsel %vm428, %v405, 0
      %v487 = vsel %vm428, %v406, 0
      %v490 = vsel %vm428, %v407, 0
      %v493 = vsel %vm428, %v408, 0
      %v496 = vsel %vm428, %v409, 0
      %v499 = vsel %vm428, %v410, 0
      %v502 = vsel %vm428, %v411, 0
      %v505 = vsel %vm428, %v412, 0
      %v508 = vsel %vm428, %v413, 0
      %v511 = vsel %vm428, %v414, 0
      %v514 = vsel %vm428, %v415, 0
      %v517 = vsel %vm428, %v416, 0
      %v520 = vsel %vm428, %v417, 0
      %v523 = vsel %vm428, %v418, 0
      %525 = vmatprep.subr.mxu0 0.0
      %526 = vmatpush1.msra.mxu0 %v419
      %527 = vmatprep.subr.mxu0 0.0
      %528 = vmatpush1.msra.mxu0 %v420
      %529 = vmatprep.subr.mxu0 0.0
      %530 = vmatpush1.msra.mxu0 0.0
      %531 = vmatprep.subr.mxu0 0.0
      %532 = vmatpush1.msra.mxu0 0.0
      %533 = vmatprep.subr.mxu0 0.0
      %534 = vmatpush1.msra.mxu0 0.0
      %535 = vmatprep.subr.mxu0 0.0
      %536 = vmatpush1.msra.mxu0 0.0
      %537 = vmatprep.subr.mxu0 0.0
      %538 = vmatpush1.msra.mxu0 0.0
      %539 = vmatprep.subr.mxu0 0.0
      %540 = vmatpush1.msra.mxu0 0.0
      %541 = vmatprep.subr.mxu0 0.0
      %542 = vmatpush1.msra.mxu0 0.0
      %543 = vmatprep.subr.mxu0 0.0
      %544 = vmatpush1.msra.mxu0 0.0
      %545 = vmatprep.subr.mxu0 0.0
      %546 = vmatpush1.msra.mxu0 0.0
      %547 = vmatprep.subr.mxu0 0.0
      %548 = vmatpush1.msra.mxu0 0.0
      %549 = vmatprep.subr.mxu0 0.0
      %550 = vmatpush1.msra.mxu0 0.0
      %551 = vmatprep.subr.mxu0 0.0
      %552 = vmatpush1.msra.mxu0 0.0
      %553 = vmatprep.subr.mxu0 0.0
      %554 = vmatpush1.msra.mxu0 0.0
      %555 = vmatprep.subr.mxu0 0.0
      %556 = vmatpush1.msra.mxu0 0.0
      %557 = vmatprep.subr.mxu0 0.0
      %558 = vmatpush1.msra.mxu0 0.0
      %559 = vmatprep.subr.mxu0 0.0
      %560 = vmatpush1.msra.mxu0 0.0
      %561 = vmatprep.subr.mxu0 0.0
      %562 = vmatpush1.msra.mxu0 0.0
      %563 = vmatprep.subr.mxu0 0.0
      %564 = vmatpush1.msra.mxu0 0.0
      %565 = vmatprep.subr.mxu0 0.0
      %566 = vmatpush1.msra.mxu0 0.0
      %567 = vmatprep.subr.mxu0 0.0
      %568 = vmatpush1.msra.mxu0 0.0
      %569 = vmatprep.subr.mxu0 0.0
      %570 = vmatpush1.msra.mxu0 0.0
      %571 = vmatprep.subr.mxu0 0.0
      %572 = vmatpush1.msra.mxu0 0.0
      %573 = vmatprep.subr.mxu0 0.0
      %574 = vmatpush1.msra.mxu0 0.0
      %575 = vmatprep.subr.mxu0 0.0
      %576 = vmatpush1.msra.mxu0 0.0
      %577 = vmatprep.subr.mxu0 0.0
      %578 = vmatpush1.msra.mxu0 0.0
      %579 = vmatprep.subr.mxu0 0.0
      %580 = vmatpush1.msra.mxu0 0.0
      %581 = vmatprep.subr.mxu0 0.0
      %582 = vmatpush1.msra.mxu0 0.0
      %583 = vmatprep.subr.mxu0 0.0
      %584 = vmatpush1.msra.mxu0 0.0
      %585 = vmatprep.subr.mxu0 0.0
      %586 = vmatpush1.msra.mxu0 0.0
      %587 = vmatprep.subr.mxu0 0.0
      %588 = vmatpush1.msra.mxu0 0.0
      %589 = vmatprep.mubr.f32.mxu0 0.0
      %590 = vmatmul.mubr.f32.gmra.mrb[0].mxu0 %v430
      %v591 = vpop.f32.mrb[0].mxu0
      %v592 = vadd.f32 %v426, %v591
      %v593 = vpop.f32.mrb[0].mxu0
      %594 = vmatprep.mubr.f32.mxu0 0.0
      %595 = vmatmul.mubr.f32.gmra.mrb[0].mxu0 %v433
      %v596 = vpop.f32.mrb[0].mxu0
      %v597 = vadd.f32 %v426, %v596
      %v598 = vpop.f32.mrb[0].mxu0
      %599 = vmatprep.mubr.f32.mxu0 0.0
      %600 = vmatmul.mubr.f32.gmra.mrb[0].mxu0 %v436
      %v601 = vpop.f32.mrb[0].mxu0
      %v602 = vadd.f32 %v426, %v601
      %v603 = vpop.f32.mrb[0].mxu0
      %604 = vmatprep.mubr.f32.mxu0 0.0
      %605 = vmatmul.mubr.f32.gmra.mrb[0].mxu0 %v439
      %v606 = vpop.f32.mrb[0].mxu0
      %v607 = vadd.f32 %v426, %v606
      %v608 = vpop.f32.mrb[0].mxu0
      %609 = vmatprep.mubr.f32.mxu0 0.0
      %610 = vmatmul.mubr.f32.gmra.mrb[0].mxu0 %v442
      %v611 = vpop.f32.mrb[0].mxu0
      %v612 = vadd.f32 %v426, %v611
      %v613 = vpop.f32.mrb[0].mxu0
      %614 = vmatprep.mubr.f32.mxu0 0.0
      %615 = vmatmul.mubr.f32.gmra.mrb[0].mxu0 %v445
      %v616 = vpop.f32.mrb[0].mxu0
      %v617 = vadd.f32 %v426, %v616
      %v618 = vpop.f32.mrb[0].mxu0
      %619 = vmatprep.mubr.f32.mxu0 0.0
      %620 = vmatmul.mubr.f32.gmra.mrb[0].mxu0 %v448
      %v621 = vpop.f32.mrb[0].mxu0
      %v622 = vadd.f32 %v426, %v621
      %v623 = vpop.f32.mrb[0].mxu0
      %624 = vmatprep.mubr.f32.mxu0 0.0
      %625 = vmatmul.mubr.f32.gmra.mrb[0].mxu0 %v451
      %v626 = vpop.f32.mrb[0].mxu0
      %v627 = vadd.f32 %v426, %v626
      %v628 = vpop.f32.mrb[0].mxu0
      %629 = vmatprep.mubr.f32.mxu0 0.0
      %630 = vmatmul.mubr.f32.gmra.mrb[0].mxu0 %v454
      %v631 = vpop.f32.mrb[0].mxu0
      %v632 = vadd.f32 %v426, %v631
      %v633 = vpop.f32.mrb[0].mxu0
      %634 = vmatprep.mubr.f32.mxu0 0.0
      %635 = vmatmul.mubr.f32.gmra.mrb[0].mxu0 %v457
      %v636 = vpop.f32.mrb[0].mxu0
      %v637 = vadd.f32 %v426, %v636
      %v638 = vpop.f32.mrb[0].mxu0
      %639 = vmatprep.mubr.f32.mxu0 0.0
      %640 = vmatmul.mubr.f32.gmra.mrb[0].mxu0 %v460
      %v641 = vpop.f32.mrb[0].mxu0
      %v642 = vadd.f32 %v426, %v641
      %v643 = vpop.f32.mrb[0].mxu0
      %644 = vmatprep.mubr.f32.mxu0 0.0
      %645 = vmatmul.mubr.f32.gmra.mrb[0].mxu0 %v463
      %v646 = vpop.f32.mrb[0].mxu0
      %v647 = vadd.f32 %v426, %v646
      %v648 = vpop.f32.mrb[0].mxu0
      %649 = vmatprep.mubr.f32.mxu0 0.0
      %650 = vmatmul.mubr.f32.gmra.mrb[0].mxu0 %v466
      %v651 = vpop.f32.mrb[0].mxu0
      %v652 = vadd.f32 %v426, %v651
      %v653 = vpop.f32.mrb[0].mxu0
      %654 = vmatprep.mubr.f32.mxu0 0.0
      %655 = vmatmul.mubr.f32.gmra.mrb[0].mxu0 %v469
      %v656 = vpop.f32.mrb[0].mxu0
      %v657 = vadd.f32 %v426, %v656
      %v658 = vpop.f32.mrb[0].mxu0
      %659 = vmatprep.mubr.f32.mxu0 0.0
      %660 = vmatmul.mubr.f32.gmra.mrb[0].mxu0 %v472
      %v661 = vpop.f32.mrb[0].mxu0
      %v662 = vadd.f32 %v426, %v661
      %v663 = vpop.f32.mrb[0].mxu0
      %664 = vmatprep.mubr.f32.mxu0 0.0
      %665 = vmatmul.mubr.f32.gmra.mrb[0].mxu0 %v475
      %v666 = vpop.f32.mrb[0].mxu0
      %v667 = vadd.f32 %v426, %v666
      %v668 = vpop.f32.mrb[0].mxu0
      %669 = vmatprep.mubr.f32.mxu0 0.0
      %670 = vmatmul.mubr.f32.gmra.mrb[0].mxu0 %v478
      %v671 = vpop.f32.mrb[0].mxu0
      %v672 = vadd.f32 %v426, %v671
      %v673 = vpop.f32.mrb[0].mxu0
      %674 = vmatprep.mubr.f32.mxu0 0.0
      %675 = vmatmul.mubr.f32.gmra.mrb[0].mxu0 %v481
      %v676 = vpop.f32.mrb[0].mxu0
      %v677 = vadd.f32 %v426, %v676
      %v678 = vpop.f32.mrb[0].mxu0
      %679 = vmatprep.mubr.f32.mxu0 0.0
      %680 = vmatmul.mubr.f32.gmra.mrb[0].mxu0 %v484
      %v681 = vpop.f32.mrb[0].mxu0
      %v682 = vadd.f32 %v426, %v681
      %v683 = vpop.f32.mrb[0].mxu0
      %684 = vmatprep.mubr.f32.mxu0 0.0
      %685 = vmatmul.mubr.f32.gmra.mrb[0].mxu0 %v487
      %v686 = vpop.f32.mrb[0].mxu0
      %v687 = vadd.f32 %v426, %v686
      %v688 = vpop.f32.mrb[0].mxu0
      %689 = vmatprep.mubr.f32.mxu0 0.0
      %690 = vmatmul.mubr.f32.gmra.mrb[0].mxu0 %v490
      %v691 = vpop.f32.mrb[0].mxu0
      %v692 = vadd.f32 %v426, %v691
      %v693 = vpop.f32.mrb[0].mxu0
      %694 = vmatprep.mubr.f32.mxu0 0.0
      %695 = vmatmul.mubr.f32.gmra.mrb[0].mxu0 %v493
      %v696 = vpop.f32.mrb[0].mxu0
      %v697 = vadd.f32 %v426, %v696
      %v698 = vpop.f32.mrb[0].mxu0
      %699 = vmatprep.mubr.f32.mxu0 0.0
      %700 = vmatmul.mubr.f32.gmra.mrb[0].mxu0 %v496
      %v701 = vpop.f32.mrb[0].mxu0
      %v702 = vadd.f32 %v426, %v701
      %v703 = vpop.f32.mrb[0].mxu0
      %704 = vmatprep.mubr.f32.mxu0 0.0
      %705 = vmatmul.mubr.f32.gmra.mrb[0].mxu0 %v499
      %v706 = vpop.f32.mrb[0].mxu0
      %v707 = vadd.f32 %v426, %v706
      %v708 = vpop.f32.mrb[0].mxu0
      %709 = vmatprep.mubr.f32.mxu0 0.0
      %710 = vmatmul.mubr.f32.gmra.mrb[0].mxu0 %v502
      %v711 = vpop.f32.mrb[0].mxu0
      %v712 = vadd.f32 %v426, %v711
      %v713 = vpop.f32.mrb[0].mxu0
      %714 = vmatprep.mubr.f32.mxu0 0.0
      %715 = vmatmul.mubr.f32.gmra.mrb[0].mxu0 %v505
      %v716 = vpop.f32.mrb[0].mxu0
      %v717 = vadd.f32 %v426, %v716
      %v718 = vpop.f32.mrb[0].mxu0
      %719 = vmatprep.mubr.f32.mxu0 0.0
      %720 = vmatmul.mubr.f32.gmra.mrb[0].mxu0 %v508
      %v721 = vpop.f32.mrb[0].mxu0
      %v722 = vadd.f32 %v426, %v721
      %v723 = vpop.f32.mrb[0].mxu0
      %724 = vmatprep.mubr.f32.mxu0 0.0
      %725 = vmatmul.mubr.f32.gmra.mrb[0].mxu0 %v511
      %v726 = vpop.f32.mrb[0].mxu0
      %v727 = vadd.f32 %v426, %v726
      %v728 = vpop.f32.mrb[0].mxu0
      %729 = vmatprep.mubr.f32.mxu0 0.0
      %730 = vmatmul.mubr.f32.gmra.mrb[0].mxu0 %v514
      %v731 = vpop.f32.mrb[0].mxu0
      %v732 = vadd.f32 %v426, %v731
      %v733 = vpop.f32.mrb[0].mxu0
      %734 = vmatprep.mubr.f32.mxu0 0.0
      %735 = vmatmul.mubr.f32.gmra.mrb[0].mxu0 %v517
      %v736 = vpop.f32.mrb[0].mxu0
      %v737 = vadd.f32 %v426, %v736
      %v738 = vpop.f32.mrb[0].mxu0
      %739 = vmatprep.mubr.f32.mxu0 0.0
      %740 = vmatmul.mubr.f32.gmra.mrb[0].mxu0 %v520
      %v741 = vpop.f32.mrb[0].mxu0
      %v742 = vadd.f32 %v426, %v741
      %v743 = vpop.f32.mrb[0].mxu0
      %744 = vmatprep.mubr.f32.mxu0 0.0
      %745 = vmatmul.mubr.f32.gmra.mrb[0].mxu0 %v523
      %v746 = vpop.f32.mrb[0].mxu0
      %v747 = vadd.f32 %v426, %v746
      %v748 = vpop.f32.mrb[0].mxu0
      %749 = vdwg.mxu0
      %v750 = vadd.f32 %v592, 3.0
      %v751 = vadd.f32 %v597, 3.0
      %v752 = vadd.f32 %v602, 3.0
      %v753 = vadd.f32 %v607, 3.0
      %v754 = vadd.f32 %v612, 3.0
      %v755 = vadd.f32 %v617, 3.0
      %v756 = vadd.f32 %v622, 3.0
      %v757 = vadd.f32 %v627, 3.0
      %v758 = vadd.f32 %v632, 3.0
      %v759 = vadd.f32 %v637, 3.0
      %v760 = vadd.f32 %v642, 3.0
      %v761 = vadd.f32 %v647, 3.0
      %v762 = vadd.f32 %v652, 3.0
      %v763 = vadd.f32 %v657, 3.0
      %v764 = vadd.f32 %v662, 3.0
      %v765 = vadd.f32 %v667, 3.0
      %v766 = vadd.f32 %v672, 3.0
      %v767 = vadd.f32 %v677, 3.0
      %v768 = vadd.f32 %v682, 3.0
      %v769 = vadd.f32 %v687, 3.0
      %v770 = vadd.f32 %v692, 3.0
      %v771 = vadd.f32 %v697, 3.0
      %v772 = vadd.f32 %v702, 3.0
      %v773 = vadd.f32 %v707, 3.0
      %v774 = vadd.f32 %v712, 3.0
      %v775 = vadd.f32 %v717, 3.0
      %v776 = vadd.f32 %v722, 3.0
      %v777 = vadd.f32 %v727, 3.0
      %v778 = vadd.f32 %v732, 3.0
      %v779 = vadd.f32 %v737, 3.0
      %v780 = vadd.f32 %v742, 3.0
      %v781 = vadd.f32 %v747, 3.0
      %v782 = vmax.f32 %v750, 0.0
      %v783 = vmax.f32 %v751, 0.0
      %v784 = vmax.f32 %v752, 0.0
      %v785 = vmax.f32 %v753, 0.0
      %v786 = vmax.f32 %v754, 0.0
      %v787 = vmax.f32 %v755, 0.0
      %v788 = vmax.f32 %v756, 0.0
      %v789 = vmax.f32 %v757, 0.0
      %v790 = vmax.f32 %v758, 0.0
      %v791 = vmax.f32 %v759, 0.0
      %v792 = vmax.f32 %v760, 0.0
      %v793 = vmax.f32 %v761, 0.0
      %v794 = vmax.f32 %v762, 0.0
      %v795 = vmax.f32 %v763, 0.0
      %v796 = vmax.f32 %v764, 0.0
      %v797 = vmax.f32 %v765, 0.0
      %v798 = vmax.f32 %v766, 0.0
      %v799 = vmax.f32 %v767, 0.0
      %v800 = vmax.f32 %v768, 0.0
      %v801 = vmax.f32 %v769, 0.0
      %v802 = vmax.f32 %v770, 0.0
      %v803 = vmax.f32 %v771, 0.0
      %v804 = vmax.f32 %v772, 0.0
      %v805 = vmax.f32 %v773, 0.0
      %v806 = vmax.f32 %v774, 0.0
      %v807 = vmax.f32 %v775, 0.0
      %v808 = vmax.f32 %v776, 0.0
      %v809 = vmax.f32 %v777, 0.0
      %v810 = vmax.f32 %v778, 0.0
      %v811 = vmax.f32 %v779, 0.0
      %v812 = vmax.f32 %v780, 0.0
      %v813 = vmax.f32 %v781, 0.0
      %v814 = vmin.f32 %v782, 6.0
      %v815 = vmin.f32 %v783, 6.0
      %v816 = vmin.f32 %v784, 6.0
      %v817 = vmin.f32 %v785, 6.0
      %v818 = vmin.f32 %v786, 6.0
      %v819 = vmin.f32 %v787, 6.0
      %v820 = vmin.f32 %v788, 6.0
      %v821 = vmin.f32 %v789, 6.0
      %v822 = vmin.f32 %v790, 6.0
      %v823 = vmin.f32 %v791, 6.0
      %v824 = vmin.f32 %v792, 6.0
      %v825 = vmin.f32 %v793, 6.0
      %v826 = vmin.f32 %v794, 6.0
      %v827 = vmin.f32 %v795, 6.0
      %v828 = vmin.f32 %v796, 6.0
      %v829 = vmin.f32 %v797, 6.0
      %v830 = vmin.f32 %v798, 6.0
      %v831 = vmin.f32 %v799, 6.0
      %v832 = vmin.f32 %v800, 6.0
      %v833 = vmin.f32 %v801, 6.0
      %v834 = vmin.f32 %v802, 6.0
      %v835 = vmin.f32 %v803, 6.0
      %v836 = vmin.f32 %v804, 6.0
      %v837 = vmin.f32 %v805, 6.0
      %v838 = vmin.f32 %v806, 6.0
      %v839 = vmin.f32 %v807, 6.0
      %v840 = vmin.f32 %v808, 6.0
      %v841 = vmin.f32 %v809, 6.0
      %v842 = vmin.f32 %v810, 6.0
      %v843 = vmin.f32 %v811, 6.0
      %v844 = vmin.f32 %v812, 6.0
      %v845 = vmin.f32 %v813, 6.0
      %v846 = vmul.f32 %v592, %v814
      %v847 = vmul.f32 %v597, %v815
      %v848 = vmul.f32 %v602, %v816
      %v849 = vmul.f32 %v607, %v817
      %v850 = vmul.f32 %v612, %v818
      %v851 = vmul.f32 %v617, %v819
      %v852 = vmul.f32 %v622, %v820
      %v853 = vmul.f32 %v627, %v821
      %v854 = vmul.f32 %v632, %v822
      %v855 = vmul.f32 %v637, %v823
      %v856 = vmul.f32 %v642, %v824
      %v857 = vmul.f32 %v647, %v825
      %v858 = vmul.f32 %v652, %v826
      %v859 = vmul.f32 %v657, %v827
      %v860 = vmul.f32 %v662, %v828
      %v861 = vmul.f32 %v667, %v829
      %v862 = vmul.f32 %v672, %v830
      %v863 = vmul.f32 %v677, %v831
      %v864 = vmul.f32 %v682, %v832
      %v865 = vmul.f32 %v687, %v833
      %v866 = vmul.f32 %v692, %v834
      %v867 = vmul.f32 %v697, %v835
      %v868 = vmul.f32 %v702, %v836
      %v869 = vmul.f32 %v707, %v837
      %v870 = vmul.f32 %v712, %v838
      %v871 = vmul.f32 %v717, %v839
      %v872 = vmul.f32 %v722, %v840
      %v873 = vmul.f32 %v727, %v841
      %v874 = vmul.f32 %v732, %v842
      %v875 = vmul.f32 %v737, %v843
      %v876 = vmul.f32 %v742, %v844
      %v877 = vmul.f32 %v747, %v845
      %v878 = vmul.f32 %v846, 0.16666667
      %v879 = vmul.f32 %v847, 0.16666667
      %v880 = vmul.f32 %v848, 0.16666667
      %v881 = vmul.f32 %v849, 0.16666667
      %v882 = vmul.f32 %v850, 0.16666667
      %v883 = vmul.f32 %v851, 0.16666667
      %v884 = vmul.f32 %v852, 0.16666667
      %v885 = vmul.f32 %v853, 0.16666667
      %v886 = vmul.f32 %v854, 0.16666667
      %v887 = vmul.f32 %v855, 0.16666667
      %v888 = vmul.f32 %v856, 0.16666667
      %v889 = vmul.f32 %v857, 0.16666667
      %v890 = vmul.f32 %v858, 0.16666667
      %v891 = vmul.f32 %v859, 0.16666667
      %v892 = vmul.f32 %v860, 0.16666667
      %v893 = vmul.f32 %v861, 0.16666667
      %v894 = vmul.f32 %v862, 0.16666667
      %v895 = vmul.f32 %v863, 0.16666667
      %v896 = vmul.f32 %v864, 0.16666667
      %v897 = vmul.f32 %v865, 0.16666667
      %v898 = vmul.f32 %v866, 0.16666667
      %v899 = vmul.f32 %v867, 0.16666667
      %v900 = vmul.f32 %v868, 0.16666667
      %v901 = vmul.f32 %v869, 0.16666667
      %v902 = vmul.f32 %v870, 0.16666667
      %v903 = vmul.f32 %v871, 0.16666667
      %v904 = vmul.f32 %v872, 0.16666667
      %v905 = vmul.f32 %v873, 0.16666667
      %v906 = vmul.f32 %v874, 0.16666667
      %v907 = vmul.f32 %v875, 0.16666667
      %v908 = vmul.f32 %v876, 0.16666667
      %v909 = vmul.f32 %v877, 0.16666667
      %vm910 = vcmask 261120
      %911 = vst.msk [vmem:[#allocation2] sm:$0xff] %vm910, 0.0
      %912 = vst.msk [vmem:[#allocation2 + $0x8] sm:$0xff] %vm910, 0.0
      %vm913 = vcmask 254976
      %914 = vst.msk [vmem:[#allocation2 + $0x10] sm:$0x3] %vm913, 0.0
      %915 = vst.msk [vmem:[#allocation2 + $0x18] sm:$0xff] %vm910, 0.0
      %916 = vst.msk [vmem:[#allocation2 + $0x20] sm:$0xff] %vm910, 0.0
      %917 = vst.msk [vmem:[#allocation2 + $0x28] sm:$0x3] %vm913, 0.0
      %918 = vst.msk [vmem:[#allocation2 + $0x30] sm:$0xff] %vm910, 0.0
      %919 = vst.msk [vmem:[#allocation2 + $0x38] sm:$0xff] %vm910, 0.0
      %920 = vst.msk [vmem:[#allocation2 + $0x40] sm:$0x3] %vm913, 0.0
      %921 = vst.msk [vmem:[#allocation2 + $0x48] sm:$0xff] %vm910, 0.0
      %922 = vst.msk [vmem:[#allocation2 + $0x50] sm:$0xff] %vm910, 0.0
      %923 = vst.msk [vmem:[#allocation2 + $0x58] sm:$0x3] %vm913, 0.0
      %924 = vst.msk [vmem:[#allocation2 + $0x60] sm:$0xff] %vm910, 0.0
      %925 = vst.msk [vmem:[#allocation2 + $0x68] sm:$0xff] %vm910, 0.0
      %926 = vst.msk [vmem:[#allocation2 + $0x70] sm:$0x3] %vm913, 0.0
      %927 = vst.msk [vmem:[#allocation2 + $0x78] sm:$0xff] %vm910, 0.0
      %928 = vst.msk [vmem:[#allocation2 + $0x80] sm:$0xff] %vm910, 0.0
      %929 = vst.msk [vmem:[#allocation2 + $0x88] sm:$0x3] %vm913, 0.0
      %930 = vst.msk [vmem:[#allocation2 + $0x90] sm:$0xff] %vm910, 0.0
      %931 = vst.msk [vmem:[#allocation2 + $0x98] sm:$0xff] %vm910, 0.0
      %932 = vst.msk [vmem:[#allocation2 + $0xa0] sm:$0x3] %vm913, 0.0
      %933 = vst.msk [vmem:[#allocation2 + $0xa8] sm:$0xff] %vm910, 0.0
      %934 = vst.msk [vmem:[#allocation2 + $0xb0] sm:$0xff] %vm910, 0.0
      %935 = vst.msk [vmem:[#allocation2 + $0xb8] sm:$0x3] %vm913, 0.0
      %936 = vst.msk [vmem:[#allocation2 + $0xc0] sm:$0xff] %vm910, 0.0
      %937 = vst.msk [vmem:[#allocation2 + $0xc8] sm:$0xff] %vm910, 0.0
      %938 = vst.msk [vmem:[#allocation2 + $0xd0] sm:$0x3] %vm913, 0.0
      %939 = vst.msk [vmem:[#allocation2 + $0xd8] sm:$0xff] %vm910, 0.0
      %940 = vst.msk [vmem:[#allocation2 + $0xe0] sm:$0xff] %vm910, 0.0
      %941 = vst.msk [vmem:[#allocation2 + $0xe8] sm:$0x3] %vm913, 0.0
      %942 = vst.msk [vmem:[#allocation2 + $0xf0] sm:$0xff] %vm910, 0.0
      %943 = vst.msk [vmem:[#allocation2 + $0xf8] sm:$0xff] %vm910, 0.0
      %944 = vst.msk [vmem:[#allocation2 + $0x100] sm:$0x3] %vm913, 0.0
      %945 = vst.msk [vmem:[#allocation2 + $0x108] sm:$0xff] %vm910, 0.0
      %946 = vst.msk [vmem:[#allocation2 + $0x110] sm:$0xff] %vm910, 0.0
      %947 = vst.msk [vmem:[#allocation2 + $0x118] sm:$0x3] %vm913, 0.0
      %948 = vst.msk [vmem:[#allocation2 + $0x120] sm:$0xff] %vm910, 0.0
      %949 = vst.msk [vmem:[#allocation2 + $0x128] sm:$0xff] %vm910, 0.0
      %950 = vst.msk [vmem:[#allocation2 + $0x130] sm:$0x3] %vm913, 0.0
      %951 = vst.msk [vmem:[#allocation2 + $0x138] sm:$0xff] %vm910, 0.0
      %952 = vst.msk [vmem:[#allocation2 + $0x140] sm:$0xff] %vm910, 0.0
      %953 = vst.msk [vmem:[#allocation2 + $0x148] sm:$0x3] %vm913, 0.0
      %954 = vst.msk [vmem:[#allocation2 + $0x150] sm:$0xff] %vm910, 0.0
      %955 = vst.msk [vmem:[#allocation2 + $0x158] sm:$0xff] %vm910, 0.0
      %956 = vst.msk [vmem:[#allocation2 + $0x160] sm:$0x3] %vm913, 0.0
      %957 = vst.msk [vmem:[#allocation2 + $0x168] sm:$0xff] %vm910, 0.0
      %958 = vst.msk [vmem:[#allocation2 + $0x170] sm:$0xff] %vm910, 0.0
      %959 = vst.msk [vmem:[#allocation2 + $0x178] sm:$0x3] %vm913, 0.0
      %960 = vst.msk [vmem:[#allocation2 + $0x180] sm:$0xff] %vm910, 0.0
      %961 = vst.msk [vmem:[#allocation2 + $0x188] sm:$0xff] %vm910, 0.0
      %962 = vst.msk [vmem:[#allocation2 + $0x190] sm:$0x3] %vm913, 0.0
      %963 = vst.msk [vmem:[#allocation2 + $0x198] sm:$0xff] %vm910, 0.0
      %964 = vst.msk [vmem:[#allocation2 + $0x1a0] sm:$0xff] %vm910, 0.0
      %965 = vst.msk [vmem:[#allocation2 + $0x1a8] sm:$0x3] %vm913, 0.0
      %s966 = scalar_lea.vmem [#allocation2], 24
      %967 = vst.msk [vmem:[%s966 + $0x1] sm:$0xff] %vm910, %v878
      %968 = vst.msk [vmem:[%s966 + $0x9] sm:$0xff] %vm910, %v879
      %969 = vst.msk [vmem:[%s966 + $0x19] sm:$0xff] %vm910, %v880
      %970 = vst.msk [vmem:[%s966 + $0x21] sm:$0xff] %vm910, %v881
      %971 = vst.msk [vmem:[%s966 + $0x31] sm:$0xff] %vm910, %v882
      %972 = vst.msk [vmem:[%s966 + $0x39] sm:$0xff] %vm910, %v883
      %973 = vst.msk [vmem:[%s966 + $0x49] sm:$0xff] %vm910, %v884
      %974 = vst.msk [vmem:[%s966 + $0x51] sm:$0xff] %vm910, %v885
      %975 = vst.msk [vmem:[%s966 + $0x61] sm:$0xff] %vm910, %v886
      %976 = vst.msk [vmem:[%s966 + $0x69] sm:$0xff] %vm910, %v887
      %977 = vst.msk [vmem:[%s966 + $0x79] sm:$0xff] %vm910, %v888
      %978 = vst.msk [vmem:[%s966 + $0x81] sm:$0xff] %vm910, %v889
      %979 = vst.msk [vmem:[%s966 + $0x91] sm:$0xff] %vm910, %v890
      %980 = vst.msk [vmem:[%s966 + $0x99] sm:$0xff] %vm910, %v891
      %981 = vst.msk [vmem:[%s966 + $0xa9] sm:$0xff] %vm910, %v892
      %982 = vst.msk [vmem:[%s966 + $0xb1] sm:$0xff] %vm910, %v893
      %983 = vst.msk [vmem:[%s966 + $0xc1] sm:$0xff] %vm910, %v894
      %984 = vst.msk [vmem:[%s966 + $0xc9] sm:$0xff] %vm910, %v895
      %985 = vst.msk [vmem:[%s966 + $0xd9] sm:$0xff] %vm910, %v896
      %986 = vst.msk [vmem:[%s966 + $0xe1] sm:$0xff] %vm910, %v897
      %987 = vst.msk [vmem:[%s966 + $0xf1] sm:$0xff] %vm910, %v898
      %988 = vst.msk [vmem:[%s966 + $0xf9] sm:$0xff] %vm910, %v899
      %989 = vst.msk [vmem:[%s966 + $0x109] sm:$0xff] %vm910, %v900
      %990 = vst.msk [vmem:[%s966 + $0x111] sm:$0xff] %vm910, %v901
      %991 = vst.msk [vmem:[%s966 + $0x121] sm:$0xff] %vm910, %v902
      %992 = vst.msk [vmem:[%s966 + $0x129] sm:$0xff] %vm910, %v903
      %993 = vst.msk [vmem:[%s966 + $0x139] sm:$0xff] %vm910, %v904
      %994 = vst.msk [vmem:[%s966 + $0x141] sm:$0xff] %vm910, %v905
      %995 = vst.msk [vmem:[%s966 + $0x151] sm:$0xff] %vm910, %v906
      %996 = vst.msk [vmem:[%s966 + $0x159] sm:$0xff] %vm910, %v907
      %997 = vst.msk [vmem:[%s966 + $0x169] sm:$0xff] %vm910, %v908
      %998 = vst.msk [vmem:[%s966 + $0x171] sm:$0xff] %vm910, %v909
      %v999 = vld [vmem:[#allocation2] sm:$0xff]
      %v1000 = vld [vmem:[#allocation2 + $0x8] sm:$0xff]
      %v1001 = vld [vmem:[#allocation2 + $0x18] sm:$0xff]
      %v1002 = vld [vmem:[#allocation2 + $0x20] sm:$0xff]
      %v1003 = vld [vmem:[#allocation2 + $0x30] sm:$0xff]
      %v1004 = vld [vmem:[#allocation2 + $0x38] sm:$0xff]
      %v1005 = vld [vmem:[#allocation2 + $0x48] sm:$0xff]
      %v1006 = vld [vmem:[#allocation2 + $0x50] sm:$0xff]
      %v1007 = vld [vmem:[#allocation2 + $0x60] sm:$0xff]
      %v1008 = vld [vmem:[#allocation2 + $0x68] sm:$0xff]
      %v1009 = vld [vmem:[#allocation2 + $0x78] sm:$0xff]
      %v1010 = vld [vmem:[#allocation2 + $0x80] sm:$0xff]
      %v1011 = vld [vmem:[#allocation2 + $0x90] sm:$0xff]
      %v1012 = vld [vmem:[#allocation2 + $0x98] sm:$0xff]
      %v1013 = vld [vmem:[#allocation2 + $0xa8] sm:$0xff]
      %v1014 = vld [vmem:[#allocation2 + $0xb0] sm:$0xff]
      %v1015 = vld [vmem:[#allocation2 + $0xc0] sm:$0xff]
      %v1016 = vld [vmem:[#allocation2 + $0xc8] sm:$0xff]
      %v1017 = vld [vmem:[#allocation2 + $0xd8] sm:$0xff]
      %v1018 = vld [vmem:[#allocation2 + $0xe0] sm:$0xff]
      %v1019 = vld [vmem:[#allocation2 + $0xf0] sm:$0xff]
      %v1020 = vld [vmem:[#allocation2 + $0xf8] sm:$0xff]
      %v1021 = vld [vmem:[#allocation2 + $0x108] sm:$0xff]
      %v1022 = vld [vmem:[#allocation2 + $0x110] sm:$0xff]
      %v1023 = vld [vmem:[#allocation2 + $0x120] sm:$0xff]
      %v1024 = vld [vmem:[#allocation2 + $0x128] sm:$0xff]
      %v1025 = vld [vmem:[#allocation2 + $0x138] sm:$0xff]
      %v1026 = vld [vmem:[#allocation2 + $0x140] sm:$0xff]
      %v1027 = vld [vmem:[#allocation2 + $0x150] sm:$0xff]
      %v1028 = vld [vmem:[#allocation2 + $0x158] sm:$0xff]
      %v1029 = vld [vmem:[#allocation2 + $0x168] sm:$0xff]
      %v1030 = vld [vmem:[#allocation2 + $0x170] sm:$0xff]
      %v1031 = vld [vmem:[%s3] sm:$0x1]
      %v1032 = vlaneseq
      %v1033 = vshrl.u32 %v1032, 7
      %v1034 = vsub.s32 0, %v1033
      %v1035 = vrot.slane %v1031, %v1034
      %v1036 = vmul.f32 %v999, %v1035
      %v1037 = vmul.f32 %v1000, %v1035
      %v1038 = vmul.f32 %v1001, %v1035
      %v1039 = vmul.f32 %v1002, %v1035
      %v1040 = vmul.f32 %v1003, %v1035
      %v1041 = vmul.f32 %v1004, %v1035
      %v1042 = vmul.f32 %v1005, %v1035
      %v1043 = vmul.f32 %v1006, %v1035
      %v1044 = vmul.f32 %v1007, %v1035
      %v1045 = vmul.f32 %v1008, %v1035
      %v1046 = vmul.f32 %v1009, %v1035
      %v1047 = vmul.f32 %v1010, %v1035
      %v1048 = vmul.f32 %v1011, %v1035
      %v1049 = vmul.f32 %v1012, %v1035
      %v1050 = vmul.f32 %v1013, %v1035
      %v1051 = vmul.f32 %v1014, %v1035
      %v1052 = vmul.f32 %v1015, %v1035
      %v1053 = vmul.f32 %v1016, %v1035
      %v1054 = vmul.f32 %v1017, %v1035
      %v1055 = vmul.f32 %v1018, %v1035
      %v1056 = vmul.f32 %v1019, %v1035
      %v1057 = vmul.f32 %v1020, %v1035
      %v1058 = vmul.f32 %v1021, %v1035
      %v1059 = vmul.f32 %v1022, %v1035
      %v1060 = vmul.f32 %v1023, %v1035
      %v1061 = vmul.f32 %v1024, %v1035
      %v1062 = vmul.f32 %v1025, %v1035
      %v1063 = vmul.f32 %v1026, %v1035
      %v1064 = vmul.f32 %v1027, %v1035
      %v1065 = vmul.f32 %v1028, %v1035
      %v1066 = vmul.f32 %v1029, %v1035
      %v1067 = vmul.f32 %v1030, %v1035
      %v1068 = vadd.f32 %v1036, 0.0
      %v1069 = vadd.f32 %v1037, 0.0
      %v1070 = vadd.f32 %v1038, 0.0
      %v1071 = vadd.f32 %v1039, 0.0
      %v1072 = vadd.f32 %v1040, 0.0
      %v1073 = vadd.f32 %v1041, 0.0
      %v1074 = vadd.f32 %v1042, 0.0
      %v1075 = vadd.f32 %v1043, 0.0
      %v1076 = vadd.f32 %v1044, 0.0
      %v1077 = vadd.f32 %v1045, 0.0
      %v1078 = vadd.f32 %v1046, 0.0
      %v1079 = vadd.f32 %v1047, 0.0
      %v1080 = vadd.f32 %v1048, 0.0
      %v1081 = vadd.f32 %v1049, 0.0
      %v1082 = vadd.f32 %v1050, 0.0
      %v1083 = vadd.f32 %v1051, 0.0
      %v1084 = vadd.f32 %v1052, 0.0
      %v1085 = vadd.f32 %v1053, 0.0
      %v1086 = vadd.f32 %v1054, 0.0
      %v1087 = vadd.f32 %v1055, 0.0
      %v1088 = vadd.f32 %v1056, 0.0
      %v1089 = vadd.f32 %v1057, 0.0
      %v1090 = vadd.f32 %v1058, 0.0
      %v1091 = vadd.f32 %v1059, 0.0
      %v1092 = vadd.f32 %v1060, 0.0
      %v1093 = vadd.f32 %v1061, 0.0
      %v1094 = vadd.f32 %v1062, 0.0
      %v1095 = vadd.f32 %v1063, 0.0
      %v1096 = vadd.f32 %v1064, 0.0
      %v1097 = vadd.f32 %v1065, 0.0
      %v1098 = vadd.f32 %v1066, 0.0
      %v1099 = vadd.f32 %v1067, 0.0
      %v1100 = vld [vmem:[#allocation2 + $0x1] sm:$0xff]
      %v1101 = vld [vmem:[#allocation2 + $0x9] sm:$0xff]
      %v1102 = vld [vmem:[#allocation2 + $0x19] sm:$0xff]
      %v1103 = vld [vmem:[#allocation2 + $0x21] sm:$0xff]
      %v1104 = vld [vmem:[#allocation2 + $0x31] sm:$0xff]
      %v1105 = vld [vmem:[#allocation2 + $0x39] sm:$0xff]
      %v1106 = vld [vmem:[#allocation2 + $0x49] sm:$0xff]
      %v1107 = vld [vmem:[#allocation2 + $0x51] sm:$0xff]
      %v1108 = vld [vmem:[#allocation2 + $0x61] sm:$0xff]
      %v1109 = vld [vmem:[#allocation2 + $0x69] sm:$0xff]
      %v1110 = vld [vmem:[#allocation2 + $0x79] sm:$0xff]
      %v1111 = vld [vmem:[#allocation2 + $0x81] sm:$0xff]
      %v1112 = vld [vmem:[#allocation2 + $0x91] sm:$0xff]
      %v1113 = vld [vmem:[#allocation2 + $0x99] sm:$0xff]
      %v1114 = vld [vmem:[#allocation2 + $0xa9] sm:$0xff]
      %v1115 = vld [vmem:[#allocation2 + $0xb1] sm:$0xff]
      %v1116 = vld [vmem:[#allocation2 + $0xc1] sm:$0xff]
      %v1117 = vld [vmem:[#allocation2 + $0xc9] sm:$0xff]
      %v1118 = vld [vmem:[#allocation2 + $0xd9] sm:$0xff]
      %v1119 = vld [vmem:[#allocation2 + $0xe1] sm:$0xff]
      %v1120 = vld [vmem:[#allocation2 + $0xf1] sm:$0xff]
      %v1121 = vld [vmem:[#allocation2 + $0xf9] sm:$0xff]
      %v1122 = vld [vmem:[#allocation2 + $0x109] sm:$0xff]
      %v1123 = vld [vmem:[#allocation2 + $0x111] sm:$0xff]
      %v1124 = vld [vmem:[#allocation2 + $0x121] sm:$0xff]
      %v1125 = vld [vmem:[#allocation2 + $0x129] sm:$0xff]
      %v1126 = vld [vmem:[#allocation2 + $0x139] sm:$0xff]
      %v1127 = vld [vmem:[#allocation2 + $0x141] sm:$0xff]
      %v1128 = vld [vmem:[#allocation2 + $0x151] sm:$0xff]
      %v1129 = vld [vmem:[#allocation2 + $0x159] sm:$0xff]
      %v1130 = vld [vmem:[#allocation2 + $0x169] sm:$0xff]
      %v1131 = vld [vmem:[#allocation2 + $0x171] sm:$0xff]
      %v1132 = vld [vmem:[%s3 + $0x1] sm:$0x1]
      %v1133 = vlaneseq
      %v1134 = vshrl.u32 %v1133, 7
      %v1135 = vsub.s32 0, %v1134
      %v1136 = vrot.slane %v1132, %v1135
      %v1137 = vmul.f32 %v1100, %v1136
      %v1138 = vmul.f32 %v1101, %v1136
      %v1139 = vmul.f32 %v1102, %v1136
      %v1140 = vmul.f32 %v1103, %v1136
      %v1141 = vmul.f32 %v1104, %v1136
      %v1142 = vmul.f32 %v1105, %v1136
      %v1143 = vmul.f32 %v1106, %v1136
      %v1144 = vmul.f32 %v1107, %v1136
      %v1145 = vmul.f32 %v1108, %v1136
      %v1146 = vmul.f32 %v1109, %v1136
      %v1147 = vmul.f32 %v1110, %v1136
      %v1148 = vmul.f32 %v1111, %v1136
      %v1149 = vmul.f32 %v1112, %v1136
      %v1150 = vmul.f32 %v1113, %v1136
      %v1151 = vmul.f32 %v1114, %v1136
      %v1152 = vmul.f32 %v1115, %v1136
      %v1153 = vmul.f32 %v1116, %v1136
      %v1154 = vmul.f32 %v1117, %v1136
      %v1155 = vmul.f32 %v1118, %v1136
      %v1156 = vmul.f32 %v1119, %v1136
      %v1157 = vmul.f32 %v1120, %v1136
      %v1158 = vmul.f32 %v1121, %v1136
      %v1159 = vmul.f32 %v1122, %v1136
      %v1160 = vmul.f32 %v1123, %v1136
      %v1161 = vmul.f32 %v1124, %v1136
      %v1162 = vmul.f32 %v1125, %v1136
      %v1163 = vmul.f32 %v1126, %v1136
      %v1164 = vmul.f32 %v1127, %v1136
      %v1165 = vmul.f32 %v1128, %v1136
      %v1166 = vmul.f32 %v1129, %v1136
      %v1167 = vmul.f32 %v1130, %v1136
      %v1168 = vmul.f32 %v1131, %v1136
      %v1169 = vadd.f32 %v1068, %v1137
      %v1170 = vadd.f32 %v1069, %v1138
      %v1171 = vadd.f32 %v1070, %v1139
      %v1172 = vadd.f32 %v1071, %v1140
      %v1173 = vadd.f32 %v1072, %v1141
      %v1174 = vadd.f32 %v1073, %v1142
      %v1175 = vadd.f32 %v1074, %v1143
      %v1176 = vadd.f32 %v1075, %v1144
      %v1177 = vadd.f32 %v1076, %v1145
      %v1178 = vadd.f32 %v1077, %v1146
      %v1179 = vadd.f32 %v1078, %v1147
      %v1180 = vadd.f32 %v1079, %v1148
      %v1181 = vadd.f32 %v1080, %v1149
      %v1182 = vadd.f32 %v1081, %v1150
      %v1183 = vadd.f32 %v1082, %v1151
      %v1184 = vadd.f32 %v1083, %v1152
      %v1185 = vadd.f32 %v1084, %v1153
      %v1186 = vadd.f32 %v1085, %v1154
      %v1187 = vadd.f32 %v1086, %v1155
      %v1188 = vadd.f32 %v1087, %v1156
      %v1189 = vadd.f32 %v1088, %v1157
      %v1190 = vadd.f32 %v1089, %v1158
      %v1191 = vadd.f32 %v1090, %v1159
      %v1192 = vadd.f32 %v1091, %v1160
      %v1193 = vadd.f32 %v1092, %v1161
      %v1194 = vadd.f32 %v1093, %v1162
      %v1195 = vadd.f32 %v1094, %v1163
      %v1196 = vadd.f32 %v1095, %v1164
      %v1197 = vadd.f32 %v1096, %v1165
      %v1198 = vadd.f32 %v1097, %v1166
      %v1199 = vadd.f32 %v1098, %v1167
      %v1200 = vadd.f32 %v1099, %v1168
      %v1201 = vld [vmem:[#allocation2 + $0x2] sm:$0xff]
      %v1202 = vld [vmem:[#allocation2 + $0xa] sm:$0xff]
      %v1203 = vld [vmem:[#allocation2 + $0x1a] sm:$0xff]
      %v1204 = vld [vmem:[#allocation2 + $0x22] sm:$0xff]
      %v1205 = vld [vmem:[#allocation2 + $0x32] sm:$0xff]
      %v1206 = vld [vmem:[#allocation2 + $0x3a] sm:$0xff]
      %v1207 = vld [vmem:[#allocation2 + $0x4a] sm:$0xff]
      %v1208 = vld [vmem:[#allocation2 + $0x52] sm:$0xff]
      %v1209 = vld [vmem:[#allocation2 + $0x62] sm:$0xff]
      %v1210 = vld [vmem:[#allocation2 + $0x6a] sm:$0xff]
      %v1211 = vld [vmem:[#allocation2 + $0x7a] sm:$0xff]
      %v1212 = vld [vmem:[#allocation2 + $0x82] sm:$0xff]
      %v1213 = vld [vmem:[#allocation2 + $0x92] sm:$0xff]
      %v1214 = vld [vmem:[#allocation2 + $0x9a] sm:$0xff]
      %v1215 = vld [vmem:[#allocation2 + $0xaa] sm:$0xff]
      %v1216 = vld [vmem:[#allocation2 + $0xb2] sm:$0xff]
      %v1217 = vld [vmem:[#allocation2 + $0xc2] sm:$0xff]
      %v1218 = vld [vmem:[#allocation2 + $0xca] sm:$0xff]
      %v1219 = vld [vmem:[#allocation2 + $0xda] sm:$0xff]
      %v1220 = vld [vmem:[#allocation2 + $0xe2] sm:$0xff]
      %v1221 = vld [vmem:[#allocation2 + $0xf2] sm:$0xff]
      %v1222 = vld [vmem:[#allocation2 + $0xfa] sm:$0xff]
      %v1223 = vld [vmem:[#allocation2 + $0x10a] sm:$0xff]
      %v1224 = vld [vmem:[#allocation2 + $0x112] sm:$0xff]
      %v1225 = vld [vmem:[#allocation2 + $0x122] sm:$0xff]
      %v1226 = vld [vmem:[#allocation2 + $0x12a] sm:$0xff]
      %v1227 = vld [vmem:[#allocation2 + $0x13a] sm:$0xff]
      %v1228 = vld [vmem:[#allocation2 + $0x142] sm:$0xff]
      %v1229 = vld [vmem:[#allocation2 + $0x152] sm:$0xff]
      %v1230 = vld [vmem:[#allocation2 + $0x15a] sm:$0xff]
      %v1231 = vld [vmem:[#allocation2 + $0x16a] sm:$0xff]
      %v1232 = vld [vmem:[#allocation2 + $0x172] sm:$0xff]
      %v1233 = vld [vmem:[%s3 + $0x2] sm:$0x1]
      %v1234 = vlaneseq
      %v1235 = vshrl.u32 %v1234, 7
      %v1236 = vsub.s32 0, %v1235
      %v1237 = vrot.slane %v1233, %v1236
      %v1238 = vmul.f32 %v1201, %v1237
      %v1239 = vmul.f32 %v1202, %v1237
      %v1240 = vmul.f32 %v1203, %v1237
      %v1241 = vmul.f32 %v1204, %v1237
      %v1242 = vmul.f32 %v1205, %v1237
      %v1243 = vmul.f32 %v1206, %v1237
      %v1244 = vmul.f32 %v1207, %v1237
      %v1245 = vmul.f32 %v1208, %v1237
      %v1246 = vmul.f32 %v1209, %v1237
      %v1247 = vmul.f32 %v1210, %v1237
      %v1248 = vmul.f32 %v1211, %v1237
      %v1249 = vmul.f32 %v1212, %v1237
      %v1250 = vmul.f32 %v1213, %v1237
      %v1251 = vmul.f32 %v1214, %v1237
      %v1252 = vmul.f32 %v1215, %v1237
      %v1253 = vmul.f32 %v1216, %v1237
      %v1254 = vmul.f32 %v1217, %v1237
      %v1255 = vmul.f32 %v1218, %v1237
      %v1256 = vmul.f32 %v1219, %v1237
      %v1257 = vmul.f32 %v1220, %v1237
      %v1258 = vmul.f32 %v1221, %v1237
      %v1259 = vmul.f32 %v1222, %v1237
      %v1260 = vmul.f32 %v1223, %v1237
      %v1261 = vmul.f32 %v1224, %v1237
      %v1262 = vmul.f32 %v1225, %v1237
      %v1263 = vmul.f32 %v1226, %v1237
      %v1264 = vmul.f32 %v1227, %v1237
      %v1265 = vmul.f32 %v1228, %v1237
      %v1266 = vmul.f32 %v1229, %v1237
      %v1267 = vmul.f32 %v1230, %v1237
      %v1268 = vmul.f32 %v1231, %v1237
      %v1269 = vmul.f32 %v1232, %v1237
      %v1270 = vadd.f32 %v1169, %v1238
      %v1271 = vadd.f32 %v1170, %v1239
      %v1272 = vadd.f32 %v1171, %v1240
      %v1273 = vadd.f32 %v1172, %v1241
      %v1274 = vadd.f32 %v1173, %v1242
      %v1275 = vadd.f32 %v1174, %v1243
      %v1276 = vadd.f32 %v1175, %v1244
      %v1277 = vadd.f32 %v1176, %v1245
      %v1278 = vadd.f32 %v1177, %v1246
      %v1279 = vadd.f32 %v1178, %v1247
      %v1280 = vadd.f32 %v1179, %v1248
      %v1281 = vadd.f32 %v1180, %v1249
      %v1282 = vadd.f32 %v1181, %v1250
      %v1283 = vadd.f32 %v1182, %v1251
      %v1284 = vadd.f32 %v1183, %v1252
      %v1285 = vadd.f32 %v1184, %v1253
      %v1286 = vadd.f32 %v1185, %v1254
      %v1287 = vadd.f32 %v1186, %v1255
      %v1288 = vadd.f32 %v1187, %v1256
      %v1289 = vadd.f32 %v1188, %v1257
      %v1290 = vadd.f32 %v1189, %v1258
      %v1291 = vadd.f32 %v1190, %v1259
      %v1292 = vadd.f32 %v1191, %v1260
      %v1293 = vadd.f32 %v1192, %v1261
      %v1294 = vadd.f32 %v1193, %v1262
      %v1295 = vadd.f32 %v1194, %v1263
      %v1296 = vadd.f32 %v1195, %v1264
      %v1297 = vadd.f32 %v1196, %v1265
      %v1298 = vadd.f32 %v1197, %v1266
      %v1299 = vadd.f32 %v1198, %v1267
      %v1300 = vadd.f32 %v1199, %v1268
      %v1301 = vadd.f32 %v1200, %v1269
      %v1302 = vld [vmem:[%s966] sm:$0xff]
      %v1303 = vld [vmem:[%s966 + $0x8] sm:$0xff]
      %v1304 = vld [vmem:[%s966 + $0x18] sm:$0xff]
      %v1305 = vld [vmem:[%s966 + $0x20] sm:$0xff]
      %v1306 = vld [vmem:[%s966 + $0x30] sm:$0xff]
      %v1307 = vld [vmem:[%s966 + $0x38] sm:$0xff]
      %v1308 = vld [vmem:[%s966 + $0x48] sm:$0xff]
      %v1309 = vld [vmem:[%s966 + $0x50] sm:$0xff]
      %v1310 = vld [vmem:[%s966 + $0x60] sm:$0xff]
      %v1311 = vld [vmem:[%s966 + $0x68] sm:$0xff]
      %v1312 = vld [vmem:[%s966 + $0x78] sm:$0xff]
      %v1313 = vld [vmem:[%s966 + $0x80] sm:$0xff]
      %v1314 = vld [vmem:[%s966 + $0x90] sm:$0xff]
      %v1315 = vld [vmem:[%s966 + $0x98] sm:$0xff]
      %v1316 = vld [vmem:[%s966 + $0xa8] sm:$0xff]
      %v1317 = vld [vmem:[%s966 + $0xb0] sm:$0xff]
      %v1318 = vld [vmem:[%s966 + $0xc0] sm:$0xff]
      %v1319 = vld [vmem:[%s966 + $0xc8] sm:$0xff]
      %v1320 = vld [vmem:[%s966 + $0xd8] sm:$0xff]
      %v1321 = vld [vmem:[%s966 + $0xe0] sm:$0xff]
      %v1322 = vld [vmem:[%s966 + $0xf0] sm:$0xff]
      %v1323 = vld [vmem:[%s966 + $0xf8] sm:$0xff]
      %v1324 = vld [vmem:[%s966 + $0x108] sm:$0xff]
      %v1325 = vld [vmem:[%s966 + $0x110] sm:$0xff]
      %v1326 = vld [vmem:[%s966 + $0x120] sm:$0xff]
      %v1327 = vld [vmem:[%s966 + $0x128] sm:$0xff]
      %v1328 = vld [vmem:[%s966 + $0x138] sm:$0xff]
      %v1329 = vld [vmem:[%s966 + $0x140] sm:$0xff]
      %v1330 = vld [vmem:[%s966 + $0x150] sm:$0xff]
      %v1331 = vld [vmem:[%s966 + $0x158] sm:$0xff]
      %v1332 = vld [vmem:[%s966 + $0x168] sm:$0xff]
      %v1333 = vld [vmem:[%s966 + $0x170] sm:$0xff]
      %s1334 = scalar_lea.vmem %s3, 4
      %v1335 = vld [vmem:[%s1334] sm:$0x1]
      %v1336 = vlaneseq
      %v1337 = vshrl.u32 %v1336, 7
      %v1338 = vsub.s32 0, %v1337
      %v1339 = vrot.slane %v1335, %v1338
      %v1340 = vmul.f32 %v1302, %v1339
      %v1341 = vmul.f32 %v1303, %v1339
      %v1342 = vmul.f32 %v1304, %v1339
      %v1343 = vmul.f32 %v1305, %v1339
      %v1344 = vmul.f32 %v1306, %v1339
      %v1345 = vmul.f32 %v1307, %v1339
      %v1346 = vmul.f32 %v1308, %v1339
      %v1347 = vmul.f32 %v1309, %v1339
      %v1348 = vmul.f32 %v1310, %v1339
      %v1349 = vmul.f32 %v1311, %v1339
      %v1350 = vmul.f32 %v1312, %v1339
      %v1351 = vmul.f32 %v1313, %v1339
      %v1352 = vmul.f32 %v1314, %v1339
      %v1353 = vmul.f32 %v1315, %v1339
      %v1354 = vmul.f32 %v1316, %v1339
      %v1355 = vmul.f32 %v1317, %v1339
      %v1356 = vmul.f32 %v1318, %v1339
      %v1357 = vmul.f32 %v1319, %v1339
      %v1358 = vmul.f32 %v1320, %v1339
      %v1359 = vmul.f32 %v1321, %v1339
      %v1360 = vmul.f32 %v1322, %v1339
      %v1361 = vmul.f32 %v1323, %v1339
      %v1362 = vmul.f32 %v1324, %v1339
      %v1363 = vmul.f32 %v1325, %v1339
      %v1364 = vmul.f32 %v1326, %v1339
      %v1365 = vmul.f32 %v1327, %v1339
      %v1366 = vmul.f32 %v1328, %v1339
      %v1367 = vmul.f32 %v1329, %v1339
      %v1368 = vmul.f32 %v1330, %v1339
      %v1369 = vmul.f32 %v1331, %v1339
      %v1370 = vmul.f32 %v1332, %v1339
      %v1371 = vmul.f32 %v1333, %v1339
      %v1372 = vadd.f32 %v1270, %v1340
      %v1373 = vadd.f32 %v1271, %v1341
      %v1374 = vadd.f32 %v1272, %v1342
      %v1375 = vadd.f32 %v1273, %v1343
      %v1376 = vadd.f32 %v1274, %v1344
      %v1377 = vadd.f32 %v1275, %v1345
      %v1378 = vadd.f32 %v1276, %v1346
      %v1379 = vadd.f32 %v1277, %v1347
      %v1380 = vadd.f32 %v1278, %v1348
      %v1381 = vadd.f32 %v1279, %v1349
      %v1382 = vadd.f32 %v1280, %v1350
      %v1383 = vadd.f32 %v1281, %v1351
      %v1384 = vadd.f32 %v1282, %v1352
      %v1385 = vadd.f32 %v1283, %v1353
      %v1386 = vadd.f32 %v1284, %v1354
      %v1387 = vadd.f32 %v1285, %v1355
      %v1388 = vadd.f32 %v1286, %v1356
      %v1389 = vadd.f32 %v1287, %v1357
      %v1390 = vadd.f32 %v1288, %v1358
      %v1391 = vadd.f32 %v1289, %v1359
      %v1392 = vadd.f32 %v1290, %v1360
      %v1393 = vadd.f32 %v1291, %v1361
      %v1394 = vadd.f32 %v1292, %v1362
      %v1395 = vadd.f32 %v1293, %v1363
      %v1396 = vadd.f32 %v1294, %v1364
      %v1397 = vadd.f32 %v1295, %v1365
      %v1398 = vadd.f32 %v1296, %v1366
      %v1399 = vadd.f32 %v1297, %v1367
      %v1400 = vadd.f32 %v1298, %v1368
      %v1401 = vadd.f32 %v1299, %v1369
      %v1402 = vadd.f32 %v1300, %v1370
      %v1403 = vadd.f32 %v1301, %v1371
      %v1404 = vld [vmem:[%s966 + $0x1] sm:$0xff]
      %v1405 = vld [vmem:[%s966 + $0x9] sm:$0xff]
      %v1406 = vld [vmem:[%s966 + $0x19] sm:$0xff]
      %v1407 = vld [vmem:[%s966 + $0x21] sm:$0xff]
      %v1408 = vld [vmem:[%s966 + $0x31] sm:$0xff]
      %v1409 = vld [vmem:[%s966 + $0x39] sm:$0xff]
      %v1410 = vld [vmem:[%s966 + $0x49] sm:$0xff]
      %v1411 = vld [vmem:[%s966 + $0x51] sm:$0xff]
      %v1412 = vld [vmem:[%s966 + $0x61] sm:$0xff]
      %v1413 = vld [vmem:[%s966 + $0x69] sm:$0xff]
      %v1414 = vld [vmem:[%s966 + $0x79] sm:$0xff]
      %v1415 = vld [vmem:[%s966 + $0x81] sm:$0xff]
      %v1416 = vld [vmem:[%s966 + $0x91] sm:$0xff]
      %v1417 = vld [vmem:[%s966 + $0x99] sm:$0xff]
      %v1418 = vld [vmem:[%s966 + $0xa9] sm:$0xff]
      %v1419 = vld [vmem:[%s966 + $0xb1] sm:$0xff]
      %v1420 = vld [vmem:[%s966 + $0xc1] sm:$0xff]
      %v1421 = vld [vmem:[%s966 + $0xc9] sm:$0xff]
      %v1422 = vld [vmem:[%s966 + $0xd9] sm:$0xff]
      %v1423 = vld [vmem:[%s966 + $0xe1] sm:$0xff]
      %v1424 = vld [vmem:[%s966 + $0xf1] sm:$0xff]
      %v1425 = vld [vmem:[%s966 + $0xf9] sm:$0xff]
      %v1426 = vld [vmem:[%s966 + $0x109] sm:$0xff]
      %v1427 = vld [vmem:[%s966 + $0x111] sm:$0xff]
      %v1428 = vld [vmem:[%s966 + $0x121] sm:$0xff]
      %v1429 = vld [vmem:[%s966 + $0x129] sm:$0xff]
      %v1430 = vld [vmem:[%s966 + $0x139] sm:$0xff]
      %v1431 = vld [vmem:[%s966 + $0x141] sm:$0xff]
      %v1432 = vld [vmem:[%s966 + $0x151] sm:$0xff]
      %v1433 = vld [vmem:[%s966 + $0x159] sm:$0xff]
      %v1434 = vld [vmem:[%s966 + $0x169] sm:$0xff]
      %v1435 = vld [vmem:[%s966 + $0x171] sm:$0xff]
      %v1436 = vld [vmem:[%s1334 + $0x1] sm:$0x1]
      %v1437 = vlaneseq
      %v1438 = vshrl.u32 %v1437, 7
      %v1439 = vsub.s32 0, %v1438
      %v1440 = vrot.slane %v1436, %v1439
      %v1441 = vmul.f32 %v1404, %v1440
      %v1442 = vmul.f32 %v1405, %v1440
      %v1443 = vmul.f32 %v1406, %v1440
      %v1444 = vmul.f32 %v1407, %v1440
      %v1445 = vmul.f32 %v1408, %v1440
      %v1446 = vmul.f32 %v1409, %v1440
      %v1447 = vmul.f32 %v1410, %v1440
      %v1448 = vmul.f32 %v1411, %v1440
      %v1449 = vmul.f32 %v1412, %v1440
      %v1450 = vmul.f32 %v1413, %v1440
      %v1451 = vmul.f32 %v1414, %v1440
      %v1452 = vmul.f32 %v1415, %v1440
      %v1453 = vmul.f32 %v1416, %v1440
      %v1454 = vmul.f32 %v1417, %v1440
      %v1455 = vmul.f32 %v1418, %v1440
      %v1456 = vmul.f32 %v1419, %v1440
      %v1457 = vmul.f32 %v1420, %v1440
      %v1458 = vmul.f32 %v1421, %v1440
      %v1459 = vmul.f32 %v1422, %v1440
      %v1460 = vmul.f32 %v1423, %v1440
      %v1461 = vmul.f32 %v1424, %v1440
      %v1462 = vmul.f32 %v1425, %v1440
      %v1463 = vmul.f32 %v1426, %v1440
      %v1464 = vmul.f32 %v1427, %v1440
      %v1465 = vmul.f32 %v1428, %v1440
      %v1466 = vmul.f32 %v1429, %v1440
      %v1467 = vmul.f32 %v1430, %v1440
      %v1468 = vmul.f32 %v1431, %v1440
      %v1469 = vmul.f32 %v1432, %v1440
      %v1470 = vmul.f32 %v1433, %v1440
      %v1471 = vmul.f32 %v1434, %v1440
      %v1472 = vmul.f32 %v1435, %v1440
      %v1473 = vadd.f32 %v1372, %v1441
      %v1474 = vadd.f32 %v1373, %v1442
      %v1475 = vadd.f32 %v1374, %v1443
      %v1476 = vadd.f32 %v1375, %v1444
      %v1477 = vadd.f32 %v1376, %v1445
      %v1478 = vadd.f32 %v1377, %v1446
      %v1479 = vadd.f32 %v1378, %v1447
      %v1480 = vadd.f32 %v1379, %v1448
      %v1481 = vadd.f32 %v1380, %v1449
      %v1482 = vadd.f32 %v1381, %v1450
      %v1483 = vadd.f32 %v1382, %v1451
      %v1484 = vadd.f32 %v1383, %v1452
      %v1485 = vadd.f32 %v1384, %v1453
      %v1486 = vadd.f32 %v1385, %v1454
      %v1487 = vadd.f32 %v1386, %v1455
      %v1488 = vadd.f32 %v1387, %v1456
      %v1489 = vadd.f32 %v1388, %v1457
      %v1490 = vadd.f32 %v1389, %v1458
      %v1491 = vadd.f32 %v1390, %v1459
      %v1492 = vadd.f32 %v1391, %v1460
      %v1493 = vadd.f32 %v1392, %v1461
      %v1494 = vadd.f32 %v1393, %v1462
      %v1495 = vadd.f32 %v1394, %v1463
      %v1496 = vadd.f32 %v1395, %v1464
      %v1497 = vadd.f32 %v1396, %v1465
      %v1498 = vadd.f32 %v1397, %v1466
      %v1499 = vadd.f32 %v1398, %v1467
      %v1500 = vadd.f32 %v1399, %v1468
      %v1501 = vadd.f32 %v1400, %v1469
      %v1502 = vadd.f32 %v1401, %v1470
      %v1503 = vadd.f32 %v1402, %v1471
      %v1504 = vadd.f32 %v1403, %v1472
      %v1505 = vld [vmem:[%s966 + $0x2] sm:$0xff]
      %v1506 = vld [vmem:[%s966 + $0xa] sm:$0xff]
      %v1507 = vld [vmem:[%s966 + $0x1a] sm:$0xff]
      %v1508 = vld [vmem:[%s966 + $0x22] sm:$0xff]
      %v1509 = vld [vmem:[%s966 + $0x32] sm:$0xff]
      %v1510 = vld [vmem:[%s966 + $0x3a] sm:$0xff]
      %v1511 = vld [vmem:[%s966 + $0x4a] sm:$0xff]
      %v1512 = vld [vmem:[%s966 + $0x52] sm:$0xff]
      %v1513 = vld [vmem:[%s966 + $0x62] sm:$0xff]
      %v1514 = vld [vmem:[%s966 + $0x6a] sm:$0xff]
      %v1515 = vld [vmem:[%s966 + $0x7a] sm:$0xff]
      %v1516 = vld [vmem:[%s966 + $0x82] sm:$0xff]
      %v1517 = vld [vmem:[%s966 + $0x92] sm:$0xff]
      %v1518 = vld [vmem:[%s966 + $0x9a] sm:$0xff]
      %v1519 = vld [vmem:[%s966 + $0xaa] sm:$0xff]
      %v1520 = vld [vmem:[%s966 + $0xb2] sm:$0xff]
      %v1521 = vld [vmem:[%s966 + $0xc2] sm:$0xff]
      %v1522 = vld [vmem:[%s966 + $0xca] sm:$0xff]
      %v1523 = vld [vmem:[%s966 + $0xda] sm:$0xff]
      %v1524 = vld [vmem:[%s966 + $0xe2] sm:$0xff]
      %v1525 = vld [vmem:[%s966 + $0xf2] sm:$0xff]
      %v1526 = vld [vmem:[%s966 + $0xfa] sm:$0xff]
      %v1527 = vld [vmem:[%s966 + $0x10a] sm:$0xff]
      %v1528 = vld [vmem:[%s966 + $0x112] sm:$0xff]
      %v1529 = vld [vmem:[%s966 + $0x122] sm:$0xff]
      %v1530 = vld [vmem:[%s966 + $0x12a] sm:$0xff]
      %v1531 = vld [vmem:[%s966 + $0x13a] sm:$0xff]
      %v1532 = vld [vmem:[%s966 + $0x142] sm:$0xff]
      %v1533 = vld [vmem:[%s966 + $0x152] sm:$0xff]
      %v1534 = vld [vmem:[%s966 + $0x15a] sm:$0xff]
      %v1535 = vld [vmem:[%s966 + $0x16a] sm:$0xff]
      %v1536 = vld [vmem:[%s966 + $0x172] sm:$0xff]
      %v1537 = vld [vmem:[%s1334 + $0x2] sm:$0x1]
      %v1538 = vlaneseq
      %v1539 = vshrl.u32 %v1538, 7
      %v1540 = vsub.s32 0, %v1539
      %v1541 = vrot.slane %v1537, %v1540
      %v1542 = vmul.f32 %v1505, %v1541
      %v1543 = vmul.f32 %v1506, %v1541
      %v1544 = vmul.f32 %v1507, %v1541
      %v1545 = vmul.f32 %v1508, %v1541
      %v1546 = vmul.f32 %v1509, %v1541
      %v1547 = vmul.f32 %v1510, %v1541
      %v1548 = vmul.f32 %v1511, %v1541
      %v1549 = vmul.f32 %v1512, %v1541
      %v1550 = vmul.f32 %v1513, %v1541
      %v1551 = vmul.f32 %v1514, %v1541
      %v1552 = vmul.f32 %v1515, %v1541
      %v1553 = vmul.f32 %v1516, %v1541
      %v1554 = vmul.f32 %v1517, %v1541
      %v1555 = vmul.f32 %v1518, %v1541
      %v1556 = vmul.f32 %v1519, %v1541
      %v1557 = vmul.f32 %v1520, %v1541
      %v1558 = vmul.f32 %v1521, %v1541
      %v1559 = vmul.f32 %v1522, %v1541
      %v1560 = vmul.f32 %v1523, %v1541
      %v1561 = vmul.f32 %v1524, %v1541
      %v1562 = vmul.f32 %v1525, %v1541
      %v1563 = vmul.f32 %v1526, %v1541
      %v1564 = vmul.f32 %v1527, %v1541
      %v1565 = vmul.f32 %v1528, %v1541
      %v1566 = vmul.f32 %v1529, %v1541
      %v1567 = vmul.f32 %v1530, %v1541
      %v1568 = vmul.f32 %v1531, %v1541
      %v1569 = vmul.f32 %v1532, %v1541
      %v1570 = vmul.f32 %v1533, %v1541
      %v1571 = vmul.f32 %v1534, %v1541
      %v1572 = vmul.f32 %v1535, %v1541
      %v1573 = vmul.f32 %v1536, %v1541
      %v1574 = vadd.f32 %v1473, %v1542
      %v1575 = vadd.f32 %v1474, %v1543
      %v1576 = vadd.f32 %v1475, %v1544
      %v1577 = vadd.f32 %v1476, %v1545
      %v1578 = vadd.f32 %v1477, %v1546
      %v1579 = vadd.f32 %v1478, %v1547
      %v1580 = vadd.f32 %v1479, %v1548
      %v1581 = vadd.f32 %v1480, %v1549
      %v1582 = vadd.f32 %v1481, %v1550
      %v1583 = vadd.f32 %v1482, %v1551
      %v1584 = vadd.f32 %v1483, %v1552
      %v1585 = vadd.f32 %v1484, %v1553
      %v1586 = vadd.f32 %v1485, %v1554
      %v1587 = vadd.f32 %v1486, %v1555
      %v1588 = vadd.f32 %v1487, %v1556
      %v1589 = vadd.f32 %v1488, %v1557
      %v1590 = vadd.f32 %v1489, %v1558
      %v1591 = vadd.f32 %v1490, %v1559
      %v1592 = vadd.f32 %v1491, %v1560
      %v1593 = vadd.f32 %v1492, %v1561
      %v1594 = vadd.f32 %v1493, %v1562
      %v1595 = vadd.f32 %v1494, %v1563
      %v1596 = vadd.f32 %v1495, %v1564
      %v1597 = vadd.f32 %v1496, %v1565
      %v1598 = vadd.f32 %v1497, %v1566
      %v1599 = vadd.f32 %v1498, %v1567
      %v1600 = vadd.f32 %v1499, %v1568
      %v1601 = vadd.f32 %v1500, %v1569
      %v1602 = vadd.f32 %v1501, %v1570
      %v1603 = vadd.f32 %v1502, %v1571
      %v1604 = vadd.f32 %v1503, %v1572
      %v1605 = vadd.f32 %v1504, %v1573
      %s1606 = scalar_lea.vmem [#allocation2], 48
      %v1607 = vld [vmem:[%s1606] sm:$0xff]
      %v1608 = vld [vmem:[%s1606 + $0x8] sm:$0xff]
      %v1609 = vld [vmem:[%s1606 + $0x18] sm:$0xff]
      %v1610 = vld [vmem:[%s1606 + $0x20] sm:$0xff]
      %v1611 = vld [vmem:[%s1606 + $0x30] sm:$0xff]
      %v1612 = vld [vmem:[%s1606 + $0x38] sm:$0xff]
      %v1613 = vld [vmem:[%s1606 + $0x48] sm:$0xff]
      %v1614 = vld [vmem:[%s1606 + $0x50] sm:$0xff]
      %v1615 = vld [vmem:[%s1606 + $0x60] sm:$0xff]
      %v1616 = vld [vmem:[%s1606 + $0x68] sm:$0xff]
      %v1617 = vld [vmem:[%s1606 + $0x78] sm:$0xff]
      %v1618 = vld [vmem:[%s1606 + $0x80] sm:$0xff]
      %v1619 = vld [vmem:[%s1606 + $0x90] sm:$0xff]
      %v1620 = vld [vmem:[%s1606 + $0x98] sm:$0xff]
      %v1621 = vld [vmem:[%s1606 + $0xa8] sm:$0xff]
      %v1622 = vld [vmem:[%s1606 + $0xb0] sm:$0xff]
      %v1623 = vld [vmem:[%s1606 + $0xc0] sm:$0xff]
      %v1624 = vld [vmem:[%s1606 + $0xc8] sm:$0xff]
      %v1625 = vld [vmem:[%s1606 + $0xd8] sm:$0xff]
      %v1626 = vld [vmem:[%s1606 + $0xe0] sm:$0xff]
      %v1627 = vld [vmem:[%s1606 + $0xf0] sm:$0xff]
      %v1628 = vld [vmem:[%s1606 + $0xf8] sm:$0xff]
      %v1629 = vld [vmem:[%s1606 + $0x108] sm:$0xff]
      %v1630 = vld [vmem:[%s1606 + $0x110] sm:$0xff]
      %v1631 = vld [vmem:[%s1606 + $0x120] sm:$0xff]
      %v1632 = vld [vmem:[%s1606 + $0x128] sm:$0xff]
      %v1633 = vld [vmem:[%s1606 + $0x138] sm:$0xff]
      %v1634 = vld [vmem:[%s1606 + $0x140] sm:$0xff]
      %v1635 = vld [vmem:[%s1606 + $0x150] sm:$0xff]
      %v1636 = vld [vmem:[%s1606 + $0x158] sm:$0xff]
      %v1637 = vld [vmem:[%s1606 + $0x168] sm:$0xff]
      %v1638 = vld [vmem:[%s1606 + $0x170] sm:$0xff]
      %s1639 = scalar_lea.vmem %s3, 8
      %v1640 = vld [vmem:[%s1639] sm:$0x1]
      %v1641 = vlaneseq
      %v1642 = vshrl.u32 %v1641, 7
      %v1643 = vsub.s32 0, %v1642
      %v1644 = vrot.slane %v1640, %v1643
      %v1645 = vmul.f32 %v1607, %v1644
      %v1646 = vmul.f32 %v1608, %v1644
      %v1647 = vmul.f32 %v1609, %v1644
      %v1648 = vmul.f32 %v1610, %v1644
      %v1649 = vmul.f32 %v1611, %v1644
      %v1650 = vmul.f32 %v1612, %v1644
      %v1651 = vmul.f32 %v1613, %v1644
      %v1652 = vmul.f32 %v1614, %v1644
      %v1653 = vmul.f32 %v1615, %v1644
      %v1654 = vmul.f32 %v1616, %v1644
      %v1655 = vmul.f32 %v1617, %v1644
      %v1656 = vmul.f32 %v1618, %v1644
      %v1657 = vmul.f32 %v1619, %v1644
      %v1658 = vmul.f32 %v1620, %v1644
      %v1659 = vmul.f32 %v1621, %v1644
      %v1660 = vmul.f32 %v1622, %v1644
      %v1661 = vmul.f32 %v1623, %v1644
      %v1662 = vmul.f32 %v1624, %v1644
      %v1663 = vmul.f32 %v1625, %v1644
      %v1664 = vmul.f32 %v1626, %v1644
      %v1665 = vmul.f32 %v1627, %v1644
      %v1666 = vmul.f32 %v1628, %v1644
      %v1667 = vmul.f32 %v1629, %v1644
      %v1668 = vmul.f32 %v1630, %v1644
      %v1669 = vmul.f32 %v1631, %v1644
      %v1670 = vmul.f32 %v1632, %v1644
      %v1671 = vmul.f32 %v1633, %v1644
      %v1672 = vmul.f32 %v1634, %v1644
      %v1673 = vmul.f32 %v1635, %v1644
      %v1674 = vmul.f32 %v1636, %v1644
      %v1675 = vmul.f32 %v1637, %v1644
      %v1676 = vmul.f32 %v1638, %v1644
      %v1677 = vadd.f32 %v1574, %v1645
      %v1678 = vadd.f32 %v1575, %v1646
      %v1679 = vadd.f32 %v1576, %v1647
      %v1680 = vadd.f32 %v1577, %v1648
      %v1681 = vadd.f32 %v1578, %v1649
      %v1682 = vadd.f32 %v1579, %v1650
      %v1683 = vadd.f32 %v1580, %v1651
      %v1684 = vadd.f32 %v1581, %v1652
      %v1685 = vadd.f32 %v1582, %v1653
      %v1686 = vadd.f32 %v1583, %v1654
      %v1687 = vadd.f32 %v1584, %v1655
      %v1688 = vadd.f32 %v1585, %v1656
      %v1689 = vadd.f32 %v1586, %v1657
      %v1690 = vadd.f32 %v1587, %v1658
      %v1691 = vadd.f32 %v1588, %v1659
      %v1692 = vadd.f32 %v1589, %v1660
      %v1693 = vadd.f32 %v1590, %v1661
      %v1694 = vadd.f32 %v1591, %v1662
      %v1695 = vadd.f32 %v1592, %v1663
      %v1696 = vadd.f32 %v1593, %v1664
      %v1697 = vadd.f32 %v1594, %v1665
      %v1698 = vadd.f32 %v1595, %v1666
      %v1699 = vadd.f32 %v1596, %v1667
      %v1700 = vadd.f32 %v1597, %v1668
      %v1701 = vadd.f32 %v1598, %v1669
      %v1702 = vadd.f32 %v1599, %v1670
      %v1703 = vadd.f32 %v1600, %v1671
      %v1704 = vadd.f32 %v1601, %v1672
      %v1705 = vadd.f32 %v1602, %v1673
      %v1706 = vadd.f32 %v1603, %v1674
      %v1707 = vadd.f32 %v1604, %v1675
      %v1708 = vadd.f32 %v1605, %v1676
      %v1709 = vld [vmem:[%s1606 + $0x1] sm:$0xff]
      %v1710 = vld [vmem:[%s1606 + $0x9] sm:$0xff]
      %v1711 = vld [vmem:[%s1606 + $0x19] sm:$0xff]
      %v1712 = vld [vmem:[%s1606 + $0x21] sm:$0xff]
      %v1713 = vld [vmem:[%s1606 + $0x31] sm:$0xff]
      %v1714 = vld [vmem:[%s1606 + $0x39] sm:$0xff]
      %v1715 = vld [vmem:[%s1606 + $0x49] sm:$0xff]
      %v1716 = vld [vmem:[%s1606 + $0x51] sm:$0xff]
      %v1717 = vld [vmem:[%s1606 + $0x61] sm:$0xff]
      %v1718 = vld [vmem:[%s1606 + $0x69] sm:$0xff]
      %v1719 = vld [vmem:[%s1606 + $0x79] sm:$0xff]
      %v1720 = vld [vmem:[%s1606 + $0x81] sm:$0xff]
      %v1721 = vld [vmem:[%s1606 + $0x91] sm:$0xff]
      %v1722 = vld [vmem:[%s1606 + $0x99] sm:$0xff]
      %v1723 = vld [vmem:[%s1606 + $0xa9] sm:$0xff]
      %v1724 = vld [vmem:[%s1606 + $0xb1] sm:$0xff]
      %v1725 = vld [vmem:[%s1606 + $0xc1] sm:$0xff]
      %v1726 = vld [vmem:[%s1606 + $0xc9] sm:$0xff]
      %v1727 = vld [vmem:[%s1606 + $0xd9] sm:$0xff]
      %v1728 = vld [vmem:[%s1606 + $0xe1] sm:$0xff]
      %v1729 = vld [vmem:[%s1606 + $0xf1] sm:$0xff]
      %v1730 = vld [vmem:[%s1606 + $0xf9] sm:$0xff]
      %v1731 = vld [vmem:[%s1606 + $0x109] sm:$0xff]
      %v1732 = vld [vmem:[%s1606 + $0x111] sm:$0xff]
      %v1733 = vld [vmem:[%s1606 + $0x121] sm:$0xff]
      %v1734 = vld [vmem:[%s1606 + $0x129] sm:$0xff]
      %v1735 = vld [vmem:[%s1606 + $0x139] sm:$0xff]
      %v1736 = vld [vmem:[%s1606 + $0x141] sm:$0xff]
      %v1737 = vld [vmem:[%s1606 + $0x151] sm:$0xff]
      %v1738 = vld [vmem:[%s1606 + $0x159] sm:$0xff]
      %v1739 = vld [vmem:[%s1606 + $0x169] sm:$0xff]
      %v1740 = vld [vmem:[%s1606 + $0x171] sm:$0xff]
      %v1741 = vld [vmem:[%s1639 + $0x1] sm:$0x1]
      %v1742 = vlaneseq
      %v1743 = vshrl.u32 %v1742, 7
      %v1744 = vsub.s32 0, %v1743
      %v1745 = vrot.slane %v1741, %v1744
      %v1746 = vmul.f32 %v1709, %v1745
      %v1747 = vmul.f32 %v1710, %v1745
      %v1748 = vmul.f32 %v1711, %v1745
      %v1749 = vmul.f32 %v1712, %v1745
      %v1750 = vmul.f32 %v1713, %v1745
      %v1751 = vmul.f32 %v1714, %v1745
      %v1752 = vmul.f32 %v1715, %v1745
      %v1753 = vmul.f32 %v1716, %v1745
      %v1754 = vmul.f32 %v1717, %v1745
      %v1755 = vmul.f32 %v1718, %v1745
      %v1756 = vmul.f32 %v1719, %v1745
      %v1757 = vmul.f32 %v1720, %v1745
      %v1758 = vmul.f32 %v1721, %v1745
      %v1759 = vmul.f32 %v1722, %v1745
      %v1760 = vmul.f32 %v1723, %v1745
      %v1761 = vmul.f32 %v1724, %v1745
      %v1762 = vmul.f32 %v1725, %v1745
      %v1763 = vmul.f32 %v1726, %v1745
      %v1764 = vmul.f32 %v1727, %v1745
      %v1765 = vmul.f32 %v1728, %v1745
      %v1766 = vmul.f32 %v1729, %v1745
      %v1767 = vmul.f32 %v1730, %v1745
      %v1768 = vmul.f32 %v1731, %v1745
      %v1769 = vmul.f32 %v1732, %v1745
      %v1770 = vmul.f32 %v1733, %v1745
      %v1771 = vmul.f32 %v1734, %v1745
      %v1772 = vmul.f32 %v1735, %v1745
      %v1773 = vmul.f32 %v1736, %v1745
      %v1774 = vmul.f32 %v1737, %v1745
      %v1775 = vmul.f32 %v1738, %v1745
      %v1776 = vmul.f32 %v1739, %v1745
      %v1777 = vmul.f32 %v1740, %v1745
      %v1778 = vadd.f32 %v1677, %v1746
      %v1779 = vadd.f32 %v1678, %v1747
      %v1780 = vadd.f32 %v1679, %v1748
      %v1781 = vadd.f32 %v1680, %v1749
      %v1782 = vadd.f32 %v1681, %v1750
      %v1783 = vadd.f32 %v1682, %v1751
      %v1784 = vadd.f32 %v1683, %v1752
      %v1785 = vadd.f32 %v1684, %v1753
      %v1786 = vadd.f32 %v1685, %v1754
      %v1787 = vadd.f32 %v1686, %v1755
      %v1788 = vadd.f32 %v1687, %v1756
      %v1789 = vadd.f32 %v1688, %v1757
      %v1790 = vadd.f32 %v1689, %v1758
      %v1791 = vadd.f32 %v1690, %v1759
      %v1792 = vadd.f32 %v1691, %v1760
      %v1793 = vadd.f32 %v1692, %v1761
      %v1794 = vadd.f32 %v1693, %v1762
      %v1795 = vadd.f32 %v1694, %v1763
      %v1796 = vadd.f32 %v1695, %v1764
      %v1797 = vadd.f32 %v1696, %v1765
      %v1798 = vadd.f32 %v1697, %v1766
      %v1799 = vadd.f32 %v1698, %v1767
      %v1800 = vadd.f32 %v1699, %v1768
      %v1801 = vadd.f32 %v1700, %v1769
      %v1802 = vadd.f32 %v1701, %v1770
      %v1803 = vadd.f32 %v1702, %v1771
      %v1804 = vadd.f32 %v1703, %v1772
      %v1805 = vadd.f32 %v1704, %v1773
      %v1806 = vadd.f32 %v1705, %v1774
      %v1807 = vadd.f32 %v1706, %v1775
      %v1808 = vadd.f32 %v1707, %v1776
      %v1809 = vadd.f32 %v1708, %v1777
      %v1810 = vld [vmem:[%s1606 + $0x2] sm:$0xff]
      %v1811 = vld [vmem:[%s1606 + $0xa] sm:$0xff]
      %v1812 = vld [vmem:[%s1606 + $0x1a] sm:$0xff]
      %v1813 = vld [vmem:[%s1606 + $0x22] sm:$0xff]
      %v1814 = vld [vmem:[%s1606 + $0x32] sm:$0xff]
      %v1815 = vld [vmem:[%s1606 + $0x3a] sm:$0xff]
      %v1816 = vld [vmem:[%s1606 + $0x4a] sm:$0xff]
      %v1817 = vld [vmem:[%s1606 + $0x52] sm:$0xff]
      %v1818 = vld [vmem:[%s1606 + $0x62] sm:$0xff]
      %v1819 = vld [vmem:[%s1606 + $0x6a] sm:$0xff]
      %v1820 = vld [vmem:[%s1606 + $0x7a] sm:$0xff]
      %v1821 = vld [vmem:[%s1606 + $0x82] sm:$0xff]
      %v1822 = vld [vmem:[%s1606 + $0x92] sm:$0xff]
      %v1823 = vld [vmem:[%s1606 + $0x9a] sm:$0xff]
      %v1824 = vld [vmem:[%s1606 + $0xaa] sm:$0xff]
      %v1825 = vld [vmem:[%s1606 + $0xb2] sm:$0xff]
      %v1826 = vld [vmem:[%s1606 + $0xc2] sm:$0xff]
      %v1827 = vld [vmem:[%s1606 + $0xca] sm:$0xff]
      %v1828 = vld [vmem:[%s1606 + $0xda] sm:$0xff]
      %v1829 = vld [vmem:[%s1606 + $0xe2] sm:$0xff]
      %v1830 = vld [vmem:[%s1606 + $0xf2] sm:$0xff]
      %v1831 = vld [vmem:[%s1606 + $0xfa] sm:$0xff]
      %v1832 = vld [vmem:[%s1606 + $0x10a] sm:$0xff]
      %v1833 = vld [vmem:[%s1606 + $0x112] sm:$0xff]
      %v1834 = vld [vmem:[%s1606 + $0x122] sm:$0xff]
      %v1835 = vld [vmem:[%s1606 + $0x12a] sm:$0xff]
      %v1836 = vld [vmem:[%s1606 + $0x13a] sm:$0xff]
      %v1837 = vld [vmem:[%s1606 + $0x142] sm:$0xff]
      %v1838 = vld [vmem:[%s1606 + $0x152] sm:$0xff]
      %v1839 = vld [vmem:[%s1606 + $0x15a] sm:$0xff]
      %v1840 = vld [vmem:[%s1606 + $0x16a] sm:$0xff]
      %v1841 = vld [vmem:[%s1606 + $0x172] sm:$0xff]
      %v1842 = vld [vmem:[%s1639 + $0x2] sm:$0x1]
      %v1843 = vlaneseq
      %v1844 = vshrl.u32 %v1843, 7
      %v1845 = vsub.s32 0, %v1844
      %v1846 = vrot.slane %v1842, %v1845
      %v1847 = vmul.f32 %v1810, %v1846
      %v1848 = vmul.f32 %v1811, %v1846
      %v1849 = vmul.f32 %v1812, %v1846
      %v1850 = vmul.f32 %v1813, %v1846
      %v1851 = vmul.f32 %v1814, %v1846
      %v1852 = vmul.f32 %v1815, %v1846
      %v1853 = vmul.f32 %v1816, %v1846
      %v1854 = vmul.f32 %v1817, %v1846
      %v1855 = vmul.f32 %v1818, %v1846
      %v1856 = vmul.f32 %v1819, %v1846
      %v1857 = vmul.f32 %v1820, %v1846
      %v1858 = vmul.f32 %v1821, %v1846
      %v1859 = vmul.f32 %v1822, %v1846
      %v1860 = vmul.f32 %v1823, %v1846
      %v1861 = vmul.f32 %v1824, %v1846
      %v1862 = vmul.f32 %v1825, %v1846
      %v1863 = vmul.f32 %v1826, %v1846
      %v1864 = vmul.f32 %v1827, %v1846
      %v1865 = vmul.f32 %v1828, %v1846
      %v1866 = vmul.f32 %v1829, %v1846
      %v1867 = vmul.f32 %v1830, %v1846
      %v1868 = vmul.f32 %v1831, %v1846
      %v1869 = vmul.f32 %v1832, %v1846
      %v1870 = vmul.f32 %v1833, %v1846
      %v1871 = vmul.f32 %v1834, %v1846
      %v1872 = vmul.f32 %v1835, %v1846
      %v1873 = vmul.f32 %v1836, %v1846
      %v1874 = vmul.f32 %v1837, %v1846
      %v1875 = vmul.f32 %v1838, %v1846
      %v1876 = vmul.f32 %v1839, %v1846
      %v1877 = vmul.f32 %v1840, %v1846
      %v1878 = vmul.f32 %v1841, %v1846
      %v1879 = vadd.f32 %v1778, %v1847
      %v1880 = vadd.f32 %v1779, %v1848
      %v1881 = vadd.f32 %v1780, %v1849
      %v1882 = vadd.f32 %v1781, %v1850
      %v1883 = vadd.f32 %v1782, %v1851
      %v1884 = vadd.f32 %v1783, %v1852
      %v1885 = vadd.f32 %v1784, %v1853
      %v1886 = vadd.f32 %v1785, %v1854
      %v1887 = vadd.f32 %v1786, %v1855
      %v1888 = vadd.f32 %v1787, %v1856
      %v1889 = vadd.f32 %v1788, %v1857
      %v1890 = vadd.f32 %v1789, %v1858
      %v1891 = vadd.f32 %v1790, %v1859
      %v1892 = vadd.f32 %v1791, %v1860
      %v1893 = vadd.f32 %v1792, %v1861
      %v1894 = vadd.f32 %v1793, %v1862
      %v1895 = vadd.f32 %v1794, %v1863
      %v1896 = vadd.f32 %v1795, %v1864
      %v1897 = vadd.f32 %v1796, %v1865
      %v1898 = vadd.f32 %v1797, %v1866
      %v1899 = vadd.f32 %v1798, %v1867
      %v1900 = vadd.f32 %v1799, %v1868
      %v1901 = vadd.f32 %v1800, %v1869
      %v1902 = vadd.f32 %v1801, %v1870
      %v1903 = vadd.f32 %v1802, %v1871
      %v1904 = vadd.f32 %v1803, %v1872
      %v1905 = vadd.f32 %v1804, %v1873
      %v1906 = vadd.f32 %v1805, %v1874
      %v1907 = vadd.f32 %v1806, %v1875
      %v1908 = vadd.f32 %v1807, %v1876
      %v1909 = vadd.f32 %v1808, %v1877
      %v1910 = vadd.f32 %v1809, %v1878
      %v1911 = vld [vmem:[%s4] sm:$0x1]
      %v1913 = vlaneseq
      %v1914 = vshrl.u32 %v1913, 7
      %v1915 = vsub.s32 0, %v1914
      %v1916 = vrot.slane %v1911, %v1915
      %v1918 = vadd.f32 %v1879, %v1916
      %v1919 = vadd.f32 %v1880, %v1916
      %v1920 = vadd.f32 %v1881, %v1916
      %v1921 = vadd.f32 %v1882, %v1916
      %v1922 = vadd.f32 %v1883, %v1916
      %v1923 = vadd.f32 %v1884, %v1916
      %v1924 = vadd.f32 %v1885, %v1916
      %v1925 = vadd.f32 %v1886, %v1916
      %v1926 = vadd.f32 %v1887, %v1916
      %v1927 = vadd.f32 %v1888, %v1916
      %v1928 = vadd.f32 %v1889, %v1916
      %v1929 = vadd.f32 %v1890, %v1916
      %v1930 = vadd.f32 %v1891, %v1916
      %v1931 = vadd.f32 %v1892, %v1916
      %v1932 = vadd.f32 %v1893, %v1916
      %v1933 = vadd.f32 %v1894, %v1916
      %v1934 = vadd.f32 %v1895, %v1916
      %v1935 = vadd.f32 %v1896, %v1916
      %v1936 = vadd.f32 %v1897, %v1916
      %v1937 = vadd.f32 %v1898, %v1916
      %v1938 = vadd.f32 %v1899, %v1916
      %v1939 = vadd.f32 %v1900, %v1916
      %v1940 = vadd.f32 %v1901, %v1916
      %v1941 = vadd.f32 %v1902, %v1916
      %v1942 = vadd.f32 %v1903, %v1916
      %v1943 = vadd.f32 %v1904, %v1916
      %v1944 = vadd.f32 %v1905, %v1916
      %v1945 = vadd.f32 %v1906, %v1916
      %v1946 = vadd.f32 %v1907, %v1916
      %v1947 = vadd.f32 %v1908, %v1916
      %v1948 = vadd.f32 %v1909, %v1916
      %v1949 = vadd.f32 %v1910, %v1916
      %v1950 = vsel %vm910, %v1918, 0.0
      %v1951 = vsel %vm910, %v1919, 0.0
      %v1952 = vadd.f32 %v1950, %v1951
      %v1953 = vsel %vm910, %v1920, 0.0
      %v1954 = vadd.f32 %v1952, %v1953
      %v1955 = vsel %vm910, %v1921, 0.0
      %v1956 = vadd.f32 %v1954, %v1955
      %v1957 = vsel %vm910, %v1922, 0.0
      %v1958 = vadd.f32 %v1956, %v1957
      %v1959 = vsel %vm910, %v1923, 0.0
      %v1960 = vadd.f32 %v1958, %v1959
      %v1961 = vsel %vm910, %v1924, 0.0
      %v1962 = vadd.f32 %v1960, %v1961
      %v1963 = vsel %vm910, %v1925, 0.0
      %v1964 = vadd.f32 %v1962, %v1963
      %v1965 = vsel %vm910, %v1926, 0.0
      %v1966 = vadd.f32 %v1964, %v1965
      %v1967 = vsel %vm910, %v1927, 0.0
      %v1968 = vadd.f32 %v1966, %v1967
      %v1969 = vsel %vm910, %v1928, 0.0
      %v1970 = vadd.f32 %v1968, %v1969
      %v1971 = vsel %vm910, %v1929, 0.0
      %v1972 = vadd.f32 %v1970, %v1971
      %v1973 = vsel %vm910, %v1930, 0.0
      %v1974 = vadd.f32 %v1972, %v1973
      %v1975 = vsel %vm910, %v1931, 0.0
      %v1976 = vadd.f32 %v1974, %v1975
      %v1977 = vsel %vm910, %v1932, 0.0
      %v1978 = vadd.f32 %v1976, %v1977
      %v1979 = vsel %vm910, %v1933, 0.0
      %v1980 = vadd.f32 %v1978, %v1979
      %v1981 = vsel %vm910, %v1934, 0.0
      %v1982 = vadd.f32 %v1980, %v1981
      %v1983 = vsel %vm910, %v1935, 0.0
      %v1984 = vadd.f32 %v1982, %v1983
      %v1985 = vsel %vm910, %v1936, 0.0
      %v1986 = vadd.f32 %v1984, %v1985
      %v1987 = vsel %vm910, %v1937, 0.0
      %v1988 = vadd.f32 %v1986, %v1987
      %v1989 = vsel %vm910, %v1938, 0.0
      %v1990 = vadd.f32 %v1988, %v1989
      %v1991 = vsel %vm910, %v1939, 0.0
      %v1992 = vadd.f32 %v1990, %v1991
      %v1993 = vsel %vm910, %v1940, 0.0
      %v1994 = vadd.f32 %v1992, %v1993
      %v1995 = vsel %vm910, %v1941, 0.0
      %v1996 = vadd.f32 %v1994, %v1995
      %v1997 = vsel %vm910, %v1942, 0.0
      %v1998 = vadd.f32 %v1996, %v1997
      %v1999 = vsel %vm910, %v1943, 0.0
      %v2000 = vadd.f32 %v1998, %v1999
      %v2001 = vsel %vm910, %v1944, 0.0
      %v2002 = vadd.f32 %v2000, %v2001
      %v2003 = vsel %vm910, %v1945, 0.0
      %v2004 = vadd.f32 %v2002, %v2003
      %v2005 = vsel %vm910, %v1946, 0.0
      %v2006 = vadd.f32 %v2004, %v2005
      %v2007 = vsel %vm910, %v1947, 0.0
      %v2008 = vadd.f32 %v2006, %v2007
      %v2009 = vsel %vm910, %v1948, 0.0
      %v2010 = vadd.f32 %v2008, %v2009
      %v2011 = vsel %vm910, %v1949, 0.0
      %v2012 = vadd.f32 %v2010, %v2011
      %v2013 = vrot.slane %v2012, 4
      %v2014 = vadd.f32 %v2012, %v2013
      %v2015 = vrot.slane %v2014, 2
      %v2016 = vadd.f32 %v2014, %v2015
      %v2017 = vrot.slane %v2016, 1
      %v2018 = vadd.f32 %v2016, %v2017
      %v2019 = vrcp.pop 256.0
      %v2020 = vmul.f32 %v2018, %v2019
      %v2021 = vld [vmem:[%s5] sm:$0xff]
      %v2022 = vld [vmem:[%s5 + $0x8] sm:$0xff]
      %v2023 = vld [vmem:[%s5 + $0x10] sm:$0xff]
      %v2024 = vld [vmem:[%s5 + $0x18] sm:$0xff]
      %v2025 = vld [vmem:[%s6] sm:$0x1]
      %v2027 = vsel %vm910, %v2020, 0
      %2029 = vmatprep.subr.mxu0 0.0
      %2030 = vmatpush1.msra.mxu0 %v2021
      %2031 = vmatprep.subr.mxu0 0.0
      %2032 = vmatpush1.msra.mxu0 %v2022
      %2033 = vmatprep.subr.mxu0 0.0
      %2034 = vmatpush1.msra.mxu0 %v2023
      %2035 = vmatprep.subr.mxu0 0.0
      %2036 = vmatpush1.msra.mxu0 %v2024
      %2037 = vmatprep.subr.mxu0 0.0
      %2038 = vmatpush1.msra.mxu0 0.0
      %2039 = vmatprep.subr.mxu0 0.0
      %2040 = vmatpush1.msra.mxu0 0.0
      %2041 = vmatprep.subr.mxu0 0.0
      %2042 = vmatpush1.msra.mxu0 0.0
      %2043 = vmatprep.subr.mxu0 0.0
      %2044 = vmatpush1.msra.mxu0 0.0
      %2045 = vmatprep.subr.mxu0 0.0
      %2046 = vmatpush1.msra.mxu0 0.0
      %2047 = vmatprep.subr.mxu0 0.0
      %2048 = vmatpush1.msra.mxu0 0.0
      %2049 = vmatprep.subr.mxu0 0.0
      %2050 = vmatpush1.msra.mxu0 0.0
      %2051 = vmatprep.subr.mxu0 0.0
      %2052 = vmatpush1.msra.mxu0 0.0
      %2053 = vmatprep.subr.mxu0 0.0
      %2054 = vmatpush1.msra.mxu0 0.0
      %2055 = vmatprep.subr.mxu0 0.0
      %2056 = vmatpush1.msra.mxu0 0.0
      %2057 = vmatprep.subr.mxu0 0.0
      %2058 = vmatpush1.msra.mxu0 0.0
      %2059 = vmatprep.subr.mxu0 0.0
      %2060 = vmatpush1.msra.mxu0 0.0
      %2061 = vmatprep.subr.mxu0 0.0
      %2062 = vmatpush1.msra.mxu0 0.0
      %2063 = vmatprep.subr.mxu0 0.0
      %2064 = vmatpush1.msra.mxu0 0.0
      %2065 = vmatprep.subr.mxu0 0.0
      %2066 = vmatpush1.msra.mxu0 0.0
      %2067 = vmatprep.subr.mxu0 0.0
      %2068 = vmatpush1.msra.mxu0 0.0
      %2069 = vmatprep.subr.mxu0 0.0
      %2070 = vmatpush1.msra.mxu0 0.0
      %2071 = vmatprep.subr.mxu0 0.0
      %2072 = vmatpush1.msra.mxu0 0.0
      %2073 = vmatprep.subr.mxu0 0.0
      %2074 = vmatpush1.msra.mxu0 0.0
      %2075 = vmatprep.subr.mxu0 0.0
      %2076 = vmatpush1.msra.mxu0 0.0
      %2077 = vmatprep.subr.mxu0 0.0
      %2078 = vmatpush1.msra.mxu0 0.0
      %2079 = vmatprep.subr.mxu0 0.0
      %2080 = vmatpush1.msra.mxu0 0.0
      %2081 = vmatprep.subr.mxu0 0.0
      %2082 = vmatpush1.msra.mxu0 0.0
      %2083 = vmatprep.subr.mxu0 0.0
      %2084 = vmatpush1.msra.mxu0 0.0
      %2085 = vmatprep.subr.mxu0 0.0
      %2086 = vmatpush1.msra.mxu0 0.0
      %2087 = vmatprep.subr.mxu0 0.0
      %2088 = vmatpush1.msra.mxu0 0.0
      %2089 = vmatprep.subr.mxu0 0.0
      %2090 = vmatpush1.msra.mxu0 0.0
      %2091 = vmatprep.subr.mxu0 0.0
      %2092 = vmatpush1.msra.mxu0 0.0
      %2093 = vmatprep.mubr.f32.mxu0 0.0
      %2094 = vmatmul.mubr.f32.gmra.mrb[0].mxu0 %v2027
      %v2095 = vpop.f32.mrb[0].mxu0
      %v2096 = vadd.f32 %v2025, %v2095
      %v2097 = vpop.f32.mrb[0].mxu0
      %2098 = vdwg.mxu0
      %v2099 = vmax.f32 %v2096, 0.0
      %v2100 = vld [vmem:[%s7] sm:$0xff]
      %v2101 = vld [vmem:[%s8] sm:$0x1]
      %vm2102 = vcmask 64512
      %v2104 = vsel %vm2102, %v2099, 0
      %2106 = vmatprep.subr.mxu0 0.0
      %2107 = vmatpush1.msra.mxu0 %v2100
      %2108 = vmatprep.subr.mxu0 0.0
      %2109 = vmatpush1.msra.mxu0 0.0
      %2110 = vmatprep.subr.mxu0 0.0
      %2111 = vmatpush1.msra.mxu0 0.0
      %2112 = vmatprep.subr.mxu0 0.0
      %2113 = vmatpush1.msra.mxu0 0.0
      %2114 = vmatprep.subr.mxu0 0.0
      %2115 = vmatpush1.msra.mxu0 0.0
      %2116 = vmatprep.subr.mxu0 0.0
      %2117 = vmatpush1.msra.mxu0 0.0
      %2118 = vmatprep.subr.mxu0 0.0
      %2119 = vmatpush1.msra.mxu0 0.0
      %2120 = vmatprep.subr.mxu0 0.0
      %2121 = vmatpush1.msra.mxu0 0.0
      %2122 = vmatprep.subr.mxu0 0.0
      %2123 = vmatpush1.msra.mxu0 0.0
      %2124 = vmatprep.subr.mxu0 0.0
      %2125 = vmatpush1.msra.mxu0 0.0
      %2126 = vmatprep.subr.mxu0 0.0
      %2127 = vmatpush1.msra.mxu0 0.0
      %2128 = vmatprep.subr.mxu0 0.0
      %2129 = vmatpush1.msra.mxu0 0.0
      %2130 = vmatprep.subr.mxu0 0.0
      %2131 = vmatpush1.msra.mxu0 0.0
      %2132 = vmatprep.subr.mxu0 0.0
      %2133 = vmatpush1.msra.mxu0 0.0
      %2134 = vmatprep.subr.mxu0 0.0
      %2135 = vmatpush1.msra.mxu0 0.0
      %2136 = vmatprep.subr.mxu0 0.0
      %2137 = vmatpush1.msra.mxu0 0.0
      %2138 = vmatprep.subr.mxu0 0.0
      %2139 = vmatpush1.msra.mxu0 0.0
      %2140 = vmatprep.subr.mxu0 0.0
      %2141 = vmatpush1.msra.mxu0 0.0
      %2142 = vmatprep.subr.mxu0 0.0
      %2143 = vmatpush1.msra.mxu0 0.0
      %2144 = vmatprep.subr.mxu0 0.0
      %2145 = vmatpush1.msra.mxu0 0.0
      %2146 = vmatprep.subr.mxu0 0.0
      %2147 = vmatpush1.msra.mxu0 0.0
      %2148 = vmatprep.subr.mxu0 0.0
      %2149 = vmatpush1.msra.mxu0 0.0
      %2150 = vmatprep.subr.mxu0 0.0
      %2151 = vmatpush1.msra.mxu0 0.0
      %2152 = vmatprep.subr.mxu0 0.0
      %2153 = vmatpush1.msra.mxu0 0.0
      %2154 = vmatprep.subr.mxu0 0.0
      %2155 = vmatpush1.msra.mxu0 0.0
      %2156 = vmatprep.subr.mxu0 0.0
      %2157 = vmatpush1.msra.mxu0 0.0
      %2158 = vmatprep.subr.mxu0 0.0
      %2159 = vmatpush1.msra.mxu0 0.0
      %2160 = vmatprep.subr.mxu0 0.0
      %2161 = vmatpush1.msra.mxu0 0.0
      %2162 = vmatprep.subr.mxu0 0.0
      %2163 = vmatpush1.msra.mxu0 0.0
      %2164 = vmatprep.subr.mxu0 0.0
      %2165 = vmatpush1.msra.mxu0 0.0
      %2166 = vmatprep.subr.mxu0 0.0
      %2167 = vmatpush1.msra.mxu0 0.0
      %2168 = vmatprep.subr.mxu0 0.0
      %2169 = vmatpush1.msra.mxu0 0.0
      %2170 = vmatprep.mubr.f32.mxu0 0.0
      %2171 = vmatmul.mubr.f32.gmra.mrb[0].mxu0 %v2104
      %v2172 = vpop.f32.mrb[0].mxu0
      %v2173 = vadd.f32 %v2101, %v2172
      %v2174 = vpop.f32.mrb[0].mxu0
      %2175 = vdwg.mxu0
      %v2176 = vadd.f32 %v2173, 3.0
      %v2177 = vmax.f32 %v2176, 0.0
      %v2178 = vmin.f32 %v2177, 6.0
      %v2179 = vmul.f32 %v2178, 0.16666667
      %v2180 = vlaneseq
      %v2181 = vshrl.u32 %v2180, 7
      %v2182 = vsub.s32 0, %v2181
      %v2183 = vrot.slane %v2179, %v2182
      %v2184 = vmul.f32 %v1918, %v2183
      %v2185 = vmul.f32 %v1919, %v2183
      %v2186 = vmul.f32 %v1920, %v2183
      %v2187 = vmul.f32 %v1921, %v2183
      %v2188 = vmul.f32 %v1922, %v2183
      %v2189 = vmul.f32 %v1923, %v2183
      %v2190 = vmul.f32 %v1924, %v2183
      %v2191 = vmul.f32 %v1925, %v2183
      %v2192 = vmul.f32 %v1926, %v2183
      %v2193 = vmul.f32 %v1927, %v2183
      %v2194 = vmul.f32 %v1928, %v2183
      %v2195 = vmul.f32 %v1929, %v2183
      %v2196 = vmul.f32 %v1930, %v2183
      %v2197 = vmul.f32 %v1931, %v2183
      %v2198 = vmul.f32 %v1932, %v2183
      %v2199 = vmul.f32 %v1933, %v2183
      %v2200 = vmul.f32 %v1934, %v2183
      %v2201 = vmul.f32 %v1935, %v2183
      %v2202 = vmul.f32 %v1936, %v2183
      %v2203 = vmul.f32 %v1937, %v2183
      %v2204 = vmul.f32 %v1938, %v2183
      %v2205 = vmul.f32 %v1939, %v2183
      %v2206 = vmul.f32 %v1940, %v2183
      %v2207 = vmul.f32 %v1941, %v2183
      %v2208 = vmul.f32 %v1942, %v2183
      %v2209 = vmul.f32 %v1943, %v2183
      %v2210 = vmul.f32 %v1944, %v2183
      %v2211 = vmul.f32 %v1945, %v2183
      %v2212 = vmul.f32 %v1946, %v2183
      %v2213 = vmul.f32 %v1947, %v2183
      %v2214 = vmul.f32 %v1948, %v2183
      %v2215 = vmul.f32 %v1949, %v2183
      %v2216 = vadd.f32 %v2184, 3.0
      %v2217 = vadd.f32 %v2185, 3.0
      %v2218 = vadd.f32 %v2186, 3.0
      %v2219 = vadd.f32 %v2187, 3.0
      %v2220 = vadd.f32 %v2188, 3.0
      %v2221 = vadd.f32 %v2189, 3.0
      %v2222 = vadd.f32 %v2190, 3.0
      %v2223 = vadd.f32 %v2191, 3.0
      %v2224 = vadd.f32 %v2192, 3.0
      %v2225 = vadd.f32 %v2193, 3.0
      %v2226 = vadd.f32 %v2194, 3.0
      %v2227 = vadd.f32 %v2195, 3.0
      %v2228 = vadd.f32 %v2196, 3.0
      %v2229 = vadd.f32 %v2197, 3.0
      %v2230 = vadd.f32 %v2198, 3.0
      %v2231 = vadd.f32 %v2199, 3.0
      %v2232 = vadd.f32 %v2200, 3.0
      %v2233 = vadd.f32 %v2201, 3.0
      %v2234 = vadd.f32 %v2202, 3.0
      %v2235 = vadd.f32 %v2203, 3.0
      %v2236 = vadd.f32 %v2204, 3.0
      %v2237 = vadd.f32 %v2205, 3.0
      %v2238 = vadd.f32 %v2206, 3.0
      %v2239 = vadd.f32 %v2207, 3.0
      %v2240 = vadd.f32 %v2208, 3.0
      %v2241 = vadd.f32 %v2209, 3.0
      %v2242 = vadd.f32 %v2210, 3.0
      %v2243 = vadd.f32 %v2211, 3.0
      %v2244 = vadd.f32 %v2212, 3.0
      %v2245 = vadd.f32 %v2213, 3.0
      %v2246 = vadd.f32 %v2214, 3.0
      %v2247 = vadd.f32 %v2215, 3.0
      %v2248 = vmax.f32 %v2216, 0.0
      %v2249 = vmax.f32 %v2217, 0.0
      %v2250 = vmax.f32 %v2218, 0.0
      %v2251 = vmax.f32 %v2219, 0.0
      %v2252 = vmax.f32 %v2220, 0.0
      %v2253 = vmax.f32 %v2221, 0.0
      %v2254 = vmax.f32 %v2222, 0.0
      %v2255 = vmax.f32 %v2223, 0.0
      %v2256 = vmax.f32 %v2224, 0.0
      %v2257 = vmax.f32 %v2225, 0.0
      %v2258 = vmax.f32 %v2226, 0.0
      %v2259 = vmax.f32 %v2227, 0.0
      %v2260 = vmax.f32 %v2228, 0.0
      %v2261 = vmax.f32 %v2229, 0.0
      %v2262 = vmax.f32 %v2230, 0.0
      %v2263 = vmax.f32 %v2231, 0.0
      %v2264 = vmax.f32 %v2232, 0.0
      %v2265 = vmax.f32 %v2233, 0.0
      %v2266 = vmax.f32 %v2234, 0.0
      %v2267 = vmax.f32 %v2235, 0.0
      %v2268 = vmax.f32 %v2236, 0.0
      %v2269 = vmax.f32 %v2237, 0.0
      %v2270 = vmax.f32 %v2238, 0.0
      %v2271 = vmax.f32 %v2239, 0.0
      %v2272 = vmax.f32 %v2240, 0.0
      %v2273 = vmax.f32 %v2241, 0.0
      %v2274 = vmax.f32 %v2242, 0.0
      %v2275 = vmax.f32 %v2243, 0.0
      %v2276 = vmax.f32 %v2244, 0.0
      %v2277 = vmax.f32 %v2245, 0.0
      %v2278 = vmax.f32 %v2246, 0.0
      %v2279 = vmax.f32 %v2247, 0.0
      %v2280 = vmin.f32 %v2248, 6.0
      %v2281 = vmin.f32 %v2249, 6.0
      %v2282 = vmin.f32 %v2250, 6.0
      %v2283 = vmin.f32 %v2251, 6.0
      %v2284 = vmin.f32 %v2252, 6.0
      %v2285 = vmin.f32 %v2253, 6.0
      %v2286 = vmin.f32 %v2254, 6.0
      %v2287 = vmin.f32 %v2255, 6.0
      %v2288 = vmin.f32 %v2256, 6.0
      %v2289 = vmin.f32 %v2257, 6.0
      %v2290 = vmin.f32 %v2258, 6.0
      %v2291 = vmin.f32 %v2259, 6.0
      %v2292 = vmin.f32 %v2260, 6.0
      %v2293 = vmin.f32 %v2261, 6.0
      %v2294 = vmin.f32 %v2262, 6.0
      %v2295 = vmin.f32 %v2263, 6.0
      %v2296 = vmin.f32 %v2264, 6.0
      %v2297 = vmin.f32 %v2265, 6.0
      %v2298 = vmin.f32 %v2266, 6.0
      %v2299 = vmin.f32 %v2267, 6.0
      %v2300 = vmin.f32 %v2268, 6.0
      %v2301 = vmin.f32 %v2269, 6.0
      %v2302 = vmin.f32 %v2270, 6.0
      %v2303 = vmin.f32 %v2271, 6.0
      %v2304 = vmin.f32 %v2272, 6.0
      %v2305 = vmin.f32 %v2273, 6.0
      %v2306 = vmin.f32 %v2274, 6.0
      %v2307 = vmin.f32 %v2275, 6.0
      %v2308 = vmin.f32 %v2276, 6.0
      %v2309 = vmin.f32 %v2277, 6.0
      %v2310 = vmin.f32 %v2278, 6.0
      %v2311 = vmin.f32 %v2279, 6.0
      %v2312 = vmul.f32 %v2184, %v2280
      %v2313 = vmul.f32 %v2185, %v2281
      %v2314 = vmul.f32 %v2186, %v2282
      %v2315 = vmul.f32 %v2187, %v2283
      %v2316 = vmul.f32 %v2188, %v2284
      %v2317 = vmul.f32 %v2189, %v2285
      %v2318 = vmul.f32 %v2190, %v2286
      %v2319 = vmul.f32 %v2191, %v2287
      %v2320 = vmul.f32 %v2192, %v2288
      %v2321 = vmul.f32 %v2193, %v2289
      %v2322 = vmul.f32 %v2194, %v2290
      %v2323 = vmul.f32 %v2195, %v2291
      %v2324 = vmul.f32 %v2196, %v2292
      %v2325 = vmul.f32 %v2197, %v2293
      %v2326 = vmul.f32 %v2198, %v2294
      %v2327 = vmul.f32 %v2199, %v2295
      %v2328 = vmul.f32 %v2200, %v2296
      %v2329 = vmul.f32 %v2201, %v2297
      %v2330 = vmul.f32 %v2202, %v2298
      %v2331 = vmul.f32 %v2203, %v2299
      %v2332 = vmul.f32 %v2204, %v2300
      %v2333 = vmul.f32 %v2205, %v2301
      %v2334 = vmul.f32 %v2206, %v2302
      %v2335 = vmul.f32 %v2207, %v2303
      %v2336 = vmul.f32 %v2208, %v2304
      %v2337 = vmul.f32 %v2209, %v2305
      %v2338 = vmul.f32 %v2210, %v2306
      %v2339 = vmul.f32 %v2211, %v2307
      %v2340 = vmul.f32 %v2212, %v2308
      %v2341 = vmul.f32 %v2213, %v2309
      %v2342 = vmul.f32 %v2214, %v2310
      %v2343 = vmul.f32 %v2215, %v2311
      %v2344 = vmul.f32 %v2312, 0.16666667
      %v2345 = vmul.f32 %v2313, 0.16666667
      %v2346 = vmul.f32 %v2314, 0.16666667
      %v2347 = vmul.f32 %v2315, 0.16666667
      %v2348 = vmul.f32 %v2316, 0.16666667
      %v2349 = vmul.f32 %v2317, 0.16666667
      %v2350 = vmul.f32 %v2318, 0.16666667
      %v2351 = vmul.f32 %v2319, 0.16666667
      %v2352 = vmul.f32 %v2320, 0.16666667
      %v2353 = vmul.f32 %v2321, 0.16666667
      %v2354 = vmul.f32 %v2322, 0.16666667
      %v2355 = vmul.f32 %v2323, 0.16666667
      %v2356 = vmul.f32 %v2324, 0.16666667
      %v2357 = vmul.f32 %v2325, 0.16666667
      %v2358 = vmul.f32 %v2326, 0.16666667
      %v2359 = vmul.f32 %v2327, 0.16666667
      %v2360 = vmul.f32 %v2328, 0.16666667
      %v2361 = vmul.f32 %v2329, 0.16666667
      %v2362 = vmul.f32 %v2330, 0.16666667
      %v2363 = vmul.f32 %v2331, 0.16666667
      %v2364 = vmul.f32 %v2332, 0.16666667
      %v2365 = vmul.f32 %v2333, 0.16666667
      %v2366 = vmul.f32 %v2334, 0.16666667
      %v2367 = vmul.f32 %v2335, 0.16666667
      %v2368 = vmul.f32 %v2336, 0.16666667
      %v2369 = vmul.f32 %v2337, 0.16666667
      %v2370 = vmul.f32 %v2338, 0.16666667
      %v2371 = vmul.f32 %v2339, 0.16666667
      %v2372 = vmul.f32 %v2340, 0.16666667
      %v2373 = vmul.f32 %v2341, 0.16666667
      %v2374 = vmul.f32 %v2342, 0.16666667
      %v2375 = vmul.f32 %v2343, 0.16666667
      %v2376 = vld [vmem:[%s9] sm:$0xff]
      %v2377 = vld [vmem:[%s9 + $0x8] sm:$0xff]
      %v2378 = vld [vmem:[%s9 + $0x10] sm:$0xff]
      %v2379 = vld [vmem:[%s9 + $0x18] sm:$0xff]
      %v2380 = vld [vmem:[%s10] sm:$0x1]
      %v2382 = vlaneseq
      %v2383 = vshrl.u32 %v2382, 7
      %v2384 = vsub.s32 0, %v2383
      %v2385 = vrot.slane %v2380, %v2384
      %v2388 = vsel %vm910, %v2344, 0
      %v2391 = vsel %vm910, %v2345, 0
      %v2394 = vsel %vm910, %v2346, 0
      %v2397 = vsel %vm910, %v2347, 0
      %v2400 = vsel %vm910, %v2348, 0
      %v2403 = vsel %vm910, %v2349, 0
      %v2406 = vsel %vm910, %v2350, 0
      %v2409 = vsel %vm910, %v2351, 0
      %v2412 = vsel %vm910, %v2352, 0
      %v2415 = vsel %vm910, %v2353, 0
      %v2418 = vsel %vm910, %v2354, 0
      %v2421 = vsel %vm910, %v2355, 0
      %v2424 = vsel %vm910, %v2356, 0
      %v2427 = vsel %vm910, %v2357, 0
      %v2430 = vsel %vm910, %v2358, 0
      %v2433 = vsel %vm910, %v2359, 0
      %v2436 = vsel %vm910, %v2360, 0
      %v2439 = vsel %vm910, %v2361, 0
      %v2442 = vsel %vm910, %v2362, 0
      %v2445 = vsel %vm910, %v2363, 0
      %v2448 = vsel %vm910, %v2364, 0
      %v2451 = vsel %vm910, %v2365, 0
      %v2454 = vsel %vm910, %v2366, 0
      %v2457 = vsel %vm910, %v2367, 0
      %v2460 = vsel %vm910, %v2368, 0
      %v2463 = vsel %vm910, %v2369, 0
      %v2466 = vsel %vm910, %v2370, 0
      %v2469 = vsel %vm910, %v2371, 0
      %v2472 = vsel %vm910, %v2372, 0
      %v2475 = vsel %vm910, %v2373, 0
      %v2478 = vsel %vm910, %v2374, 0
      %v2481 = vsel %vm910, %v2375, 0
      %2483 = vmatprep.subr.mxu0 0.0
      %2484 = vmatpush1.msra.mxu0 %v2376
      %2485 = vmatprep.subr.mxu0 0.0
      %2486 = vmatpush1.msra.mxu0 %v2377
      %2487 = vmatprep.subr.mxu0 0.0
      %2488 = vmatpush1.msra.mxu0 %v2378
      %2489 = vmatprep.subr.mxu0 0.0
      %2490 = vmatpush1.msra.mxu0 %v2379
      %2491 = vmatprep.subr.mxu0 0.0
      %2492 = vmatpush1.msra.mxu0 0.0
      %2493 = vmatprep.subr.mxu0 0.0
      %2494 = vmatpush1.msra.mxu0 0.0
      %2495 = vmatprep.subr.mxu0 0.0
      %2496 = vmatpush1.msra.mxu0 0.0
      %2497 = vmatprep.subr.mxu0 0.0
      %2498 = vmatpush1.msra.mxu0 0.0
      %2499 = vmatprep.subr.mxu0 0.0
      %2500 = vmatpush1.msra.mxu0 0.0
      %2501 = vmatprep.subr.mxu0 0.0
      %2502 = vmatpush1.msra.mxu0 0.0
      %2503 = vmatprep.subr.mxu0 0.0
      %2504 = vmatpush1.msra.mxu0 0.0
      %2505 = vmatprep.subr.mxu0 0.0
      %2506 = vmatpush1.msra.mxu0 0.0
      %2507 = vmatprep.subr.mxu0 0.0
      %2508 = vmatpush1.msra.mxu0 0.0
      %2509 = vmatprep.subr.mxu0 0.0
      %2510 = vmatpush1.msra.mxu0 0.0
      %2511 = vmatprep.subr.mxu0 0.0
      %2512 = vmatpush1.msra.mxu0 0.0
      %2513 = vmatprep.subr.mxu0 0.0
      %2514 = vmatpush1.msra.mxu0 0.0
      %2515 = vmatprep.subr.mxu0 0.0
      %2516 = vmatpush1.msra.mxu0 0.0
      %2517 = vmatprep.subr.mxu0 0.0
      %2518 = vmatpush1.msra.mxu0 0.0
      %2519 = vmatprep.subr.mxu0 0.0
      %2520 = vmatpush1.msra.mxu0 0.0
      %2521 = vmatprep.subr.mxu0 0.0
      %2522 = vmatpush1.msra.mxu0 0.0
      %2523 = vmatprep.subr.mxu0 0.0
      %2524 = vmatpush1.msra.mxu0 0.0
      %2525 = vmatprep.subr.mxu0 0.0
      %2526 = vmatpush1.msra.mxu0 0.0
      %2527 = vmatprep.subr.mxu0 0.0
      %2528 = vmatpush1.msra.mxu0 0.0
      %2529 = vmatprep.subr.mxu0 0.0
      %2530 = vmatpush1.msra.mxu0 0.0
      %2531 = vmatprep.subr.mxu0 0.0
      %2532 = vmatpush1.msra.mxu0 0.0
      %2533 = vmatprep.subr.mxu0 0.0
      %2534 = vmatpush1.msra.mxu0 0.0
      %2535 = vmatprep.subr.mxu0 0.0
      %2536 = vmatpush1.msra.mxu0 0.0
      %2537 = vmatprep.subr.mxu0 0.0
      %2538 = vmatpush1.msra.mxu0 0.0
      %2539 = vmatprep.subr.mxu0 0.0
      %2540 = vmatpush1.msra.mxu0 0.0
      %2541 = vmatprep.subr.mxu0 0.0
      %2542 = vmatpush1.msra.mxu0 0.0
      %2543 = vmatprep.subr.mxu0 0.0
      %2544 = vmatpush1.msra.mxu0 0.0
      %2545 = vmatprep.subr.mxu0 0.0
      %2546 = vmatpush1.msra.mxu0 0.0
      %2547 = vmatprep.mubr.f32.mxu0 0.0
      %2548 = vmatmul.mubr.f32.gmra.mrb[0].mxu0 %v2388
      %v2549 = vpop.f32.mrb[0].mxu0
      %v2550 = vadd.f32 %v2385, %v2549
      %v2551 = vpop.f32.mrb[0].mxu0
      %2552 = vmatprep.mubr.f32.mxu0 0.0
      %2553 = vmatmul.mubr.f32.gmra.mrb[0].mxu0 %v2391
      %v2554 = vpop.f32.mrb[0].mxu0
      %v2555 = vadd.f32 %v2385, %v2554
      %v2556 = vpop.f32.mrb[0].mxu0
      %2557 = vmatprep.mubr.f32.mxu0 0.0
      %2558 = vmatmul.mubr.f32.gmra.mrb[0].mxu0 %v2394
      %v2559 = vpop.f32.mrb[0].mxu0
      %v2560 = vadd.f32 %v2385, %v2559
      %v2561 = vpop.f32.mrb[0].mxu0
      %2562 = vmatprep.mubr.f32.mxu0 0.0
      %2563 = vmatmul.mubr.f32.gmra.mrb[0].mxu0 %v2397
      %v2564 = vpop.f32.mrb[0].mxu0
      %v2565 = vadd.f32 %v2385, %v2564
      %v2566 = vpop.f32.mrb[0].mxu0
      %2567 = vmatprep.mubr.f32.mxu0 0.0
      %2568 = vmatmul.mubr.f32.gmra.mrb[0].mxu0 %v2400
      %v2569 = vpop.f32.mrb[0].mxu0
      %v2570 = vadd.f32 %v2385, %v2569
      %v2571 = vpop.f32.mrb[0].mxu0
      %2572 = vmatprep.mubr.f32.mxu0 0.0
      %2573 = vmatmul.mubr.f32.gmra.mrb[0].mxu0 %v2403
      %v2574 = vpop.f32.mrb[0].mxu0
      %v2575 = vadd.f32 %v2385, %v2574
      %v2576 = vpop.f32.mrb[0].mxu0
      %2577 = vmatprep.mubr.f32.mxu0 0.0
      %2578 = vmatmul.mubr.f32.gmra.mrb[0].mxu0 %v2406
      %v2579 = vpop.f32.mrb[0].mxu0
      %v2580 = vadd.f32 %v2385, %v2579
      %v2581 = vpop.f32.mrb[0].mxu0
      %2582 = vmatprep.mubr.f32.mxu0 0.0
      %2583 = vmatmul.mubr.f32.gmra.mrb[0].mxu0 %v2409
      %v2584 = vpop.f32.mrb[0].mxu0
      %v2585 = vadd.f32 %v2385, %v2584
      %v2586 = vpop.f32.mrb[0].mxu0
      %2587 = vmatprep.mubr.f32.mxu0 0.0
      %2588 = vmatmul.mubr.f32.gmra.mrb[0].mxu0 %v2412
      %v2589 = vpop.f32.mrb[0].mxu0
      %v2590 = vadd.f32 %v2385, %v2589
      %v2591 = vpop.f32.mrb[0].mxu0
      %2592 = vmatprep.mubr.f32.mxu0 0.0
      %2593 = vmatmul.mubr.f32.gmra.mrb[0].mxu0 %v2415
      %v2594 = vpop.f32.mrb[0].mxu0
      %v2595 = vadd.f32 %v2385, %v2594
      %v2596 = vpop.f32.mrb[0].mxu0
      %2597 = vmatprep.mubr.f32.mxu0 0.0
      %2598 = vmatmul.mubr.f32.gmra.mrb[0].mxu0 %v2418
      %v2599 = vpop.f32.mrb[0].mxu0
      %v2600 = vadd.f32 %v2385, %v2599
      %v2601 = vpop.f32.mrb[0].mxu0
      %2602 = vmatprep.mubr.f32.mxu0 0.0
      %2603 = vmatmul.mubr.f32.gmra.mrb[0].mxu0 %v2421
      %v2604 = vpop.f32.mrb[0].mxu0
      %v2605 = vadd.f32 %v2385, %v2604
      %v2606 = vpop.f32.mrb[0].mxu0
      %2607 = vmatprep.mubr.f32.mxu0 0.0
      %2608 = vmatmul.mubr.f32.gmra.mrb[0].mxu0 %v2424
      %v2609 = vpop.f32.mrb[0].mxu0
      %v2610 = vadd.f32 %v2385, %v2609
      %v2611 = vpop.f32.mrb[0].mxu0
      %2612 = vmatprep.mubr.f32.mxu0 0.0
      %2613 = vmatmul.mubr.f32.gmra.mrb[0].mxu0 %v2427
      %v2614 = vpop.f32.mrb[0].mxu0
      %v2615 = vadd.f32 %v2385, %v2614
      %v2616 = vpop.f32.mrb[0].mxu0
      %2617 = vmatprep.mubr.f32.mxu0 0.0
      %2618 = vmatmul.mubr.f32.gmra.mrb[0].mxu0 %v2430
      %v2619 = vpop.f32.mrb[0].mxu0
      %v2620 = vadd.f32 %v2385, %v2619
      %v2621 = vpop.f32.mrb[0].mxu0
      %2622 = vmatprep.mubr.f32.mxu0 0.0
      %2623 = vmatmul.mubr.f32.gmra.mrb[0].mxu0 %v2433
      %v2624 = vpop.f32.mrb[0].mxu0
      %v2625 = vadd.f32 %v2385, %v2624
      %v2626 = vpop.f32.mrb[0].mxu0
      %2627 = vmatprep.mubr.f32.mxu0 0.0
      %2628 = vmatmul.mubr.f32.gmra.mrb[0].mxu0 %v2436
      %v2629 = vpop.f32.mrb[0].mxu0
      %v2630 = vadd.f32 %v2385, %v2629
      %v2631 = vpop.f32.mrb[0].mxu0
      %2632 = vmatprep.mubr.f32.mxu0 0.0
      %2633 = vmatmul.mubr.f32.gmra.mrb[0].mxu0 %v2439
      %v2634 = vpop.f32.mrb[0].mxu0
      %v2635 = vadd.f32 %v2385, %v2634
      %v2636 = vpop.f32.mrb[0].mxu0
      %2637 = vmatprep.mubr.f32.mxu0 0.0
      %2638 = vmatmul.mubr.f32.gmra.mrb[0].mxu0 %v2442
      %v2639 = vpop.f32.mrb[0].mxu0
      %v2640 = vadd.f32 %v2385, %v2639
      %v2641 = vpop.f32.mrb[0].mxu0
      %2642 = vmatprep.mubr.f32.mxu0 0.0
      %2643 = vmatmul.mubr.f32.gmra.mrb[0].mxu0 %v2445
      %v2644 = vpop.f32.mrb[0].mxu0
      %v2645 = vadd.f32 %v2385, %v2644
      %v2646 = vpop.f32.mrb[0].mxu0
      %2647 = vmatprep.mubr.f32.mxu0 0.0
      %2648 = vmatmul.mubr.f32.gmra.mrb[0].mxu0 %v2448
      %v2649 = vpop.f32.mrb[0].mxu0
      %v2650 = vadd.f32 %v2385, %v2649
      %v2651 = vpop.f32.mrb[0].mxu0
      %2652 = vmatprep.mubr.f32.mxu0 0.0
      %2653 = vmatmul.mubr.f32.gmra.mrb[0].mxu0 %v2451
      %v2654 = vpop.f32.mrb[0].mxu0
      %v2655 = vadd.f32 %v2385, %v2654
      %v2656 = vpop.f32.mrb[0].mxu0
      %2657 = vmatprep.mubr.f32.mxu0 0.0
      %2658 = vmatmul.mubr.f32.gmra.mrb[0].mxu0 %v2454
      %v2659 = vpop.f32.mrb[0].mxu0
      %v2660 = vadd.f32 %v2385, %v2659
      %v2661 = vpop.f32.mrb[0].mxu0
      %2662 = vmatprep.mubr.f32.mxu0 0.0
      %2663 = vmatmul.mubr.f32.gmra.mrb[0].mxu0 %v2457
      %v2664 = vpop.f32.mrb[0].mxu0
      %v2665 = vadd.f32 %v2385, %v2664
      %v2666 = vpop.f32.mrb[0].mxu0
      %2667 = vmatprep.mubr.f32.mxu0 0.0
      %2668 = vmatmul.mubr.f32.gmra.mrb[0].mxu0 %v2460
      %v2669 = vpop.f32.mrb[0].mxu0
      %v2670 = vadd.f32 %v2385, %v2669
      %v2671 = vpop.f32.mrb[0].mxu0
      %2672 = vmatprep.mubr.f32.mxu0 0.0
      %2673 = vmatmul.mubr.f32.gmra.mrb[0].mxu0 %v2463
      %v2674 = vpop.f32.mrb[0].mxu0
      %v2675 = vadd.f32 %v2385, %v2674
      %v2676 = vpop.f32.mrb[0].mxu0
      %2677 = vmatprep.mubr.f32.mxu0 0.0
      %2678 = vmatmul.mubr.f32.gmra.mrb[0].mxu0 %v2466
      %v2679 = vpop.f32.mrb[0].mxu0
      %v2680 = vadd.f32 %v2385, %v2679
      %v2681 = vpop.f32.mrb[0].mxu0
      %2682 = vmatprep.mubr.f32.mxu0 0.0
      %2683 = vmatmul.mubr.f32.gmra.mrb[0].mxu0 %v2469
      %v2684 = vpop.f32.mrb[0].mxu0
      %v2685 = vadd.f32 %v2385, %v2684
      %v2686 = vpop.f32.mrb[0].mxu0
      %2687 = vmatprep.mubr.f32.mxu0 0.0
      %2688 = vmatmul.mubr.f32.gmra.mrb[0].mxu0 %v2472
      %v2689 = vpop.f32.mrb[0].mxu0
      %v2690 = vadd.f32 %v2385, %v2689
      %v2691 = vpop.f32.mrb[0].mxu0
      %2692 = vmatprep.mubr.f32.mxu0 0.0
      %2693 = vmatmul.mubr.f32.gmra.mrb[0].mxu0 %v2475
      %v2694 = vpop.f32.mrb[0].mxu0
      %v2695 = vadd.f32 %v2385, %v2694
      %v2696 = vpop.f32.mrb[0].mxu0
      %2697 = vmatprep.mubr.f32.mxu0 0.0
      %2698 = vmatmul.mubr.f32.gmra.mrb[0].mxu0 %v2478
      %v2699 = vpop.f32.mrb[0].mxu0
      %v2700 = vadd.f32 %v2385, %v2699
      %v2701 = vpop.f32.mrb[0].mxu0
      %2702 = vmatprep.mubr.f32.mxu0 0.0
      %2703 = vmatmul.mubr.f32.gmra.mrb[0].mxu0 %v2481
      %v2704 = vpop.f32.mrb[0].mxu0
      %v2705 = vadd.f32 %v2385, %v2704
      %v2706 = vpop.f32.mrb[0].mxu0
      %2707 = vdwg.mxu0
      %v2708 = vadd.f32 %v2550, %v387
      %v2709 = vadd.f32 %v2555, %v388
      %v2710 = vadd.f32 %v2560, %v389
      %v2711 = vadd.f32 %v2565, %v390
      %v2712 = vadd.f32 %v2570, %v391
      %v2713 = vadd.f32 %v2575, %v392
      %v2714 = vadd.f32 %v2580, %v393
      %v2715 = vadd.f32 %v2585, %v394
      %v2716 = vadd.f32 %v2590, %v395
      %v2717 = vadd.f32 %v2595, %v396
      %v2718 = vadd.f32 %v2600, %v397
      %v2719 = vadd.f32 %v2605, %v398
      %v2720 = vadd.f32 %v2610, %v399
      %v2721 = vadd.f32 %v2615, %v400
      %v2722 = vadd.f32 %v2620, %v401
      %v2723 = vadd.f32 %v2625, %v402
      %v2724 = vadd.f32 %v2630, %v403
      %v2725 = vadd.f32 %v2635, %v404
      %v2726 = vadd.f32 %v2640, %v405
      %v2727 = vadd.f32 %v2645, %v406
      %v2728 = vadd.f32 %v2650, %v407
      %v2729 = vadd.f32 %v2655, %v408
      %v2730 = vadd.f32 %v2660, %v409
      %v2731 = vadd.f32 %v2665, %v410
      %v2732 = vadd.f32 %v2670, %v411
      %v2733 = vadd.f32 %v2675, %v412
      %v2734 = vadd.f32 %v2680, %v413
      %v2735 = vadd.f32 %v2685, %v414
      %v2736 = vadd.f32 %v2690, %v415
      %v2737 = vadd.f32 %v2695, %v416
      %v2738 = vadd.f32 %v2700, %v417
      %v2739 = vadd.f32 %v2705, %v418
      %2740 = vst.msk [vmem:[%s386] sm:$0xff] %vm428, %v2708
      %2741 = vst.msk [vmem:[%s386 + $0x8] sm:$0xff] %vm428, %v2709
      %2742 = vst.msk [vmem:[%s386 + $0x10] sm:$0xff] %vm428, %v2710
      %2743 = vst.msk [vmem:[%s386 + $0x18] sm:$0xff] %vm428, %v2711
      %2744 = vst.msk [vmem:[%s386 + $0x20] sm:$0xff] %vm428, %v2712
      %2745 = vst.msk [vmem:[%s386 + $0x28] sm:$0xff] %vm428, %v2713
      %2746 = vst.msk [vmem:[%s386 + $0x30] sm:$0xff] %vm428, %v2714
      %2747 = vst.msk [vmem:[%s386 + $0x38] sm:$0xff] %vm428, %v2715
      %2748 = vst.msk [vmem:[%s386 + $0x40] sm:$0xff] %vm428, %v2716
      %2749 = vst.msk [vmem:[%s386 + $0x48] sm:$0xff] %vm428, %v2717
      %2750 = vst.msk [vmem:[%s386 + $0x50] sm:$0xff] %vm428, %v2718
      %2751 = vst.msk [vmem:[%s386 + $0x58] sm:$0xff] %vm428, %v2719
      %2752 = vst.msk [vmem:[%s386 + $0x60] sm:$0xff] %vm428, %v2720
      %2753 = vst.msk [vmem:[%s386 + $0x68] sm:$0xff] %vm428, %v2721
      %2754 = vst.msk [vmem:[%s386 + $0x70] sm:$0xff] %vm428, %v2722
      %2755 = vst.msk [vmem:[%s386 + $0x78] sm:$0xff] %vm428, %v2723
      %2756 = vst.msk [vmem:[%s386 + $0x80] sm:$0xff] %vm428, %v2724
      %2757 = vst.msk [vmem:[%s386 + $0x88] sm:$0xff] %vm428, %v2725
      %2758 = vst.msk [vmem:[%s386 + $0x90] sm:$0xff] %vm428, %v2726
      %2759 = vst.msk [vmem:[%s386 + $0x98] sm:$0xff] %vm428, %v2727
      %2760 = vst.msk [vmem:[%s386 + $0xa0] sm:$0xff] %vm428, %v2728
      %2761 = vst.msk [vmem:[%s386 + $0xa8] sm:$0xff] %vm428, %v2729
      %2762 = vst.msk [vmem:[%s386 + $0xb0] sm:$0xff] %vm428, %v2730
      %2763 = vst.msk [vmem:[%s386 + $0xb8] sm:$0xff] %vm428, %v2731
      %2764 = vst.msk [vmem:[%s386 + $0xc0] sm:$0xff] %vm428, %v2732
      %2765 = vst.msk [vmem:[%s386 + $0xc8] sm:$0xff] %vm428, %v2733
      %2766 = vst.msk [vmem:[%s386 + $0xd0] sm:$0xff] %vm428, %v2734
      %2767 = vst.msk [vmem:[%s386 + $0xd8] sm:$0xff] %vm428, %v2735
      %2768 = vst.msk [vmem:[%s386 + $0xe0] sm:$0xff] %vm428, %v2736
      %2769 = vst.msk [vmem:[%s386 + $0xe8] sm:$0xff] %vm428, %v2737
      %2770 = vst.msk [vmem:[%s386 + $0xf0] sm:$0xff] %vm428, %v2738
      %2771 = vst.msk [vmem:[%s386 + $0xf8] sm:$0xff] %vm428, %v2739
      %p2772 = scmp.lt.s32.totalorder %s22, 1
      %s2773 = scalar_select %p2772, %s22, 1
      %s2774 = smul.addr %s2773, 32
      %s2775 = smul.addr %s2774, 8
      %s2776 = scalar_lea.vmem %s11, %s2775
      // Predicated region
      $region65: #{tpu_custom_call.1} parent=63 // pred_check
        %p2777 = pneg %p276
      $region66: #{tpu_custom_call.1} parent=63 // pred_check_branch
        %2779 = sbr.rel (%p2777) target = $region68
      $region67: #{tpu_custom_call.1} parent=63 // pred_region
        _
      $region68: #{tpu_custom_call.1} parent=63 // pred_fallthru
        _
    $region64: #{tpu_custom_call.1} parent=5 // pred_fallthru
      _
    %p2780 = scmp.le.s32.totalorder 2, %s17
    // Predicated region
    $region69: #{tpu_custom_call.1} parent=5 // pred_check
      %p2781 = pneg %p2780
    $region70: #{tpu_custom_call.1} parent=5 // pred_check_branch
      %2783 = sbr.rel (%p2781) target = $region72
    $region71: #{tpu_custom_call.1} parent=5 // pred_region
      %s2784 = ssub.s32 %s17, 2
      // Predicated region
      $region73: #{tpu_custom_call.1} parent=71 // pred_check
        %p2785 = pneg %p282
      $region74: #{tpu_custom_call.1} parent=71 // pred_check_branch
        %2787 = sbr.rel (%p2785) target = $region76
      $region75: #{tpu_custom_call.1} parent=71 // pred_region
        %p2788 = scmp.lt.s32.totalorder %s23, 1
        %s2789 = scalar_select %p2788, %s23, 1
        %s2790 = smul.addr %s2789, 32
        %s2791 = smul.addr %s2790, 8
        %s2792 = scalar_lea.vmem %s11, %s2791
      $region76: #{tpu_custom_call.1} parent=71 // pred_fallthru
        _
    $region72: #{tpu_custom_call.1} parent=5 // pred_fallthru
      _
  $region6: #{tpu_custom_call.1} parent=0 // loop_footer
    %s21 = sadd.s32 1, %s17
  $region7: #{tpu_custom_call.1} parent=0 // loop_footer_branch
    %16 = sbr.rel target = $region3
  $region8: #{tpu_custom_call.1} parent=0 // loop_exit
    _

</llo_original>
